<compile_context>
chip_gen: v6e
topology: v6e:2x2x1
jax: 0.10.0
libtpu: 0.0.40
codegen_flags: <defaults>
</compile_context>

<pallas_src>
import functools

import numpy as np

import jax
import jax.numpy as jnp
from jax.experimental import pallas as pl
from jax.experimental.pallas import tpu as pltpu

_BN_EPS = 1e-5


# --- generation-aware VMEM / tiling budget ---------------------------------------------------
def _tpu_budgets():
    """(vmem_limit_bytes, conv xcol block budget, lane-tile target, num tensorcores)."""
    vmem_cap = 64 * 1024 * 1024      # conservative default (v7x physical VMEM)
    n_cores = 1
    try:
        info = pltpu.get_tpu_info()
        vmem_cap = int(getattr(info, "vmem_capacity_bytes", vmem_cap))
        for name in ("num_cores", "core_count", "num_tensorcores", "tensorcore_count"):
            v = getattr(info, name, None)
            if isinstance(v, int) and v > 0:
                n_cores = v
                break
    except Exception:  # no backend / unknown fields -> safe defaults
        pass
    if vmem_cap >= 96 * 1024 * 1024:          # v5e / v6e: 128 MiB physical VMEM
        vmem_limit = 96 * 1024 * 1024
        lane_target = 8192
    else:                                     # v7x: 64 MiB physical -> keep <= ~40 MiB scoped
        vmem_limit = 40 * 1024 * 1024
        lane_target = 4096
    xcol_budget = vmem_limit // 3             # double-buffered patch block must fit here
    return vmem_limit, xcol_budget, lane_target, n_cores


_VMEM_LIMIT_BYTES, _XCOL_TILE_BUDGET, _LANE_TILE_TARGET, _NUM_CORES = _tpu_budgets()


def _cparams(n_tiles):
    """Compiler params for a 1-D M-tile grid; split across TensorCores when the part has >1."""
    if _NUM_CORES >= 2 and n_tiles % _NUM_CORES == 0:
        sem = (pltpu.CORE_PARALLEL,)
    else:
        sem = ("parallel",)
    return pltpu.CompilerParams(dimension_semantics=sem,
                                vmem_limit_bytes=_VMEM_LIMIT_BYTES)


def _lane_tile(m, target):
    """Lane (last-dim) tile size + padded extent; target is a multiple of 128."""
    if m <= target:
        return m, m                      # single full-dim block (satisfies the (8,128) rule)
    m_pad = ((m + target - 1) // target) * target
    return target, m_pad


def _conv_lane_target(n_phases, k):
    """Largest lane tile whose double-buffered bf16 patch block fits the VMEM budget."""
    tm = _LANE_TILE_TARGET
    while tm > 128 and 2 * n_phases * k * tm * 2 > _XCOL_TILE_BUDGET:
        tm //= 2
    return tm


# ----------------------------------------------------------------------------
# Pallas kernels
# ----------------------------------------------------------------------------
def _conv_kernel(x_ref, w_ref, *rest, n_phases, has_bias, compute_stats):
    """Fused (transposed-)conv: one K=(taps*Cin) matmul per max-pool phase, max over phases.

    x_ref : (n_phases, K, TM) bf16   K = n_taps * Cin, lanes = flattened output positions
    w_ref : (Cout, K)         bf16
    b_ref : (Cout, 1)         f32    (optional)
    out   : (Cout, TM)        bf16   conv (+ 2x2 max-pool) (+ bias) result
    sums  : (1, Cout, 1)      f32    per-tile per-channel sum          (optional, for BN)
    sqs   : (1, Cout, 1)      f32    per-tile per-channel sum of x^2   (optional, for BN)
    """
    idx = 0
    if has_bias:
        b_ref = rest[idx]
        idx += 1
    out_ref = rest[idx]
    idx += 1
    if compute_stats:
        sum_ref, sq_ref = rest[idx], rest[idx + 1]

    w = w_ref[...]
    acc = jnp.dot(w, x_ref[0], preferred_element_type=jnp.float32)
    for p in range(1, n_phases):          # MaxPool2d(2, 2) == max over the 4 pooling phases
        acc = jnp.maximum(acc, jnp.dot(w, x_ref[p], preferred_element_type=jnp.float32))
    if has_bias:
        acc = acc + b_ref[...]
    out_ref[...] = acc.astype(out_ref.dtype)
    if compute_stats:
        # f32 accumulator stats (padded lanes hold exactly 0 -> contribute nothing).
        sum_ref[0] = jnp.sum(acc, axis=1, keepdims=True)
        sq_ref[0] = jnp.sum(acc * acc, axis=1, keepdims=True)


def _upsample_kernel(z_ref, k_ref, *rest, compute_stats, head):
    """Bilinear-2x upsample as one MXU matmul against a Kronecker interpolation matrix.

    z_ref : (R, Kin)   bf16   R = C*N rows (one plane per row), Kin = H*W
    k_ref : (Kin, TL)  bf16   columns of kron(A_h, A_w)^T for this output lane tile
    w1    : (Ro, R)    bf16   head only: 1x1 conv weight expanded over the N-interleaved rows
    b1    : (Ro, 1)    f32    head only
    out   : (R|Ro, TL) bf16/f32
    sums/sqs : (1, R, 1) f32  per-tile per-row partials (optional, for BN after the upsample)
    """
    idx = 0
    if head:
        w1_ref, b1_ref = rest[idx], rest[idx + 1]
        idx += 2
    out_ref = rest[idx]
    idx += 1
    if compute_stats:
        sum_ref, sq_ref = rest[idx], rest[idx + 1]

    u = jnp.dot(z_ref[...], k_ref[...], preferred_element_type=jnp.float32)   # (R, TL)
    if compute_stats:
        sum_ref[0] = jnp.sum(u, axis=1, keepdims=True)
        sq_ref[0] = jnp.sum(u * u, axis=1, keepdims=True)
    if head:                               # ReLU -> 1x1 conv -> + bias, fused (no extra call)
        u = jnp.maximum(u, 0.0)
        u = jnp.dot(w1_ref[...], u.astype(jnp.bfloat16),
                    preferred_element_type=jnp.float32) + b1_ref[...]
    out_ref[...] = u.astype(out_ref.dtype)


# ----------------------------------------------------------------------------
# pallas_call wrappers (tiling / BlockSpecs)
# ----------------------------------------------------------------------------
def _call_conv(x_phases, w_flat, bias=None, compute_stats=False):
    """x_phases: (P, K, M) bf16; w_flat: (Cout, K).  Returns bf16 (Cout, M) [+ BN partials]."""
    p, k, m = x_phases.shape
    cout = w_flat.shape[0]
    has_bias = bias is not None
    # Zero-padded lanes must contribute 0 to the BN partials -> requires a bias-free conv.
    assert not (compute_stats and has_bias)

    tm, m_pad = _lane_tile(m, _conv_lane_target(p, k))
    x = x_phases.astype(jnp.bfloat16)
    if m_pad != m:
        x = jnp.pad(x, ((0, 0), (0, 0), (0, m_pad - m)))
    n_tiles = m_pad // tm

    kern = functools.partial(_conv_kernel, n_phases=p, has_bias=has_bias,
                             compute_stats=compute_stats)

    in_specs = [pl.BlockSpec((p, k, tm), lambda i: (0, 0, i)),
                pl.BlockSpec((cout, k), lambda i: (0, 0))]
    inputs = [x, w_flat.astype(jnp.bfloat16)]
    if has_bias:
        in_specs.append(pl.BlockSpec((cout, 1), lambda i: (0, 0)))
        inputs.append(jnp.asarray(bias, jnp.float32).reshape(cout, 1))

    out_shape = [jax.ShapeDtypeStruct((cout, m_pad), jnp.bfloat16)]
    out_specs = [pl.BlockSpec((cout, tm), lambda i: (0, i))]
    if compute_stats:
        out_shape += [jax.ShapeDtypeStruct((n_tiles, cout, 1), jnp.float32)] * 2
        out_specs += [pl.BlockSpec((1, cout, 1), lambda i: (i, 0, 0))] * 2

    res = pl.pallas_call(
        kern,
        out_shape=out_shape,
        grid=(n_tiles,),
        in_specs=in_specs,
        out_specs=out_specs,
        compiler_params=_cparams(n_tiles),
    )(*inputs)

    y = res[0][:, :m]
    if compute_stats:
        return y, res[1], res[2]
    return y


def _call_upsample(z_rows, kron, w1e=None, b1e=None, compute_stats=False):
    """z_rows: (R, HW); kron: (HW, 4HW).  Returns (R|Ro, 4HW) upsampled rows [+ BN partials]."""
    r, lin = z_rows.shape
    lout = kron.shape[1]
    head = w1e is not None
    ro = w1e.shape[0] if head else r

    # Pad the contraction dim to a multiple of 8 (avoids degenerate K=1 MXU shapes; zero rows
    # of the interpolation matrix contribute nothing).
    kpad = max(8, ((lin + 7) // 8) * 8)
    z = z_rows.astype(jnp.bfloat16)
    kmat = kron.astype(jnp.bfloat16)
    if kpad != lin:
        z = jnp.pad(z, ((0, 0), (0, kpad - lin)))
        kmat = jnp.pad(kmat, ((0, kpad - lin), (0, 0)))

    tl, l_pad = _lane_tile(lout, _LANE_TILE_TARGET)
    if l_pad != lout:
        kmat = jnp.pad(kmat, ((0, 0), (0, l_pad - lout)))
    n_tiles = l_pad // tl

    in_specs = [pl.BlockSpec((r, kpad), lambda i: (0, 0)),
                pl.BlockSpec((kpad, tl), lambda i: (0, i))]
    inputs = [z, kmat]
    if head:
        in_specs += [pl.BlockSpec((ro, r), lambda i: (0, 0)),
                     pl.BlockSpec((ro, 1), lambda i: (0, 0))]
        inputs += [w1e.astype(jnp.bfloat16),
                   jnp.asarray(b1e, jnp.float32).reshape(ro, 1)]

    out_dtype = jnp.float32 if head else jnp.bfloat16
    out_shape = [jax.ShapeDtypeStruct((ro, l_pad), out_dtype)]
    out_specs = [pl.BlockSpec((ro, tl), lambda i: (0, i))]
    if compute_stats:
        out_shape += [jax.ShapeDtypeStruct((n_tiles, r, 1), jnp.float32)] * 2
        out_specs += [pl.BlockSpec((1, r, 1), lambda i: (i, 0, 0))] * 2

    res = pl.pallas_call(
        functools.partial(_upsample_kernel, compute_stats=compute_stats, head=head),
        out_shape=out_shape,
        grid=(n_tiles,),
        in_specs=in_specs,
        out_specs=out_specs,
        compiler_params=_cparams(n_tiles),
    )(*inputs)

    u = res[0][:, :lout]
    if compute_stats:
        return u, res[1], res[2]
    return u


# ----------------------------------------------------------------------------
# JAX glue: lazy BN+ReLU, im2col (pure index shuffling), weight repacking, bilinear matrices
# ----------------------------------------------------------------------------
def _apply_bn_relu(v, scale, shift):
    """Lazy BatchNorm affine + ReLU on a pre-BN (C, N, H, W) activation (fused by XLA into the
    consumer's im2col gather, so the post-BN tensor is never round-tripped through HBM)."""
    if scale is None:
        return v.astype(jnp.bfloat16)
    c = v.shape[0]
    y = v.astype(jnp.float32) * scale.reshape(c, 1, 1, 1) + shift.reshape(c, 1, 1, 1)
    return jnp.maximum(y, 0.0).astype(jnp.bfloat16)


def _im2col_pool_phases(x):
    """(C, N, H, W) -> (4, 9*C, N*Hp*Wp): 4 max-pool phases, 3x3 taps folded into K (bf16)."""
    c, n, h, w = x.shape
    assert h % 2 == 0 and w % 2 == 0, "MaxPool2d(2,2) path assumes even spatial dims"
    hp, wp = h // 2, w // 2
    xp = jnp.pad(x, ((0, 0), (0, 0), (1, 1), (1, 1)))
    phases = []
    for di in range(2):
        for dj in range(2):
            taps = [
                xp[:, :, di + dy: di + dy + 2 * hp: 2, dj + dx: dj + dx + 2 * wp: 2]
                .reshape(c, n * hp * wp)
                for dy in range(3) for dx in range(3)
            ]
            phases.append(jnp.concatenate(taps, axis=0))
    return jnp.stack(phases, axis=0)


def _im2col_same(x):
    """(C, N, H, W) -> (1, 9*C, N*H*W): 3x3 'same' (pad=1) conv taps folded into K (bf16)."""
    c, n, h, w = x.shape
    xp = jnp.pad(x, ((0, 0), (0, 0), (1, 1), (1, 1)))
    taps = [xp[:, :, dy: dy + h, dx: dx + w].reshape(c, n * h * w)
            for dy in range(3) for dx in range(3)]
    return jnp.concatenate(taps, axis=0)[None]


def _conv_w_flat(w):
    """torch Conv2d weight (Cout, Cin, kh, kw) -> (Cout, kh*kw*Cin) matching im2col tap order."""
    co, ci, kh, kw = w.shape
    return jnp.transpose(w, (0, 2, 3, 1)).reshape(co, kh * kw * ci)


def _convT_w_flat(w):
    """ConvTranspose2d(3x3, stride=1, pad=1) == Conv2d(3x3, pad=1) with the spatially flipped,
    channel-transposed kernel.  torch weight (Cin, Cout, 3, 3) -> (Cout, 9*Cin)."""
    return _conv_w_flat(jnp.flip(jnp.transpose(w, (1, 0, 2, 3)), axis=(2, 3)))


def _bn_scale_shift(total_sum, total_sq, count, gamma, beta):
    """Fold BN (training mode, biased batch variance) + affine into per-channel scale/shift."""
    mean = total_sum / count
    var = jnp.maximum(total_sq / count - mean * mean, 0.0)
    scale = gamma * jax.lax.rsqrt(var + _BN_EPS)
    shift = beta - mean * scale
    return scale, shift


def _bilinear_matrix(n_in, n_out):
    """Dense 1-D interpolation matrix for Upsample(scale=2, bilinear, align_corners=True)."""
    a = np.zeros((n_out, n_in), np.float32)
    if n_in == 1:
        a[:, 0] = 1.0
    else:
        scale = (n_in - 1) / (n_out - 1)
        for o in range(n_out):
            src = o * scale
            i0 = min(int(np.floor(src)), n_in - 1)
            i1 = min(i0 + 1, n_in - 1)
            frac = src - i0
            a[o, i0] += 1.0 - frac
            a[o, i1] += frac
    return a


def _kron_upsample_matrix(h, w):
    """(H*W, 4*H*W) matrix K^T with u_plane_flat = z_plane_flat @ K^T for 2x bilinear upsample.
    TODO(synk): for large planes switch to a separable (per-axis) in-kernel formulation; the
    dense Kronecker matrix only scales to moderate H*W."""
    k2 = np.kron(_bilinear_matrix(h, 2 * h), _bilinear_matrix(w, 2 * w))   # (4HW, HW)
    return jnp.asarray(k2.T)


# ----------------------------------------------------------------------------
# UNet stages.  Each stage carries (pre-BN activation bf16, per-channel scale, shift); the
# BN affine + ReLU is applied lazily by the consumer (and zero conv-padding stays correct
# because padding is added *after* the affine in the im2col builder).
# ----------------------------------------------------------------------------
def _encoder_stage(v, scale, shift, w, gamma, beta):
    """Conv2d(3x3, pad=1) -> MaxPool2d(2,2) -> BatchNorm2d(batch stats) -> ReLU (lazy)."""
    xin = _apply_bn_relu(v, scale, shift)                          # (Cin, N, H, W) bf16
    _, n, h, w_sp = xin.shape
    hp, wp = h // 2, w_sp // 2
    m = n * hp * wp
    xcol = _im2col_pool_phases(xin)                                # (4, 9*Cin, M)
    # Conv2d bias is dropped: a per-channel constant is exactly cancelled by the BatchNorm.
    pooled, sums, sqs = _call_conv(xcol, _conv_w_flat(w), compute_stats=True)
    new_scale, new_shift = _bn_scale_shift(jnp.sum(sums, axis=0)[:, 0],
                                           jnp.sum(sqs, axis=0)[:, 0], m, gamma, beta)
    return pooled.reshape(-1, n, hp, wp), new_scale, new_shift


def _decoder_stage(v, scale, shift, skip, w_t, gamma, beta):
    """ConvTranspose2d(3x3, pad=1) -> Upsample(2x bilinear) -> BatchNorm2d -> ReLU -> cat(skip)."""
    xin = _apply_bn_relu(v, scale, shift)
    _, n, h, w_sp = xin.shape
    # ConvTranspose2d bias dropped: the constant survives the (convex) bilinear upsample and is
    # then exactly cancelled by the BatchNorm.
    z = _call_conv(_im2col_same(xin), _convT_w_flat(w_t))          # (Cmid, N*H*W) bf16
    cm = z.shape[0]
    z_rows = z.reshape(cm * n, h * w_sp)                           # one plane per row, no copy
    u_rows, sums, sqs = _call_upsample(z_rows, _kron_upsample_matrix(h, w_sp),
                                       compute_stats=True)        # (Cmid*N, 4*H*W)
    ho, wo = 2 * h, 2 * w_sp
    m_out = n * ho * wo
    tot = jnp.sum(sums.reshape(-1, cm, n), axis=(0, 2))
    tot_sq = jnp.sum(sqs.reshape(-1, cm, n), axis=(0, 2))
    u_scale, u_shift = _bn_scale_shift(tot, tot_sq, m_out, gamma, beta)
    u = u_rows.reshape(cm, n, ho, wo)

    skip_v, skip_scale, skip_shift = skip
    # TODO(synk): Decoder.crop / replicate-pad path for mismatched spatial shapes is not modeled
    #             (it never triggers for even, power-of-two inputs, where shapes always match).
    assert skip_v.shape[1:] == u.shape[1:]
    # torch: cat([skip, y], dim=1) then ReLU -- the second ReLU is an exact no-op because both
    # halves are already post-ReLU (>= 0) once the lazy BN+ReLU is applied by the next consumer.
    return (jnp.concatenate([skip_v, u], axis=0),
            jnp.concatenate([skip_scale, u_scale], axis=0),
            jnp.concatenate([skip_shift, u_shift], axis=0))


def _decoder_head(v, scale, shift, w_t4, b_t4, head_w, head_b):
    """ConvTranspose2d(+bias) -> Upsample(2x) -> ReLU -> Conv2d(1x1)+bias, last two fused."""
    xin = _apply_bn_relu(v, scale, shift)
    _, n, h, w_sp = xin.shape
    z = _call_conv(_im2col_same(xin), _convT_w_flat(w_t4), bias=b_t4)   # (C4, N*H*W) bf16
    c4 = z.shape[0]
    z_rows = z.reshape(c4 * n, h * w_sp)
    co = head_w.shape[0]
    w1 = head_w.reshape(co, c4)
    # Expand the 1x1 conv over the (channel, image)-interleaved rows of the upsample output.
    w1e = jnp.kron(w1, jnp.eye(n, dtype=w1.dtype))                 # (co*N, c4*N)
    b1e = jnp.repeat(jnp.asarray(head_b, jnp.float32), n)          # (co*N,)
    out_rows = _call_upsample(z_rows, _kron_upsample_matrix(h, w_sp), w1e=w1e, b1e=b1e)
    ho, wo = 2 * h, 2 * w_sp
    return out_rows.reshape(co, n, ho, wo)


def unet_forward(x_nchw, params):
    """UNet forward pass (training-mode BatchNorm, i.e. biased batch statistics)."""
    # TODO(synk): BatchNorm running-stat (momentum) updates are stateful and do not affect the
    #             forward output; they are not modeled.
    x = jnp.transpose(x_nchw, (1, 0, 2, 3))                        # NCHW -> CNHW (channels major)

    # ---------------- encoder ----------------
    cur = (x, None, None)
    skips = []
    for lp in params["encoder"]:
        cur = _encoder_stage(*cur, w=lp["w"], gamma=lp["gamma"], beta=lp["beta"])
        skips.append(cur)
    s1, s2, s3, s4 = skips

    # ---------------- decoder ----------------
    dct, dbn = params["decoder_convT"], params["decoder_bn"]
    cur = _decoder_stage(*s4, skip=s3, w_t=dct[0]["w"], gamma=dbn[2]["gamma"], beta=dbn[2]["beta"])
    cur = _decoder_stage(*cur, skip=s2, w_t=dct[1]["w"], gamma=dbn[1]["gamma"], beta=dbn[1]["beta"])
    cur = _decoder_stage(*cur, skip=s1, w_t=dct[2]["w"], gamma=dbn[0]["gamma"], beta=dbn[0]["beta"])
    out = _decoder_head(*cur, w_t4=dct[3]["w"], b_t4=dct[3]["b"],
                        head_w=params["head_w"], head_b=params["head_b"])

    # Decoder replicate-pad (`cropped * 2`) and the UNet-level pad are no-ops here because the
    # spatial shapes always match for even, power-of-two inputs.
    return jnp.transpose(out, (1, 0, 2, 3)).astype(jnp.float32)    # CNHW -> NCHW


# ----------------------------------------------------------------------------
# Deterministic synthetic parameters (shapes match the nn.Module layers used in forward)
# ----------------------------------------------------------------------------
def init_unet_params(key, channels_in, channels_out, hidden_size):
    h = hidden_size
    keys = iter(jax.random.split(key, 32))

    enc = []
    enc_couts = [h // 8, h // 4, h // 2, h]
    enc_cins = [channels_in] + enc_couts[:-1]
    for ci, co in zip(enc_cins, enc_couts):
        w = jax.random.normal(next(keys), (co, ci, 3, 3), jnp.float32) / np.sqrt(ci * 9)
        gamma = 1.0 + 0.1 * jax.random.normal(next(keys), (co,), jnp.float32)
        beta = 0.1 * jax.random.normal(next(keys), (co,), jnp.float32)
        enc.append(dict(w=w, gamma=gamma, beta=beta))   # Conv2d bias omitted (cancelled by BN)

    dec = []
    dec_specs = [(h, h // 2), (h, h // 4), (h // 2, h // 8), (h // 4, channels_out)]
    for idx, (ci, co) in enumerate(dec_specs):
        d = dict(w=jax.random.normal(next(keys), (ci, co, 3, 3), jnp.float32) / np.sqrt(ci * 9))
        if idx == 3:  # only the last ConvTranspose2d's bias survives (no BatchNorm after it)
            d["b"] = 0.05 * jax.random.normal(next(keys), (co,), jnp.float32)
        dec.append(d)

    dbn = []
    for c in (h // 8, h // 4, h // 2):                  # decoder batch_norm_layers[0..2]
        gamma = 1.0 + 0.1 * jax.random.normal(next(keys), (c,), jnp.float32)
        beta = 0.1 * jax.random.normal(next(keys), (c,), jnp.float32)
        dbn.append(dict(gamma=gamma, beta=beta))

    head_w = jax.random.normal(next(keys), (channels_out, channels_out, 1, 1),
                               jnp.float32) / np.sqrt(channels_out)
    head_b = 0.05 * jax.random.normal(next(keys), (channels_out,), jnp.float32)

    return dict(encoder=enc, decoder_convT=dec, decoder_bn=dbn, head_w=head_w, head_b=head_b)


if __name__ == "__main__":
    # Small deterministic example: batch=2, channels_in=channels_out=4, hidden=32, spatial=16.
    N, C_IN, C_OUT, HIDDEN, HW = 2, 4, 4, 32, 16

    key = jax.random.PRNGKey(0)
    k_x, k_p = jax.random.split(key)
    x = jax.random.normal(k_x, (N, C_IN, HW, HW), jnp.float32)
    params = init_unet_params(k_p, C_IN, C_OUT, HIDDEN)

    out = jax.jit(unet_forward)(x, params)
    jax.block_until_ready(out)

    assert out.shape == (N, C_OUT, HW, HW)
    assert bool(jnp.isfinite(out).all())

    print("KERNEL_OK")
</pallas_src>

<mosaic_0001>
module attributes {stable_mosaic.version = 11 : i64} {
  func.func @_conv_kernel(%arg0: i32, %arg1: memref<4x36x128xbf16, #tpu.memory_space<vmem>>, %arg2: memref<4x36xbf16, #tpu.memory_space<vmem>>, %arg3: memref<4x128xbf16, #tpu.memory_space<vmem>>, %arg4: memref<1x4x1xf32, #tpu.memory_space<vmem>>, %arg5: memref<1x4x1xf32, #tpu.memory_space<vmem>>) attributes {dimension_semantics = [#tpu.dimension_semantics<parallel>], iteration_bounds = array<i64: 1>, scalar_prefetch = 0 : i64, scratch_operands = 0 : i64, tpu.core_type = #tpu.core_type<tc>, window_params = [{transform_indices = @transform_0, window_bounds = array<i64: 4, 36, 128>}, {pipeline_mode = #tpu.pipeline_mode<synchronous>, transform_indices = @transform_1, window_bounds = array<i64: 4, 36>}, {transform_indices = @transform_2, window_bounds = array<i64: 4, 128>}, {transform_indices = @transform_3, window_bounds = array<i64: 1, 4, 1>}, {transform_indices = @transform_4, window_bounds = array<i64: 1, 4, 1>}]} {
    %c0 = arith.constant 0 : index
    %c0_0 = arith.constant 0 : index
    %0 = vector.load %arg2[%c0, %c0_0] : memref<4x36xbf16, #tpu.memory_space<vmem>>, vector<4x36xbf16>
    %c0_1 = arith.constant 0 : index
    %c0_2 = arith.constant 0 : index
    %c0_3 = arith.constant 0 : index
    %1 = vector.load %arg1[%c0_1, %c0_2, %c0_3] : memref<4x36x128xbf16, #tpu.memory_space<vmem>>, vector<1x36x128xbf16>
    %2 = vector.shape_cast %1 : vector<1x36x128xbf16> to vector<36x128xbf16>
    %cst = arith.constant dense<0.000000e+00> : vector<4x128xf32>
    %3 = tpu.matmul %0, %2, %cst {dimension_numbers = #tpu.dot_dimension_numbers<[1], [0], [0], [1], [0, 0, 1, 1], [], []>} : vector<4x36xbf16>, vector<36x128xbf16>, vector<4x128xf32> -> vector<4x128xf32>
    %c1 = arith.constant 1 : index
    %c0_4 = arith.constant 0 : index
    %c0_5 = arith.constant 0 : index
    %4 = vector.load %arg1[%c1, %c0_4, %c0_5] : memref<4x36x128xbf16, #tpu.memory_space<vmem>>, vector<1x36x128xbf16>
    %5 = vector.shape_cast %4 : vector<1x36x128xbf16> to vector<36x128xbf16>
    %cst_6 = arith.constant dense<0.000000e+00> : vector<4x128xf32>
    %6 = tpu.matmul %0, %5, %cst_6 {dimension_numbers = #tpu.dot_dimension_numbers<[1], [0], [0], [1], [0, 0, 1, 1], [], []>} : vector<4x36xbf16>, vector<36x128xbf16>, vector<4x128xf32> -> vector<4x128xf32>
    %7 = arith.maximumf %3, %6 : vector<4x128xf32>
    %c2 = arith.constant 2 : index
    %c0_7 = arith.constant 0 : index
    %c0_8 = arith.constant 0 : index
    %8 = vector.load %arg1[%c2, %c0_7, %c0_8] : memref<4x36x128xbf16, #tpu.memory_space<vmem>>, vector<1x36x128xbf16>
    %9 = vector.shape_cast %8 : vector<1x36x128xbf16> to vector<36x128xbf16>
    %cst_9 = arith.constant dense<0.000000e+00> : vector<4x128xf32>
    %10 = tpu.matmul %0, %9, %cst_9 {dimension_numbers = #tpu.dot_dimension_numbers<[1], [0], [0], [1], [0, 0, 1, 1], [], []>} : vector<4x36xbf16>, vector<36x128xbf16>, vector<4x128xf32> -> vector<4x128xf32>
    %11 = arith.maximumf %7, %10 : vector<4x128xf32>
    %c3 = arith.constant 3 : index
    %c0_10 = arith.constant 0 : index
    %c0_11 = arith.constant 0 : index
    %12 = vector.load %arg1[%c3, %c0_10, %c0_11] : memref<4x36x128xbf16, #tpu.memory_space<vmem>>, vector<1x36x128xbf16>
    %13 = vector.shape_cast %12 : vector<1x36x128xbf16> to vector<36x128xbf16>
    %cst_12 = arith.constant dense<0.000000e+00> : vector<4x128xf32>
    %14 = tpu.matmul %0, %13, %cst_12 {dimension_numbers = #tpu.dot_dimension_numbers<[1], [0], [0], [1], [0, 0, 1, 1], [], []>} : vector<4x36xbf16>, vector<36x128xbf16>, vector<4x128xf32> -> vector<4x128xf32>
    %15 = arith.maximumf %11, %14 : vector<4x128xf32>
    %16 = arith.truncf %15 : vector<4x128xf32> to vector<4x128xbf16>
    %c0_13 = arith.constant 0 : index
    %c0_14 = arith.constant 0 : index
    %17 = vector.load %arg3[%c0_13, %c0_14] : memref<4x128xbf16, #tpu.memory_space<vmem>>, vector<4x128xbf16>
    tpu.vector_store %arg3[%c0_13, %c0_14], %16 {strides = array<i32>} : memref<4x128xbf16, #tpu.memory_space<vmem>>, vector<4x128xbf16>,
    %cst_15 = arith.constant dense<0.000000e+00> : vector<4xf32>
    %18 = vector.multi_reduction <add>, %15, %cst_15 [1] : vector<4x128xf32> to vector<4xf32>
    %19 = vector.shape_cast %18 : vector<4xf32> to vector<4x1xf32>
    %c0_16 = arith.constant 0 : index
    %c0_17 = arith.constant 0 : index
    %c0_18 = arith.constant 0 : index
    %20 = vector.load %arg4[%c0_16, %c0_17, %c0_18] : memref<1x4x1xf32, #tpu.memory_space<vmem>>, vector<1x4x1xf32>
    %21 = vector.shape_cast %20 : vector<1x4x1xf32> to vector<4x1xf32>
    %22 = vector.shape_cast %19 : vector<4x1xf32> to vector<1x4x1xf32>
    tpu.vector_store %arg4[%c0_16, %c0_17, %c0_18], %22 {strides = array<i32>} : memref<1x4x1xf32, #tpu.memory_space<vmem>>, vector<1x4x1xf32>,
    %23 = arith.mulf %15, %15 : vector<4x128xf32>
    %cst_19 = arith.constant dense<0.000000e+00> : vector<4xf32>
    %24 = vector.multi_reduction <add>, %23, %cst_19 [1] : vector<4x128xf32> to vector<4xf32>
    %25 = vector.shape_cast %24 : vector<4xf32> to vector<4x1xf32>
    %c0_20 = arith.constant 0 : index
    %c0_21 = arith.constant 0 : index
    %c0_22 = arith.constant 0 : index
    %26 = vector.load %arg5[%c0_20, %c0_21, %c0_22] : memref<1x4x1xf32, #tpu.memory_space<vmem>>, vector<1x4x1xf32>
    %27 = vector.shape_cast %26 : vector<1x4x1xf32> to vector<4x1xf32>
    %28 = vector.shape_cast %25 : vector<4x1xf32> to vector<1x4x1xf32>
    tpu.vector_store %arg5[%c0_20, %c0_21, %c0_22], %28 {strides = array<i32>} : memref<1x4x1xf32, #tpu.memory_space<vmem>>, vector<1x4x1xf32>,
    return
  }
  func.func @transform_0(%arg0: i32) -> (i32, i32, i32) {
    %c0_i32 = arith.constant 0 : i32
    %c0_i32_0 = arith.constant 0 : i32
    %c0_i32_1 = arith.constant 0 : i32
    return %c0_i32, %c0_i32_0, %arg0 : i32, i32, i32
  }
  func.func @transform_1(%arg0: i32) -> (i32, i32) {
    %c0_i32 = arith.constant 0 : i32
    %c0_i32_0 = arith.constant 0 : i32
    %c0_i32_1 = arith.constant 0 : i32
    return %c0_i32, %c0_i32_0 : i32, i32
  }
  func.func @transform_2(%arg0: i32) -> (i32, i32) {
    %c0_i32 = arith.constant 0 : i32
    %c0_i32_0 = arith.constant 0 : i32
    return %c0_i32, %arg0 : i32, i32
  }
  func.func @transform_3(%arg0: i32) -> (i32, i32, i32) {
    %c0_i32 = arith.constant 0 : i32
    %c0_i32_0 = arith.constant 0 : i32
    %c0_i32_1 = arith.constant 0 : i32
    return %arg0, %c0_i32, %c0_i32_0 : i32, i32, i32
  }
  func.func @transform_4(%arg0: i32) -> (i32, i32, i32) {
    %c0_i32 = arith.constant 0 : i32
    %c0_i32_0 = arith.constant 0 : i32
    %c0_i32_1 = arith.constant 0 : i32
    return %arg0, %c0_i32, %c0_i32_0 : i32, i32, i32
  }
}

module attributes {stable_mosaic.version = 11 : i64} {
  func.func @_conv_kernel(%arg0: i32, %arg1: memref<4x36x32xbf16, #tpu.memory_space<vmem>>, %arg2: memref<8x36xbf16, #tpu.memory_space<vmem>>, %arg3: memref<8x32xbf16, #tpu.memory_space<vmem>>, %arg4: memref<1x8x1xf32, #tpu.memory_space<vmem>>, %arg5: memref<1x8x1xf32, #tpu.memory_space<vmem>>) attributes {dimension_semantics = [#tpu.dimension_semantics<parallel>], iteration_bounds = array<i64: 1>, scalar_prefetch = 0 : i64, scratch_operands = 0 : i64, tpu.core_type = #tpu.core_type<tc>, window_params = [{transform_indices = @transform_0, window_bounds = array<i64: 4, 36, 32>}, {pipeline_mode = #tpu.pipeline_mode<synchronous>, transform_indices = @transform_1, window_bounds = array<i64: 8, 36>}, {transform_indices = @transform_2, window_bounds = array<i64: 8, 32>}, {transform_indices = @transform_3, window_bounds = array<i64: 1, 8, 1>}, {transform_indices = @transform_4, window_bounds = array<i64: 1, 8, 1>}]} {
    %c0 = arith.constant 0 : index
    %c0_0 = arith.constant 0 : index
    %0 = vector.load %arg2[%c0, %c0_0] : memref<8x36xbf16, #tpu.memory_space<vmem>>, vector<8x36xbf16>
    %c0_1 = arith.constant 0 : index
    %c0_2 = arith.constant 0 : index
    %c0_3 = arith.constant 0 : index
    %1 = vector.load %arg1[%c0_1, %c0_2, %c0_3] : memref<4x36x32xbf16, #tpu.memory_space<vmem>>, vector<1x36x32xbf16>
    %2 = vector.shape_cast %1 : vector<1x36x32xbf16> to vector<36x32xbf16>
    %cst = arith.constant dense<0.000000e+00> : vector<8x32xf32>
    %3 = tpu.matmul %0, %2, %cst {dimension_numbers = #tpu.dot_dimension_numbers<[1], [0], [0], [1], [0, 0, 1, 1], [], []>} : vector<8x36xbf16>, vector<36x32xbf16>, vector<8x32xf32> -> vector<8x32xf32>
    %c1 = arith.constant 1 : index
    %c0_4 = arith.constant 0 : index
    %c0_5 = arith.constant 0 : index
    %4 = vector.load %arg1[%c1, %c0_4, %c0_5] : memref<4x36x32xbf16, #tpu.memory_space<vmem>>, vector<1x36x32xbf16>
    %5 = vector.shape_cast %4 : vector<1x36x32xbf16> to vector<36x32xbf16>
    %cst_6 = arith.constant dense<0.000000e+00> : vector<8x32xf32>
    %6 = tpu.matmul %0, %5, %cst_6 {dimension_numbers = #tpu.dot_dimension_numbers<[1], [0], [0], [1], [0, 0, 1, 1], [], []>} : vector<8x36xbf16>, vector<36x32xbf16>, vector<8x32xf32> -> vector<8x32xf32>
    %7 = arith.maximumf %3, %6 : vector<8x32xf32>
    %c2 = arith.constant 2 : index
    %c0_7 = arith.constant 0 : index
    %c0_8 = arith.constant 0 : index
    %8 = vector.load %arg1[%c2, %c0_7, %c0_8] : memref<4x36x32xbf16, #tpu.memory_space<vmem>>, vector<1x36x32xbf16>
    %9 = vector.shape_cast %8 : vector<1x36x32xbf16> to vector<36x32xbf16>
    %cst_9 = arith.constant dense<0.000000e+00> : vector<8x32xf32>
    %10 = tpu.matmul %0, %9, %cst_9 {dimension_numbers = #tpu.dot_dimension_numbers<[1], [0], [0], [1], [0, 0, 1, 1], [], []>} : vector<8x36xbf16>, vector<36x32xbf16>, vector<8x32xf32> -> vector<8x32xf32>
    %11 = arith.maximumf %7, %10 : vector<8x32xf32>
    %c3 = arith.constant 3 : index
    %c0_10 = arith.constant 0 : index
    %c0_11 = arith.constant 0 : index
    %12 = vector.load %arg1[%c3, %c0_10, %c0_11] : memref<4x36x32xbf16, #tpu.memory_space<vmem>>, vector<1x36x32xbf16>
    %13 = vector.shape_cast %12 : vector<1x36x32xbf16> to vector<36x32xbf16>
    %cst_12 = arith.constant dense<0.000000e+00> : vector<8x32xf32>
    %14 = tpu.matmul %0, %13, %cst_12 {dimension_numbers = #tpu.dot_dimension_numbers<[1], [0], [0], [1], [0, 0, 1, 1], [], []>} : vector<8x36xbf16>, vector<36x32xbf16>, vector<8x32xf32> -> vector<8x32xf32>
    %15 = arith.maximumf %11, %14 : vector<8x32xf32>
    %16 = arith.truncf %15 : vector<8x32xf32> to vector<8x32xbf16>
    %c0_13 = arith.constant 0 : index
    %c0_14 = arith.constant 0 : index
    %17 = vector.load %arg3[%c0_13, %c0_14] : memref<8x32xbf16, #tpu.memory_space<vmem>>, vector<8x32xbf16>
    tpu.vector_store %arg3[%c0_13, %c0_14], %16 {strides = array<i32>} : memref<8x32xbf16, #tpu.memory_space<vmem>>, vector<8x32xbf16>,
    %cst_15 = arith.constant dense<0.000000e+00> : vector<8xf32>
    %18 = vector.multi_reduction <add>, %15, %cst_15 [1] : vector<8x32xf32> to vector<8xf32>
    %19 = vector.shape_cast %18 : vector<8xf32> to vector<8x1xf32>
    %c0_16 = arith.constant 0 : index
    %c0_17 = arith.constant 0 : index
    %c0_18 = arith.constant 0 : index
    %20 = vector.load %arg4[%c0_16, %c0_17, %c0_18] : memref<1x8x1xf32, #tpu.memory_space<vmem>>, vector<1x8x1xf32>
    %21 = vector.shape_cast %20 : vector<1x8x1xf32> to vector<8x1xf32>
    %22 = vector.shape_cast %19 : vector<8x1xf32> to vector<1x8x1xf32>
    tpu.vector_store %arg4[%c0_16, %c0_17, %c0_18], %22 {strides = array<i32>} : memref<1x8x1xf32, #tpu.memory_space<vmem>>, vector<1x8x1xf32>,
    %23 = arith.mulf %15, %15 : vector<8x32xf32>
    %cst_19 = arith.constant dense<0.000000e+00> : vector<8xf32>
    %24 = vector.multi_reduction <add>, %23, %cst_19 [1] : vector<8x32xf32> to vector<8xf32>
    %25 = vector.shape_cast %24 : vector<8xf32> to vector<8x1xf32>
    %c0_20 = arith.constant 0 : index
    %c0_21 = arith.constant 0 : index
    %c0_22 = arith.constant 0 : index
    %26 = vector.load %arg5[%c0_20, %c0_21, %c0_22] : memref<1x8x1xf32, #tpu.memory_space<vmem>>, vector<1x8x1xf32>
    %27 = vector.shape_cast %26 : vector<1x8x1xf32> to vector<8x1xf32>
    %28 = vector.shape_cast %25 : vector<8x1xf32> to vector<1x8x1xf32>
    tpu.vector_store %arg5[%c0_20, %c0_21, %c0_22], %28 {strides = array<i32>} : memref<1x8x1xf32, #tpu.memory_space<vmem>>, vector<1x8x1xf32>,
    return
  }
  func.func @transform_0(%arg0: i32) -> (i32, i32, i32) {
    %c0_i32 = arith.constant 0 : i32
    %c0_i32_0 = arith.constant 0 : i32
    %c0_i32_1 = arith.constant 0 : i32
    return %c0_i32, %c0_i32_0, %arg0 : i32, i32, i32
  }
  func.func @transform_1(%arg0: i32) -> (i32, i32) {
    %c0_i32 = arith.constant 0 : i32
    %c0_i32_0 = arith.constant 0 : i32
    %c0_i32_1 = arith.constant 0 : i32
    return %c0_i32, %c0_i32_0 : i32, i32
  }
  func.func @transform_2(%arg0: i32) -> (i32, i32) {
    %c0_i32 = arith.constant 0 : i32
    %c0_i32_0 = arith.constant 0 : i32
    return %c0_i32, %arg0 : i32, i32
  }
  func.func @transform_3(%arg0: i32) -> (i32, i32, i32) {
    %c0_i32 = arith.constant 0 : i32
    %c0_i32_0 = arith.constant 0 : i32
    %c0_i32_1 = arith.constant 0 : i32
    return %arg0, %c0_i32, %c0_i32_0 : i32, i32, i32
  }
  func.func @transform_4(%arg0: i32) -> (i32, i32, i32) {
    %c0_i32 = arith.constant 0 : i32
    %c0_i32_0 = arith.constant 0 : i32
    %c0_i32_1 = arith.constant 0 : i32
    return %arg0, %c0_i32, %c0_i32_0 : i32, i32, i32
  }
}

module attributes {stable_mosaic.version = 11 : i64} {
  func.func @_conv_kernel(%arg0: i32, %arg1: memref<4x72x8xbf16, #tpu.memory_space<vmem>>, %arg2: memref<16x72xbf16, #tpu.memory_space<vmem>>, %arg3: memref<16x8xbf16, #tpu.memory_space<vmem>>, %arg4: memref<1x16x1xf32, #tpu.memory_space<vmem>>, %arg5: memref<1x16x1xf32, #tpu.memory_space<vmem>>) attributes {dimension_semantics = [#tpu.dimension_semantics<parallel>], iteration_bounds = array<i64: 1>, scalar_prefetch = 0 : i64, scratch_operands = 0 : i64, tpu.core_type = #tpu.core_type<tc>, window_params = [{transform_indices = @transform_0, window_bounds = array<i64: 4, 72, 8>}, {pipeline_mode = #tpu.pipeline_mode<synchronous>, transform_indices = @transform_1, window_bounds = array<i64: 16, 72>}, {transform_indices = @transform_2, window_bounds = array<i64: 16, 8>}, {transform_indices = @transform_3, window_bounds = array<i64: 1, 16, 1>}, {transform_indices = @transform_4, window_bounds = array<i64: 1, 16, 1>}]} {
    %c0 = arith.constant 0 : index
    %c0_0 = arith.constant 0 : index
    %0 = vector.load %arg2[%c0, %c0_0] : memref<16x72xbf16, #tpu.memory_space<vmem>>, vector<16x72xbf16>
    %c0_1 = arith.constant 0 : index
    %c0_2 = arith.constant 0 : index
    %c0_3 = arith.constant 0 : index
    %1 = vector.load %arg1[%c0_1, %c0_2, %c0_3] : memref<4x72x8xbf16, #tpu.memory_space<vmem>>, vector<1x72x8xbf16>
    %2 = vector.shape_cast %1 : vector<1x72x8xbf16> to vector<72x8xbf16>
    %cst = arith.constant dense<0.000000e+00> : vector<16x8xf32>
    %3 = tpu.matmul %0, %2, %cst {dimension_numbers = #tpu.dot_dimension_numbers<[1], [0], [0], [1], [0, 0, 1, 1], [], []>} : vector<16x72xbf16>, vector<72x8xbf16>, vector<16x8xf32> -> vector<16x8xf32>
    %c1 = arith.constant 1 : index
    %c0_4 = arith.constant 0 : index
    %c0_5 = arith.constant 0 : index
    %4 = vector.load %arg1[%c1, %c0_4, %c0_5] : memref<4x72x8xbf16, #tpu.memory_space<vmem>>, vector<1x72x8xbf16>
    %5 = vector.shape_cast %4 : vector<1x72x8xbf16> to vector<72x8xbf16>
    %cst_6 = arith.constant dense<0.000000e+00> : vector<16x8xf32>
    %6 = tpu.matmul %0, %5, %cst_6 {dimension_numbers = #tpu.dot_dimension_numbers<[1], [0], [0], [1], [0, 0, 1, 1], [], []>} : vector<16x72xbf16>, vector<72x8xbf16>, vector<16x8xf32> -> vector<16x8xf32>
    %7 = arith.maximumf %3, %6 : vector<16x8xf32>
    %c2 = arith.constant 2 : index
    %c0_7 = arith.constant 0 : index
    %c0_8 = arith.constant 0 : index
    %8 = vector.load %arg1[%c2, %c0_7, %c0_8] : memref<4x72x8xbf16, #tpu.memory_space<vmem>>, vector<1x72x8xbf16>
    %9 = vector.shape_cast %8 : vector<1x72x8xbf16> to vector<72x8xbf16>
    %cst_9 = arith.constant dense<0.000000e+00> : vector<16x8xf32>
    %10 = tpu.matmul %0, %9, %cst_9 {dimension_numbers = #tpu.dot_dimension_numbers<[1], [0], [0], [1], [0, 0, 1, 1], [], []>} : vector<16x72xbf16>, vector<72x8xbf16>, vector<16x8xf32> -> vector<16x8xf32>
    %11 = arith.maximumf %7, %10 : vector<16x8xf32>
    %c3 = arith.constant 3 : index
    %c0_10 = arith.constant 0 : index
    %c0_11 = arith.constant 0 : index
    %12 = vector.load %arg1[%c3, %c0_10, %c0_11] : memref<4x72x8xbf16, #tpu.memory_space<vmem>>, vector<1x72x8xbf16>
    %13 = vector.shape_cast %12 : vector<1x72x8xbf16> to vector<72x8xbf16>
    %cst_12 = arith.constant dense<0.000000e+00> : vector<16x8xf32>
    %14 = tpu.matmul %0, %13, %cst_12 {dimension_numbers = #tpu.dot_dimension_numbers<[1], [0], [0], [1], [0, 0, 1, 1], [], []>} : vector<16x72xbf16>, vector<72x8xbf16>, vector<16x8xf32> -> vector<16x8xf32>
    %15 = arith.maximumf %11, %14 : vector<16x8xf32>
    %16 = arith.truncf %15 : vector<16x8xf32> to vector<16x8xbf16>
    %c0_13 = arith.constant 0 : index
    %c0_14 = arith.constant 0 : index
    %17 = vector.load %arg3[%c0_13, %c0_14] : memref<16x8xbf16, #tpu.memory_space<vmem>>, vector<16x8xbf16>
    tpu.vector_store %arg3[%c0_13, %c0_14], %16 {strides = array<i32>} : memref<16x8xbf16, #tpu.memory_space<vmem>>, vector<16x8xbf16>,
    %cst_15 = arith.constant dense<0.000000e+00> : vector<16xf32>
    %18 = vector.multi_reduction <add>, %15, %cst_15 [1] : vector<16x8xf32> to vector<16xf32>
    %19 = vector.shape_cast %18 : vector<16xf32> to vector<16x1xf32>
    %c0_16 = arith.constant 0 : index
    %c0_17 = arith.constant 0 : index
    %c0_18 = arith.constant 0 : index
    %20 = vector.load %arg4[%c0_16, %c0_17, %c0_18] : memref<1x16x1xf32, #tpu.memory_space<vmem>>, vector<1x16x1xf32>
    %21 = vector.shape_cast %20 : vector<1x16x1xf32> to vector<16x1xf32>
    %22 = vector.shape_cast %19 : vector<16x1xf32> to vector<1x16x1xf32>
    tpu.vector_store %arg4[%c0_16, %c0_17, %c0_18], %22 {strides = array<i32>} : memref<1x16x1xf32, #tpu.memory_space<vmem>>, vector<1x16x1xf32>,
    %23 = arith.mulf %15, %15 : vector<16x8xf32>
    %cst_19 = arith.constant dense<0.000000e+00> : vector<16xf32>
    %24 = vector.multi_reduction <add>, %23, %cst_19 [1] : vector<16x8xf32> to vector<16xf32>
    %25 = vector.shape_cast %24 : vector<16xf32> to vector<16x1xf32>
    %c0_20 = arith.constant 0 : index
    %c0_21 = arith.constant 0 : index
    %c0_22 = arith.constant 0 : index
    %26 = vector.load %arg5[%c0_20, %c0_21, %c0_22] : memref<1x16x1xf32, #tpu.memory_space<vmem>>, vector<1x16x1xf32>
    %27 = vector.shape_cast %26 : vector<1x16x1xf32> to vector<16x1xf32>
    %28 = vector.shape_cast %25 : vector<16x1xf32> to vector<1x16x1xf32>
    tpu.vector_store %arg5[%c0_20, %c0_21, %c0_22], %28 {strides = array<i32>} : memref<1x16x1xf32, #tpu.memory_space<vmem>>, vector<1x16x1xf32>,
    return
  }
  func.func @transform_0(%arg0: i32) -> (i32, i32, i32) {
    %c0_i32 = arith.constant 0 : i32
    %c0_i32_0 = arith.constant 0 : i32
    %c0_i32_1 = arith.constant 0 : i32
    return %c0_i32, %c0_i32_0, %arg0 : i32, i32, i32
  }
  func.func @transform_1(%arg0: i32) -> (i32, i32) {
    %c0_i32 = arith.constant 0 : i32
    %c0_i32_0 = arith.constant 0 : i32
    %c0_i32_1 = arith.constant 0 : i32
    return %c0_i32, %c0_i32_0 : i32, i32
  }
  func.func @transform_2(%arg0: i32) -> (i32, i32) {
    %c0_i32 = arith.constant 0 : i32
    %c0_i32_0 = arith.constant 0 : i32
    return %c0_i32, %arg0 : i32, i32
  }
  func.func @transform_3(%arg0: i32) -> (i32, i32, i32) {
    %c0_i32 = arith.constant 0 : i32
    %c0_i32_0 = arith.constant 0 : i32
    %c0_i32_1 = arith.constant 0 : i32
    return %arg0, %c0_i32, %c0_i32_0 : i32, i32, i32
  }
  func.func @transform_4(%arg0: i32) -> (i32, i32, i32) {
    %c0_i32 = arith.constant 0 : i32
    %c0_i32_0 = arith.constant 0 : i32
    %c0_i32_1 = arith.constant 0 : i32
    return %arg0, %c0_i32, %c0_i32_0 : i32, i32, i32
  }
}

module attributes {stable_mosaic.version = 11 : i64} {
  func.func @_conv_kernel(%arg0: i32, %arg1: memref<4x144x2xbf16, #tpu.memory_space<vmem>>, %arg2: memref<32x144xbf16, #tpu.memory_space<vmem>>, %arg3: memref<32x2xbf16, #tpu.memory_space<vmem>>, %arg4: memref<1x32x1xf32, #tpu.memory_space<vmem>>, %arg5: memref<1x32x1xf32, #tpu.memory_space<vmem>>) attributes {dimension_semantics = [#tpu.dimension_semantics<parallel>], iteration_bounds = array<i64: 1>, scalar_prefetch = 0 : i64, scratch_operands = 0 : i64, tpu.core_type = #tpu.core_type<tc>, window_params = [{transform_indices = @transform_0, window_bounds = array<i64: 4, 144, 2>}, {pipeline_mode = #tpu.pipeline_mode<synchronous>, transform_indices = @transform_1, window_bounds = array<i64: 32, 144>}, {transform_indices = @transform_2, window_bounds = array<i64: 32, 2>}, {transform_indices = @transform_3, window_bounds = array<i64: 1, 32, 1>}, {transform_indices = @transform_4, window_bounds = array<i64: 1, 32, 1>}]} {
    %c0 = arith.constant 0 : index
    %c0_0 = arith.constant 0 : index
    %0 = vector.load %arg2[%c0, %c0_0] : memref<32x144xbf16, #tpu.memory_space<vmem>>, vector<32x144xbf16>
    %c0_1 = arith.constant 0 : index
    %c0_2 = arith.constant 0 : index
    %c0_3 = arith.constant 0 : index
    %1 = vector.load %arg1[%c0_1, %c0_2, %c0_3] : memref<4x144x2xbf16, #tpu.memory_space<vmem>>, vector<1x144x2xbf16>
    %2 = vector.shape_cast %1 : vector<1x144x2xbf16> to vector<144x2xbf16>
    %cst = arith.constant dense<0.000000e+00> : vector<32x2xf32>
    %3 = tpu.matmul %0, %2, %cst {dimension_numbers = #tpu.dot_dimension_numbers<[1], [0], [0], [1], [0, 0, 1, 1], [], []>} : vector<32x144xbf16>, vector<144x2xbf16>, vector<32x2xf32> -> vector<32x2xf32>
    %c1 = arith.constant 1 : index
    %c0_4 = arith.constant 0 : index
    %c0_5 = arith.constant 0 : index
    %4 = vector.load %arg1[%c1, %c0_4, %c0_5] : memref<4x144x2xbf16, #tpu.memory_space<vmem>>, vector<1x144x2xbf16>
    %5 = vector.shape_cast %4 : vector<1x144x2xbf16> to vector<144x2xbf16>
    %cst_6 = arith.constant dense<0.000000e+00> : vector<32x2xf32>
    %6 = tpu.matmul %0, %5, %cst_6 {dimension_numbers = #tpu.dot_dimension_numbers<[1], [0], [0], [1], [0, 0, 1, 1], [], []>} : vector<32x144xbf16>, vector<144x2xbf16>, vector<32x2xf32> -> vector<32x2xf32>
    %7 = arith.maximumf %3, %6 : vector<32x2xf32>
    %c2 = arith.constant 2 : index
    %c0_7 = arith.constant 0 : index
    %c0_8 = arith.constant 0 : index
    %8 = vector.load %arg1[%c2, %c0_7, %c0_8] : memref<4x144x2xbf16, #tpu.memory_space<vmem>>, vector<1x144x2xbf16>
    %9 = vector.shape_cast %8 : vector<1x144x2xbf16> to vector<144x2xbf16>
    %cst_9 = arith.constant dense<0.000000e+00> : vector<32x2xf32>
    %10 = tpu.matmul %0, %9, %cst_9 {dimension_numbers = #tpu.dot_dimension_numbers<[1], [0], [0], [1], [0, 0, 1, 1], [], []>} : vector<32x144xbf16>, vector<144x2xbf16>, vector<32x2xf32> -> vector<32x2xf32>
    %11 = arith.maximumf %7, %10 : vector<32x2xf32>
    %c3 = arith.constant 3 : index
    %c0_10 = arith.constant 0 : index
    %c0_11 = arith.constant 0 : index
    %12 = vector.load %arg1[%c3, %c0_10, %c0_11] : memref<4x144x2xbf16, #tpu.memory_space<vmem>>, vector<1x144x2xbf16>
    %13 = vector.shape_cast %12 : vector<1x144x2xbf16> to vector<144x2xbf16>
    %cst_12 = arith.constant dense<0.000000e+00> : vector<32x2xf32>
    %14 = tpu.matmul %0, %13, %cst_12 {dimension_numbers = #tpu.dot_dimension_numbers<[1], [0], [0], [1], [0, 0, 1, 1], [], []>} : vector<32x144xbf16>, vector<144x2xbf16>, vector<32x2xf32> -> vector<32x2xf32>
    %15 = arith.maximumf %11, %14 : vector<32x2xf32>
    %16 = arith.truncf %15 : vector<32x2xf32> to vector<32x2xbf16>
    %c0_13 = arith.constant 0 : index
    %c0_14 = arith.constant 0 : index
    %17 = vector.load %arg3[%c0_13, %c0_14] : memref<32x2xbf16, #tpu.memory_space<vmem>>, vector<32x2xbf16>
    tpu.vector_store %arg3[%c0_13, %c0_14], %16 {strides = array<i32>} : memref<32x2xbf16, #tpu.memory_space<vmem>>, vector<32x2xbf16>,
    %cst_15 = arith.constant dense<0.000000e+00> : vector<32xf32>
    %18 = vector.multi_reduction <add>, %15, %cst_15 [1] : vector<32x2xf32> to vector<32xf32>
    %19 = vector.shape_cast %18 : vector<32xf32> to vector<32x1xf32>
    %c0_16 = arith.constant 0 : index
    %c0_17 = arith.constant 0 : index
    %c0_18 = arith.constant 0 : index
    %20 = vector.load %arg4[%c0_16, %c0_17, %c0_18] : memref<1x32x1xf32, #tpu.memory_space<vmem>>, vector<1x32x1xf32>
    %21 = vector.shape_cast %20 : vector<1x32x1xf32> to vector<32x1xf32>
    %22 = vector.shape_cast %19 : vector<32x1xf32> to vector<1x32x1xf32>
    tpu.vector_store %arg4[%c0_16, %c0_17, %c0_18], %22 {strides = array<i32>} : memref<1x32x1xf32, #tpu.memory_space<vmem>>, vector<1x32x1xf32>,
    %23 = arith.mulf %15, %15 : vector<32x2xf32>
    %cst_19 = arith.constant dense<0.000000e+00> : vector<32xf32>
    %24 = vector.multi_reduction <add>, %23, %cst_19 [1] : vector<32x2xf32> to vector<32xf32>
    %25 = vector.shape_cast %24 : vector<32xf32> to vector<32x1xf32>
    %c0_20 = arith.constant 0 : index
    %c0_21 = arith.constant 0 : index
    %c0_22 = arith.constant 0 : index
    %26 = vector.load %arg5[%c0_20, %c0_21, %c0_22] : memref<1x32x1xf32, #tpu.memory_space<vmem>>, vector<1x32x1xf32>
    %27 = vector.shape_cast %26 : vector<1x32x1xf32> to vector<32x1xf32>
    %28 = vector.shape_cast %25 : vector<32x1xf32> to vector<1x32x1xf32>
    tpu.vector_store %arg5[%c0_20, %c0_21, %c0_22], %28 {strides = array<i32>} : memref<1x32x1xf32, #tpu.memory_space<vmem>>, vector<1x32x1xf32>,
    return
  }
  func.func @transform_0(%arg0: i32) -> (i32, i32, i32) {
    %c0_i32 = arith.constant 0 : i32
    %c0_i32_0 = arith.constant 0 : i32
    %c0_i32_1 = arith.constant 0 : i32
    return %c0_i32, %c0_i32_0, %arg0 : i32, i32, i32
  }
  func.func @transform_1(%arg0: i32) -> (i32, i32) {
    %c0_i32 = arith.constant 0 : i32
    %c0_i32_0 = arith.constant 0 : i32
    %c0_i32_1 = arith.constant 0 : i32
    return %c0_i32, %c0_i32_0 : i32, i32
  }
  func.func @transform_2(%arg0: i32) -> (i32, i32) {
    %c0_i32 = arith.constant 0 : i32
    %c0_i32_0 = arith.constant 0 : i32
    return %c0_i32, %arg0 : i32, i32
  }
  func.func @transform_3(%arg0: i32) -> (i32, i32, i32) {
    %c0_i32 = arith.constant 0 : i32
    %c0_i32_0 = arith.constant 0 : i32
    %c0_i32_1 = arith.constant 0 : i32
    return %arg0, %c0_i32, %c0_i32_0 : i32, i32, i32
  }
  func.func @transform_4(%arg0: i32) -> (i32, i32, i32) {
    %c0_i32 = arith.constant 0 : i32
    %c0_i32_0 = arith.constant 0 : i32
    %c0_i32_1 = arith.constant 0 : i32
    return %arg0, %c0_i32, %c0_i32_0 : i32, i32, i32
  }
}

module attributes {stable_mosaic.version = 11 : i64} {
  func.func @_conv_kernel(%arg0: i32, %arg1: memref<1x288x2xbf16, #tpu.memory_space<vmem>>, %arg2: memref<16x288xbf16, #tpu.memory_space<vmem>>, %arg3: memref<16x2xbf16, #tpu.memory_space<vmem>>) attributes {dimension_semantics = [#tpu.dimension_semantics<parallel>], iteration_bounds = array<i64: 1>, scalar_prefetch = 0 : i64, scratch_operands = 0 : i64, tpu.core_type = #tpu.core_type<tc>, window_params = [{transform_indices = @transform_0, window_bounds = array<i64: 1, 288, 2>}, {pipeline_mode = #tpu.pipeline_mode<synchronous>, transform_indices = @transform_1, window_bounds = array<i64: 16, 288>}, {transform_indices = @transform_2, window_bounds = array<i64: 16, 2>}]} {
    %c0 = arith.constant 0 : index
    %c0_0 = arith.constant 0 : index
    %0 = vector.load %arg2[%c0, %c0_0] : memref<16x288xbf16, #tpu.memory_space<vmem>>, vector<16x288xbf16>
    %c0_1 = arith.constant 0 : index
    %c0_2 = arith.constant 0 : index
    %c0_3 = arith.constant 0 : index
    %1 = vector.load %arg1[%c0_1, %c0_2, %c0_3] : memref<1x288x2xbf16, #tpu.memory_space<vmem>>, vector<1x288x2xbf16>
    %2 = vector.shape_cast %1 : vector<1x288x2xbf16> to vector<288x2xbf16>
    %cst = arith.constant dense<0.000000e+00> : vector<16x2xf32>
    %3 = tpu.matmul %0, %2, %cst {dimension_numbers = #tpu.dot_dimension_numbers<[1], [0], [0], [1], [0, 0, 1, 1], [], []>} : vector<16x288xbf16>, vector<288x2xbf16>, vector<16x2xf32> -> vector<16x2xf32>
    %4 = arith.truncf %3 : vector<16x2xf32> to vector<16x2xbf16>
    %c0_4 = arith.constant 0 : index
    %c0_5 = arith.constant 0 : index
    %5 = vector.load %arg3[%c0_4, %c0_5] : memref<16x2xbf16, #tpu.memory_space<vmem>>, vector<16x2xbf16>
    tpu.vector_store %arg3[%c0_4, %c0_5], %4 {strides = array<i32>} : memref<16x2xbf16, #tpu.memory_space<vmem>>, vector<16x2xbf16>,
    return
  }
  func.func @transform_0(%arg0: i32) -> (i32, i32, i32) {
    %c0_i32 = arith.constant 0 : i32
    %c0_i32_0 = arith.constant 0 : i32
    %c0_i32_1 = arith.constant 0 : i32
    return %c0_i32, %c0_i32_0, %arg0 : i32, i32, i32
  }
  func.func @transform_1(%arg0: i32) -> (i32, i32) {
    %c0_i32 = arith.constant 0 : i32
    %c0_i32_0 = arith.constant 0 : i32
    %c0_i32_1 = arith.constant 0 : i32
    return %c0_i32, %c0_i32_0 : i32, i32
  }
  func.func @transform_2(%arg0: i32) -> (i32, i32) {
    %c0_i32 = arith.constant 0 : i32
    %c0_i32_0 = arith.constant 0 : i32
    return %c0_i32, %arg0 : i32, i32
  }
}

module attributes {stable_mosaic.version = 11 : i64} {
  func.func @_upsample_kernel(%arg0: i32, %arg1: memref<32x8xbf16, #tpu.memory_space<vmem>>, %arg2: memref<8x4xbf16, #tpu.memory_space<vmem>>, %arg3: memref<32x4xbf16, #tpu.memory_space<vmem>>, %arg4: memref<1x32x1xf32, #tpu.memory_space<vmem>>, %arg5: memref<1x32x1xf32, #tpu.memory_space<vmem>>) attributes {dimension_semantics = [#tpu.dimension_semantics<parallel>], iteration_bounds = array<i64: 1>, scalar_prefetch = 0 : i64, scratch_operands = 0 : i64, tpu.core_type = #tpu.core_type<tc>, window_params = [{pipeline_mode = #tpu.pipeline_mode<synchronous>, transform_indices = @transform_0, window_bounds = array<i64: 32, 8>}, {transform_indices = @transform_1, window_bounds = array<i64: 8, 4>}, {transform_indices = @transform_2, window_bounds = array<i64: 32, 4>}, {transform_indices = @transform_3, window_bounds = array<i64: 1, 32, 1>}, {transform_indices = @transform_4, window_bounds = array<i64: 1, 32, 1>}]} {
    %c0 = arith.constant 0 : index
    %c0_0 = arith.constant 0 : index
    %0 = vector.load %arg1[%c0, %c0_0] : memref<32x8xbf16, #tpu.memory_space<vmem>>, vector<32x8xbf16>
    %c0_1 = arith.constant 0 : index
    %c0_2 = arith.constant 0 : index
    %1 = vector.load %arg2[%c0_1, %c0_2] : memref<8x4xbf16, #tpu.memory_space<vmem>>, vector<8x4xbf16>
    %cst = arith.constant dense<0.000000e+00> : vector<32x4xf32>
    %2 = tpu.matmul %0, %1, %cst {dimension_numbers = #tpu.dot_dimension_numbers<[1], [0], [0], [1], [0, 0, 1, 1], [], []>} : vector<32x8xbf16>, vector<8x4xbf16>, vector<32x4xf32> -> vector<32x4xf32>
    %cst_3 = arith.constant dense<0.000000e+00> : vector<32xf32>
    %3 = vector.multi_reduction <add>, %2, %cst_3 [1] : vector<32x4xf32> to vector<32xf32>
    %4 = vector.shape_cast %3 : vector<32xf32> to vector<32x1xf32>
    %c0_4 = arith.constant 0 : index
    %c0_5 = arith.constant 0 : index
    %c0_6 = arith.constant 0 : index
    %5 = vector.load %arg4[%c0_4, %c0_5, %c0_6] : memref<1x32x1xf32, #tpu.memory_space<vmem>>, vector<1x32x1xf32>
    %6 = vector.shape_cast %5 : vector<1x32x1xf32> to vector<32x1xf32>
    %7 = vector.shape_cast %4 : vector<32x1xf32> to vector<1x32x1xf32>
    tpu.vector_store %arg4[%c0_4, %c0_5, %c0_6], %7 {strides = array<i32>} : memref<1x32x1xf32, #tpu.memory_space<vmem>>, vector<1x32x1xf32>,
    %8 = arith.mulf %2, %2 : vector<32x4xf32>
    %cst_7 = arith.constant dense<0.000000e+00> : vector<32xf32>
    %9 = vector.multi_reduction <add>, %8, %cst_7 [1] : vector<32x4xf32> to vector<32xf32>
    %10 = vector.shape_cast %9 : vector<32xf32> to vector<32x1xf32>
    %c0_8 = arith.constant 0 : index
    %c0_9 = arith.constant 0 : index
    %c0_10 = arith.constant 0 : index
    %11 = vector.load %arg5[%c0_8, %c0_9, %c0_10] : memref<1x32x1xf32, #tpu.memory_space<vmem>>, vector<1x32x1xf32>
    %12 = vector.shape_cast %11 : vector<1x32x1xf32> to vector<32x1xf32>
    %13 = vector.shape_cast %10 : vector<32x1xf32> to vector<1x32x1xf32>
    tpu.vector_store %arg5[%c0_8, %c0_9, %c0_10], %13 {strides = array<i32>} : memref<1x32x1xf32, #tpu.memory_space<vmem>>, vector<1x32x1xf32>,
    %14 = arith.truncf %2 : vector<32x4xf32> to vector<32x4xbf16>
    %c0_11 = arith.constant 0 : index
    %c0_12 = arith.constant 0 : index
    %15 = vector.load %arg3[%c0_11, %c0_12] : memref<32x4xbf16, #tpu.memory_space<vmem>>, vector<32x4xbf16>
    tpu.vector_store %arg3[%c0_11, %c0_12], %14 {strides = array<i32>} : memref<32x4xbf16, #tpu.memory_space<vmem>>, vector<32x4xbf16>,
    return
  }
  func.func @transform_0(%arg0: i32) -> (i32, i32) {
    %c0_i32 = arith.constant 0 : i32
    %c0_i32_0 = arith.constant 0 : i32
    %c0_i32_1 = arith.constant 0 : i32
    return %c0_i32, %c0_i32_0 : i32, i32
  }
  func.func @transform_1(%arg0: i32) -> (i32, i32) {
    %c0_i32 = arith.constant 0 : i32
    %c0_i32_0 = arith.constant 0 : i32
    return %c0_i32, %arg0 : i32, i32
  }
  func.func @transform_2(%arg0: i32) -> (i32, i32) {
    %c0_i32 = arith.constant 0 : i32
    %c0_i32_0 = arith.constant 0 : i32
    return %c0_i32, %arg0 : i32, i32
  }
  func.func @transform_3(%arg0: i32) -> (i32, i32, i32) {
    %c0_i32 = arith.constant 0 : i32
    %c0_i32_0 = arith.constant 0 : i32
    %c0_i32_1 = arith.constant 0 : i32
    return %arg0, %c0_i32, %c0_i32_0 : i32, i32, i32
  }
  func.func @transform_4(%arg0: i32) -> (i32, i32, i32) {
    %c0_i32 = arith.constant 0 : i32
    %c0_i32_0 = arith.constant 0 : i32
    %c0_i32_1 = arith.constant 0 : i32
    return %arg0, %c0_i32, %c0_i32_0 : i32, i32, i32
  }
}

module attributes {stable_mosaic.version = 11 : i64} {
  func.func @_conv_kernel(%arg0: i32, %arg1: memref<1x288x8xbf16, #tpu.memory_space<vmem>>, %arg2: memref<8x288xbf16, #tpu.memory_space<vmem>>, %arg3: memref<8x8xbf16, #tpu.memory_space<vmem>>) attributes {dimension_semantics = [#tpu.dimension_semantics<parallel>], iteration_bounds = array<i64: 1>, scalar_prefetch = 0 : i64, scratch_operands = 0 : i64, tpu.core_type = #tpu.core_type<tc>, window_params = [{transform_indices = @transform_0, window_bounds = array<i64: 1, 288, 8>}, {pipeline_mode = #tpu.pipeline_mode<synchronous>, transform_indices = @transform_1, window_bounds = array<i64: 8, 288>}, {transform_indices = @transform_2, window_bounds = array<i64: 8, 8>}]} {
    %c0 = arith.constant 0 : index
    %c0_0 = arith.constant 0 : index
    %0 = vector.load %arg2[%c0, %c0_0] : memref<8x288xbf16, #tpu.memory_space<vmem>>, vector<8x288xbf16>
    %c0_1 = arith.constant 0 : index
    %c0_2 = arith.constant 0 : index
    %c0_3 = arith.constant 0 : index
    %1 = vector.load %arg1[%c0_1, %c0_2, %c0_3] : memref<1x288x8xbf16, #tpu.memory_space<vmem>>, vector<1x288x8xbf16>
    %2 = vector.shape_cast %1 : vector<1x288x8xbf16> to vector<288x8xbf16>
    %cst = arith.constant dense<0.000000e+00> : vector<8x8xf32>
    %3 = tpu.matmul %0, %2, %cst {dimension_numbers = #tpu.dot_dimension_numbers<[1], [0], [0], [1], [0, 0, 1, 1], [], []>} : vector<8x288xbf16>, vector<288x8xbf16>, vector<8x8xf32> -> vector<8x8xf32>
    %4 = arith.truncf %3 : vector<8x8xf32> to vector<8x8xbf16>
    %c0_4 = arith.constant 0 : index
    %c0_5 = arith.constant 0 : index
    %5 = vector.load %arg3[%c0_4, %c0_5] : memref<8x8xbf16, #tpu.memory_space<vmem>>, vector<8x8xbf16>
    tpu.vector_store %arg3[%c0_4, %c0_5], %4 {strides = array<i32>} : memref<8x8xbf16, #tpu.memory_space<vmem>>, vector<8x8xbf16>,
    return
  }
  func.func @transform_0(%arg0: i32) -> (i32, i32, i32) {
    %c0_i32 = arith.constant 0 : i32
    %c0_i32_0 = arith.constant 0 : i32
    %c0_i32_1 = arith.constant 0 : i32
    return %c0_i32, %c0_i32_0, %arg0 : i32, i32, i32
  }
  func.func @transform_1(%arg0: i32) -> (i32, i32) {
    %c0_i32 = arith.constant 0 : i32
    %c0_i32_0 = arith.constant 0 : i32
    %c0_i32_1 = arith.constant 0 : i32
    return %c0_i32, %c0_i32_0 : i32, i32
  }
  func.func @transform_2(%arg0: i32) -> (i32, i32) {
    %c0_i32 = arith.constant 0 : i32
    %c0_i32_0 = arith.constant 0 : i32
    return %c0_i32, %arg0 : i32, i32
  }
}

module attributes {stable_mosaic.version = 11 : i64} {
  func.func @_upsample_kernel(%arg0: i32, %arg1: memref<16x8xbf16, #tpu.memory_space<vmem>>, %arg2: memref<8x16xbf16, #tpu.memory_space<vmem>>, %arg3: memref<16x16xbf16, #tpu.memory_space<vmem>>, %arg4: memref<1x16x1xf32, #tpu.memory_space<vmem>>, %arg5: memref<1x16x1xf32, #tpu.memory_space<vmem>>) attributes {dimension_semantics = [#tpu.dimension_semantics<parallel>], iteration_bounds = array<i64: 1>, scalar_prefetch = 0 : i64, scratch_operands = 0 : i64, tpu.core_type = #tpu.core_type<tc>, window_params = [{pipeline_mode = #tpu.pipeline_mode<synchronous>, transform_indices = @transform_0, window_bounds = array<i64: 16, 8>}, {transform_indices = @transform_1, window_bounds = array<i64: 8, 16>}, {transform_indices = @transform_2, window_bounds = array<i64: 16, 16>}, {transform_indices = @transform_3, window_bounds = array<i64: 1, 16, 1>}, {transform_indices = @transform_4, window_bounds = array<i64: 1, 16, 1>}]} {
    %c0 = arith.constant 0 : index
    %c0_0 = arith.constant 0 : index
    %0 = vector.load %arg1[%c0, %c0_0] : memref<16x8xbf16, #tpu.memory_space<vmem>>, vector<16x8xbf16>
    %c0_1 = arith.constant 0 : index
    %c0_2 = arith.constant 0 : index
    %1 = vector.load %arg2[%c0_1, %c0_2] : memref<8x16xbf16, #tpu.memory_space<vmem>>, vector<8x16xbf16>
    %cst = arith.constant dense<0.000000e+00> : vector<16x16xf32>
    %2 = tpu.matmul %0, %1, %cst {dimension_numbers = #tpu.dot_dimension_numbers<[1], [0], [0], [1], [0, 0, 1, 1], [], []>} : vector<16x8xbf16>, vector<8x16xbf16>, vector<16x16xf32> -> vector<16x16xf32>
    %cst_3 = arith.constant dense<0.000000e+00> : vector<16xf32>
    %3 = vector.multi_reduction <add>, %2, %cst_3 [1] : vector<16x16xf32> to vector<16xf32>
    %4 = vector.shape_cast %3 : vector<16xf32> to vector<16x1xf32>
    %c0_4 = arith.constant 0 : index
    %c0_5 = arith.constant 0 : index
    %c0_6 = arith.constant 0 : index
    %5 = vector.load %arg4[%c0_4, %c0_5, %c0_6] : memref<1x16x1xf32, #tpu.memory_space<vmem>>, vector<1x16x1xf32>
    %6 = vector.shape_cast %5 : vector<1x16x1xf32> to vector<16x1xf32>
    %7 = vector.shape_cast %4 : vector<16x1xf32> to vector<1x16x1xf32>
    tpu.vector_store %arg4[%c0_4, %c0_5, %c0_6], %7 {strides = array<i32>} : memref<1x16x1xf32, #tpu.memory_space<vmem>>, vector<1x16x1xf32>,
    %8 = arith.mulf %2, %2 : vector<16x16xf32>
    %cst_7 = arith.constant dense<0.000000e+00> : vector<16xf32>
    %9 = vector.multi_reduction <add>, %8, %cst_7 [1] : vector<16x16xf32> to vector<16xf32>
    %10 = vector.shape_cast %9 : vector<16xf32> to vector<16x1xf32>
    %c0_8 = arith.constant 0 : index
    %c0_9 = arith.constant 0 : index
    %c0_10 = arith.constant 0 : index
    %11 = vector.load %arg5[%c0_8, %c0_9, %c0_10] : memref<1x16x1xf32, #tpu.memory_space<vmem>>, vector<1x16x1xf32>
    %12 = vector.shape_cast %11 : vector<1x16x1xf32> to vector<16x1xf32>
    %13 = vector.shape_cast %10 : vector<16x1xf32> to vector<1x16x1xf32>
    tpu.vector_store %arg5[%c0_8, %c0_9, %c0_10], %13 {strides = array<i32>} : memref<1x16x1xf32, #tpu.memory_space<vmem>>, vector<1x16x1xf32>,
    %14 = arith.truncf %2 : vector<16x16xf32> to vector<16x16xbf16>
    %c0_11 = arith.constant 0 : index
    %c0_12 = arith.constant 0 : index
    %15 = vector.load %arg3[%c0_11, %c0_12] : memref<16x16xbf16, #tpu.memory_space<vmem>>, vector<16x16xbf16>
    tpu.vector_store %arg3[%c0_11, %c0_12], %14 {strides = array<i32>} : memref<16x16xbf16, #tpu.memory_space<vmem>>, vector<16x16xbf16>,
    return
  }
  func.func @transform_0(%arg0: i32) -> (i32, i32) {
    %c0_i32 = arith.constant 0 : i32
    %c0_i32_0 = arith.constant 0 : i32
    %c0_i32_1 = arith.constant 0 : i32
    return %c0_i32, %c0_i32_0 : i32, i32
  }
  func.func @transform_1(%arg0: i32) -> (i32, i32) {
    %c0_i32 = arith.constant 0 : i32
    %c0_i32_0 = arith.constant 0 : i32
    return %c0_i32, %arg0 : i32, i32
  }
  func.func @transform_2(%arg0: i32) -> (i32, i32) {
    %c0_i32 = arith.constant 0 : i32
    %c0_i32_0 = arith.constant 0 : i32
    return %c0_i32, %arg0 : i32, i32
  }
  func.func @transform_3(%arg0: i32) -> (i32, i32, i32) {
    %c0_i32 = arith.constant 0 : i32
    %c0_i32_0 = arith.constant 0 : i32
    %c0_i32_1 = arith.constant 0 : i32
    return %arg0, %c0_i32, %c0_i32_0 : i32, i32, i32
  }
  func.func @transform_4(%arg0: i32) -> (i32, i32, i32) {
    %c0_i32 = arith.constant 0 : i32
    %c0_i32_0 = arith.constant 0 : i32
    %c0_i32_1 = arith.constant 0 : i32
    return %arg0, %c0_i32, %c0_i32_0 : i32, i32, i32
  }
}

module attributes {stable_mosaic.version = 11 : i64} {
  func.func @_upsample_kernel(%arg0: i32, %arg1: memref<8x16xbf16, #tpu.memory_space<vmem>>, %arg2: memref<16x64xbf16, #tpu.memory_space<vmem>>, %arg3: memref<8x64xbf16, #tpu.memory_space<vmem>>, %arg4: memref<1x8x1xf32, #tpu.memory_space<vmem>>, %arg5: memref<1x8x1xf32, #tpu.memory_space<vmem>>) attributes {dimension_semantics = [#tpu.dimension_semantics<parallel>], iteration_bounds = array<i64: 1>, scalar_prefetch = 0 : i64, scratch_operands = 0 : i64, tpu.core_type = #tpu.core_type<tc>, window_params = [{pipeline_mode = #tpu.pipeline_mode<synchronous>, transform_indices = @transform_0, window_bounds = array<i64: 8, 16>}, {transform_indices = @transform_1, window_bounds = array<i64: 16, 64>}, {transform_indices = @transform_2, window_bounds = array<i64: 8, 64>}, {transform_indices = @transform_3, window_bounds = array<i64: 1, 8, 1>}, {transform_indices = @transform_4, window_bounds = array<i64: 1, 8, 1>}]} {
    %c0 = arith.constant 0 : index
    %c0_0 = arith.constant 0 : index
    %0 = vector.load %arg1[%c0, %c0_0] : memref<8x16xbf16, #tpu.memory_space<vmem>>, vector<8x16xbf16>
    %c0_1 = arith.constant 0 : index
    %c0_2 = arith.constant 0 : index
    %1 = vector.load %arg2[%c0_1, %c0_2] : memref<16x64xbf16, #tpu.memory_space<vmem>>, vector<16x64xbf16>
    %cst = arith.constant dense<0.000000e+00> : vector<8x64xf32>
    %2 = tpu.matmul %0, %1, %cst {dimension_numbers = #tpu.dot_dimension_numbers<[1], [0], [0], [1], [0, 0, 1, 1], [], []>} : vector<8x16xbf16>, vector<16x64xbf16>, vector<8x64xf32> -> vector<8x64xf32>
    %cst_3 = arith.constant dense<0.000000e+00> : vector<8xf32>
    %3 = vector.multi_reduction <add>, %2, %cst_3 [1] : vector<8x64xf32> to vector<8xf32>
    %4 = vector.shape_cast %3 : vector<8xf32> to vector<8x1xf32>
    %c0_4 = arith.constant 0 : index
    %c0_5 = arith.constant 0 : index
    %c0_6 = arith.constant 0 : index
    %5 = vector.load %arg4[%c0_4, %c0_5, %c0_6] : memref<1x8x1xf32, #tpu.memory_space<vmem>>, vector<1x8x1xf32>
    %6 = vector.shape_cast %5 : vector<1x8x1xf32> to vector<8x1xf32>
    %7 = vector.shape_cast %4 : vector<8x1xf32> to vector<1x8x1xf32>
    tpu.vector_store %arg4[%c0_4, %c0_5, %c0_6], %7 {strides = array<i32>} : memref<1x8x1xf32, #tpu.memory_space<vmem>>, vector<1x8x1xf32>,
    %8 = arith.mulf %2, %2 : vector<8x64xf32>
    %cst_7 = arith.constant dense<0.000000e+00> : vector<8xf32>
    %9 = vector.multi_reduction <add>, %8, %cst_7 [1] : vector<8x64xf32> to vector<8xf32>
    %10 = vector.shape_cast %9 : vector<8xf32> to vector<8x1xf32>
    %c0_8 = arith.constant 0 : index
    %c0_9 = arith.constant 0 : index
    %c0_10 = arith.constant 0 : index
    %11 = vector.load %arg5[%c0_8, %c0_9, %c0_10] : memref<1x8x1xf32, #tpu.memory_space<vmem>>, vector<1x8x1xf32>
    %12 = vector.shape_cast %11 : vector<1x8x1xf32> to vector<8x1xf32>
    %13 = vector.shape_cast %10 : vector<8x1xf32> to vector<1x8x1xf32>
    tpu.vector_store %arg5[%c0_8, %c0_9, %c0_10], %13 {strides = array<i32>} : memref<1x8x1xf32, #tpu.memory_space<vmem>>, vector<1x8x1xf32>,
    %14 = arith.truncf %2 : vector<8x64xf32> to vector<8x64xbf16>
    %c0_11 = arith.constant 0 : index
    %c0_12 = arith.constant 0 : index
    %15 = vector.load %arg3[%c0_11, %c0_12] : memref<8x64xbf16, #tpu.memory_space<vmem>>, vector<8x64xbf16>
    tpu.vector_store %arg3[%c0_11, %c0_12], %14 {strides = array<i32>} : memref<8x64xbf16, #tpu.memory_space<vmem>>, vector<8x64xbf16>,
    return
  }
  func.func @transform_0(%arg0: i32) -> (i32, i32) {
    %c0_i32 = arith.constant 0 : i32
    %c0_i32_0 = arith.constant 0 : i32
    %c0_i32_1 = arith.constant 0 : i32
    return %c0_i32, %c0_i32_0 : i32, i32
  }
  func.func @transform_1(%arg0: i32) -> (i32, i32) {
    %c0_i32 = arith.constant 0 : i32
    %c0_i32_0 = arith.constant 0 : i32
    return %c0_i32, %arg0 : i32, i32
  }
  func.func @transform_2(%arg0: i32) -> (i32, i32) {
    %c0_i32 = arith.constant 0 : i32
    %c0_i32_0 = arith.constant 0 : i32
    return %c0_i32, %arg0 : i32, i32
  }
  func.func @transform_3(%arg0: i32) -> (i32, i32, i32) {
    %c0_i32 = arith.constant 0 : i32
    %c0_i32_0 = arith.constant 0 : i32
    %c0_i32_1 = arith.constant 0 : i32
    return %arg0, %c0_i32, %c0_i32_0 : i32, i32, i32
  }
  func.func @transform_4(%arg0: i32) -> (i32, i32, i32) {
    %c0_i32 = arith.constant 0 : i32
    %c0_i32_0 = arith.constant 0 : i32
    %c0_i32_1 = arith.constant 0 : i32
    return %arg0, %c0_i32, %c0_i32_0 : i32, i32, i32
  }
}

module attributes {stable_mosaic.version = 11 : i64} {
  func.func @_conv_kernel(%arg0: i32, %arg1: memref<1x144x32xbf16, #tpu.memory_space<vmem>>, %arg2: memref<4x144xbf16, #tpu.memory_space<vmem>>, %arg3: memref<4x32xbf16, #tpu.memory_space<vmem>>) attributes {dimension_semantics = [#tpu.dimension_semantics<parallel>], iteration_bounds = array<i64: 1>, scalar_prefetch = 0 : i64, scratch_operands = 0 : i64, tpu.core_type = #tpu.core_type<tc>, window_params = [{transform_indices = @transform_0, window_bounds = array<i64: 1, 144, 32>}, {pipeline_mode = #tpu.pipeline_mode<synchronous>, transform_indices = @transform_1, window_bounds = array<i64: 4, 144>}, {transform_indices = @transform_2, window_bounds = array<i64: 4, 32>}]} {
    %c0 = arith.constant 0 : index
    %c0_0 = arith.constant 0 : index
    %0 = vector.load %arg2[%c0, %c0_0] : memref<4x144xbf16, #tpu.memory_space<vmem>>, vector<4x144xbf16>
    %c0_1 = arith.constant 0 : index
    %c0_2 = arith.constant 0 : index
    %c0_3 = arith.constant 0 : index
    %1 = vector.load %arg1[%c0_1, %c0_2, %c0_3] : memref<1x144x32xbf16, #tpu.memory_space<vmem>>, vector<1x144x32xbf16>
    %2 = vector.shape_cast %1 : vector<1x144x32xbf16> to vector<144x32xbf16>
    %cst = arith.constant dense<0.000000e+00> : vector<4x32xf32>
    %3 = tpu.matmul %0, %2, %cst {dimension_numbers = #tpu.dot_dimension_numbers<[1], [0], [0], [1], [0, 0, 1, 1], [], []>} : vector<4x144xbf16>, vector<144x32xbf16>, vector<4x32xf32> -> vector<4x32xf32>
    %4 = arith.truncf %3 : vector<4x32xf32> to vector<4x32xbf16>
    %c0_4 = arith.constant 0 : index
    %c0_5 = arith.constant 0 : index
    %5 = vector.load %arg3[%c0_4, %c0_5] : memref<4x32xbf16, #tpu.memory_space<vmem>>, vector<4x32xbf16>
    tpu.vector_store %arg3[%c0_4, %c0_5], %4 {strides = array<i32>} : memref<4x32xbf16, #tpu.memory_space<vmem>>, vector<4x32xbf16>,
    return
  }
  func.func @transform_0(%arg0: i32) -> (i32, i32, i32) {
    %c0_i32 = arith.constant 0 : i32
    %c0_i32_0 = arith.constant 0 : i32
    %c0_i32_1 = arith.constant 0 : i32
    return %c0_i32, %c0_i32_0, %arg0 : i32, i32, i32
  }
  func.func @transform_1(%arg0: i32) -> (i32, i32) {
    %c0_i32 = arith.constant 0 : i32
    %c0_i32_0 = arith.constant 0 : i32
    %c0_i32_1 = arith.constant 0 : i32
    return %c0_i32, %c0_i32_0 : i32, i32
  }
  func.func @transform_2(%arg0: i32) -> (i32, i32) {
    %c0_i32 = arith.constant 0 : i32
    %c0_i32_0 = arith.constant 0 : i32
    return %c0_i32, %arg0 : i32, i32
  }
}

module attributes {stable_mosaic.version = 11 : i64} {
  func.func @_conv_kernel(%arg0: i32, %arg1: memref<1x72x128xbf16, #tpu.memory_space<vmem>>, %arg2: memref<4x72xbf16, #tpu.memory_space<vmem>>, %arg3: memref<4x1xf32, #tpu.memory_space<vmem>>, %arg4: memref<4x128xbf16, #tpu.memory_space<vmem>>) attributes {dimension_semantics = [#tpu.dimension_semantics<parallel>], iteration_bounds = array<i64: 1>, scalar_prefetch = 0 : i64, scratch_operands = 0 : i64, tpu.core_type = #tpu.core_type<tc>, window_params = [{transform_indices = @transform_0, window_bounds = array<i64: 1, 72, 128>}, {pipeline_mode = #tpu.pipeline_mode<synchronous>, transform_indices = @transform_1, window_bounds = array<i64: 4, 72>}, {pipeline_mode = #tpu.pipeline_mode<synchronous>, transform_indices = @transform_2, window_bounds = array<i64: 4, 1>}, {transform_indices = @transform_3, window_bounds = array<i64: 4, 128>}]} {
    %c0 = arith.constant 0 : index
    %c0_0 = arith.constant 0 : index
    %0 = vector.load %arg2[%c0, %c0_0] : memref<4x72xbf16, #tpu.memory_space<vmem>>, vector<4x72xbf16>
    %c0_1 = arith.constant 0 : index
    %c0_2 = arith.constant 0 : index
    %c0_3 = arith.constant 0 : index
    %1 = vector.load %arg1[%c0_1, %c0_2, %c0_3] : memref<1x72x128xbf16, #tpu.memory_space<vmem>>, vector<1x72x128xbf16>
    %2 = vector.shape_cast %1 : vector<1x72x128xbf16> to vector<72x128xbf16>
    %cst = arith.constant dense<0.000000e+00> : vector<4x128xf32>
    %3 = tpu.matmul %0, %2, %cst {dimension_numbers = #tpu.dot_dimension_numbers<[1], [0], [0], [1], [0, 0, 1, 1], [], []>} : vector<4x72xbf16>, vector<72x128xbf16>, vector<4x128xf32> -> vector<4x128xf32>
    %c0_4 = arith.constant 0 : index
    %c0_5 = arith.constant 0 : index
    %4 = vector.load %arg3[%c0_4, %c0_5] : memref<4x1xf32, #tpu.memory_space<vmem>>, vector<4x1xf32>
    %5 = vector.broadcast %4 : vector<4x1xf32> to vector<4x128xf32>
    %6 = arith.addf %3, %5 : vector<4x128xf32>
    %7 = arith.truncf %6 : vector<4x128xf32> to vector<4x128xbf16>
    %c0_6 = arith.constant 0 : index
    %c0_7 = arith.constant 0 : index
    %8 = vector.load %arg4[%c0_6, %c0_7] : memref<4x128xbf16, #tpu.memory_space<vmem>>, vector<4x128xbf16>
    tpu.vector_store %arg4[%c0_6, %c0_7], %7 {strides = array<i32>} : memref<4x128xbf16, #tpu.memory_space<vmem>>, vector<4x128xbf16>,
    return
  }
  func.func @transform_0(%arg0: i32) -> (i32, i32, i32) {
    %c0_i32 = arith.constant 0 : i32
    %c0_i32_0 = arith.constant 0 : i32
    %c0_i32_1 = arith.constant 0 : i32
    return %c0_i32, %c0_i32_0, %arg0 : i32, i32, i32
  }
  func.func @transform_1(%arg0: i32) -> (i32, i32) {
    %c0_i32 = arith.constant 0 : i32
    %c0_i32_0 = arith.constant 0 : i32
    %c0_i32_1 = arith.constant 0 : i32
    return %c0_i32, %c0_i32_0 : i32, i32
  }
  func.func @transform_2(%arg0: i32) -> (i32, i32) {
    %c0_i32 = arith.constant 0 : i32
    %c0_i32_0 = arith.constant 0 : i32
    %c0_i32_1 = arith.constant 0 : i32
    return %c0_i32, %c0_i32_0 : i32, i32
  }
  func.func @transform_3(%arg0: i32) -> (i32, i32) {
    %c0_i32 = arith.constant 0 : i32
    %c0_i32_0 = arith.constant 0 : i32
    return %c0_i32, %arg0 : i32, i32
  }
}

module attributes {stable_mosaic.version = 11 : i64} {
  func.func @_upsample_kernel(%arg0: i32, %arg1: memref<8x64xbf16, #tpu.memory_space<vmem>>, %arg2: memref<64x256xbf16, #tpu.memory_space<vmem>>, %arg3: memref<8x8xbf16, #tpu.memory_space<vmem>>, %arg4: memref<8x1xf32, #tpu.memory_space<vmem>>, %arg5: memref<8x256xf32, #tpu.memory_space<vmem>>) attributes {dimension_semantics = [#tpu.dimension_semantics<parallel>], iteration_bounds = array<i64: 1>, scalar_prefetch = 0 : i64, scratch_operands = 0 : i64, tpu.core_type = #tpu.core_type<tc>, window_params = [{pipeline_mode = #tpu.pipeline_mode<synchronous>, transform_indices = @transform_0, window_bounds = array<i64: 8, 64>}, {transform_indices = @transform_1, window_bounds = array<i64: 64, 256>}, {pipeline_mode = #tpu.pipeline_mode<synchronous>, transform_indices = @transform_2, window_bounds = array<i64: 8, 8>}, {pipeline_mode = #tpu.pipeline_mode<synchronous>, transform_indices = @transform_3, window_bounds = array<i64: 8, 1>}, {transform_indices = @transform_4, window_bounds = array<i64: 8, 256>}]} {
    %c0 = arith.constant 0 : index
    %c0_0 = arith.constant 0 : index
    %0 = vector.load %arg1[%c0, %c0_0] : memref<8x64xbf16, #tpu.memory_space<vmem>>, vector<8x64xbf16>
    %c0_1 = arith.constant 0 : index
    %c0_2 = arith.constant 0 : index
    %1 = vector.load %arg2[%c0_1, %c0_2] : memref<64x256xbf16, #tpu.memory_space<vmem>>, vector<64x256xbf16>
    %cst = arith.constant dense<0.000000e+00> : vector<8x256xf32>
    %2 = tpu.matmul %0, %1, %cst {dimension_numbers = #tpu.dot_dimension_numbers<[1], [0], [0], [1], [0, 0, 1, 1], [], []>} : vector<8x64xbf16>, vector<64x256xbf16>, vector<8x256xf32> -> vector<8x256xf32>
    %cst_3 = arith.constant 0.000000e+00 : f32
    %3 = vector.broadcast %cst_3 : f32 to vector<8x256xf32>
    %4 = arith.maximumf %2, %3 : vector<8x256xf32>
    %c0_4 = arith.constant 0 : index
    %c0_5 = arith.constant 0 : index
    %5 = vector.load %arg3[%c0_4, %c0_5] : memref<8x8xbf16, #tpu.memory_space<vmem>>, vector<8x8xbf16>
    %6 = arith.truncf %4 : vector<8x256xf32> to vector<8x256xbf16>
    %cst_6 = arith.constant dense<0.000000e+00> : vector<8x256xf32>
    %7 = tpu.matmul %5, %6, %cst_6 {dimension_numbers = #tpu.dot_dimension_numbers<[1], [0], [0], [1], [0, 0, 1, 1], [], []>} : vector<8x8xbf16>, vector<8x256xbf16>, vector<8x256xf32> -> vector<8x256xf32>
    %c0_7 = arith.constant 0 : index
    %c0_8 = arith.constant 0 : index
    %8 = vector.load %arg4[%c0_7, %c0_8] : memref<8x1xf32, #tpu.memory_space<vmem>>, vector<8x1xf32>
    %9 = vector.broadcast %8 : vector<8x1xf32> to vector<8x256xf32>
    %10 = arith.addf %7, %9 : vector<8x256xf32>
    %c0_9 = arith.constant 0 : index
    %c0_10 = arith.constant 0 : index
    %11 = vector.load %arg5[%c0_9, %c0_10] : memref<8x256xf32, #tpu.memory_space<vmem>>, vector<8x256xf32>
    tpu.vector_store %arg5[%c0_9, %c0_10], %10 {strides = array<i32>} : memref<8x256xf32, #tpu.memory_space<vmem>>, vector<8x256xf32>,
    return
  }
  func.func @transform_0(%arg0: i32) -> (i32, i32) {
    %c0_i32 = arith.constant 0 : i32
    %c0_i32_0 = arith.constant 0 : i32
    %c0_i32_1 = arith.constant 0 : i32
    return %c0_i32, %c0_i32_0 : i32, i32
  }
  func.func @transform_1(%arg0: i32) -> (i32, i32) {
    %c0_i32 = arith.constant 0 : i32
    %c0_i32_0 = arith.constant 0 : i32
    return %c0_i32, %arg0 : i32, i32
  }
  func.func @transform_2(%arg0: i32) -> (i32, i32) {
    %c0_i32 = arith.constant 0 : i32
    %c0_i32_0 = arith.constant 0 : i32
    %c0_i32_1 = arith.constant 0 : i32
    return %c0_i32, %c0_i32_0 : i32, i32
  }
  func.func @transform_3(%arg0: i32) -> (i32, i32) {
    %c0_i32 = arith.constant 0 : i32
    %c0_i32_0 = arith.constant 0 : i32
    %c0_i32_1 = arith.constant 0 : i32
    return %c0_i32, %c0_i32_0 : i32, i32
  }
  func.func @transform_4(%arg0: i32) -> (i32, i32) {
    %c0_i32 = arith.constant 0 : i32
    %c0_i32_0 = arith.constant 0 : i32
    return %c0_i32, %arg0 : i32, i32
  }
}

</mosaic_0001>

<llo_original>
// kernel: unet_forward.12
$region0: #{unet_forward.12}
  #allocation0 [shape = 'u32[]', space=smem, size = 0x4, offset = 0x4, fixed_abs, tag = 'smem constant byte address 0x4 - core index']
  #allocation1 [shape = 'u32[144,128]{1,0:T(1,128)}', space=vmem, size = 0x12000, scoped, tag = 'internal scratch']
  %s0 = inlined_call_operand.vmem [shape: bf16[4,36,128], index: 0, kind: input, shape index: {}]
  %s1 = inlined_call_operand.vmem [shape: bf16[4,36], index: 1, kind: input, shape index: {}]
  %s2 = inlined_call_operand.vmem [shape: bf16[4,128], index: 2, kind: output, shape index: {0}]
  %s3 = inlined_call_operand.vmem [shape: f32[1,4,1], index: 3, kind: output, shape index: {1}]
  %s4 = inlined_call_operand.vmem [shape: f32[1,4,1], index: 4, kind: output, shape index: {2}]
  %5 = xla_tuple %s2, %s3, %s4
  %s6 = sld [smem:[#allocation0]]
  $region34: #{unet_forward.12} parent=0
    _
  %s8 = ssub.s32 1, %s6
  %s9 = scalar_select 0, %s8, %s6
  // Predicated region
  $region2: #{unet_forward.12} parent=0 // pred_check
    _
  $region3: #{unet_forward.12} parent=0 // pred_check_branch
    %11 = sbr.rel (0) target = $region5
  $region4: #{unet_forward.12} parent=0 // pred_region
    _
  $region5: #{unet_forward.12} parent=0 // pred_fallthru
    _
  // Predicated region
  $region6: #{unet_forward.12} parent=0 // pred_check
    _
  $region7: #{unet_forward.12} parent=0 // pred_check_branch
    %13 = sbr.rel (0) target = $region9
  $region8: #{unet_forward.12} parent=0 // pred_region
    _
  $region9: #{unet_forward.12} parent=0 // pred_fallthru
    _
  %v15 = vld [vmem:[%s1] sm:$0x3]
  %v16 = vld [vmem:[%s0] sm:$0xf]
  %v17 = vld [vmem:[%s0 + $0x4] sm:$0xf]
  %v18 = vld [vmem:[%s0 + $0x8] sm:$0xf]
  %v19 = vld [vmem:[%s0 + $0xc] sm:$0xf]
  %v20 = vld [vmem:[%s0 + $0x10] sm:$0x3]
  %v26 = vunpack.c.l.b16 %v16
  %v27 = vunpack.c.l.b16 %v17
  %v28 = vunpack.c.l.b16 %v18
  %v29 = vunpack.c.l.b16 %v19
  %v30 = vunpack.c.l.b16 %v20
  %v31 = vpack.c.b16 %v27, %v26
  %v32 = vpack.c.b16 %v29, %v28
  %v33 = vpack.c.b16 %v30, %v30
  %vm36 = vcmask 293888
  %v38 = vsel %vm36, %v15, 0
  %vm40 = vcmask 1041408
  %v42 = vsel %vm40, %v33, 0
  %44 = vmatprep.subr.bf16.mxu0 0
  %45 = vmatpush1.bf16.msra.mxu0 0
  %46 = vmatprep.subr.bf16.mxu0 0
  %47 = vmatpush1.bf16.msra.mxu0 0
  %48 = vmatprep.subr.bf16.mxu0 0
  %49 = vmatpush1.bf16.msra.mxu0 0
  %50 = vmatprep.subr.bf16.mxu0 0
  %51 = vmatpush1.bf16.msra.mxu0 0
  %52 = vmatprep.subr.bf16.mxu0 0
  %53 = vmatpush1.bf16.msra.mxu0 0
  %54 = vmatprep.subr.bf16.mxu0 0
  %55 = vmatpush1.bf16.msra.mxu0 %v42
  %56 = vmatprep.subr.bf16.mxu0 0
  %57 = vmatpush1.bf16.msra.mxu0 %v32
  %58 = vmatprep.subr.bf16.mxu0 0
  %59 = vmatpush1.bf16.msra.mxu0 %v31
  %60 = vmatprep.subr.bf16.mxu0 0
  %61 = vmatpush2.bf16.msra.mxu0 0
  %62 = vmatprep.subr.bf16.mxu0 0
  %63 = vmatpush2.bf16.msra.mxu0 0
  %64 = vmatprep.subr.bf16.mxu0 0
  %65 = vmatpush2.bf16.msra.mxu0 0
  %66 = vmatprep.subr.bf16.mxu0 0
  %67 = vmatpush2.bf16.msra.mxu0 0
  %68 = vmatprep.subr.bf16.mxu0 0
  %69 = vmatpush2.bf16.msra.mxu0 0
  %70 = vmatprep.subr.bf16.mxu0 0
  %71 = vmatpush2.bf16.msra.mxu0 0
  %72 = vmatprep.subr.bf16.mxu0 0
  %73 = vmatpush2.bf16.msra.mxu0 0
  %74 = vmatprep.subr.bf16.mxu0 0
  %75 = vmatpush2.bf16.msra.mxu0 0
  %76 = vmatprep.mubr.bf16.mxu0 0
  %77 = vmatmul.mubr.bf16.gmra.mxu0 %v38
  %v78 = vpop.f32.mrf.mxu0
  %v79 = vadd.f32 0.0, %v78
  %v80 = vpop.f32.mrf.mxu0
  %v81 = vpop.f32.mrf.mxu0
  %v82 = vpop.f32.mrf.mxu0
  %83 = vdwg.mxu0
  %s84 = scalar_lea.vmem %s0, 20
  %v85 = vld [vmem:[%s84] sm:$0xf]
  %v86 = vld [vmem:[%s84 + $0x4] sm:$0xf]
  %v87 = vld [vmem:[%s84 + $0x8] sm:$0xf]
  %v88 = vld [vmem:[%s84 + $0xc] sm:$0xf]
  %v89 = vld [vmem:[%s84 + $0x10] sm:$0x3]
  %v95 = vunpack.c.l.b16 %v85
  %v96 = vunpack.c.l.b16 %v86
  %v97 = vunpack.c.l.b16 %v87
  %v98 = vunpack.c.l.b16 %v88
  %v99 = vunpack.c.l.b16 %v89
  %v100 = vpack.c.b16 %v96, %v95
  %v101 = vpack.c.b16 %v98, %v97
  %v102 = vpack.c.b16 %v99, %v99
  %v106 = vsel %vm40, %v102, 0
  %108 = vmatprep.subr.bf16.mxu0 0
  %109 = vmatpush1.bf16.msra.mxu0 0
  %110 = vmatprep.subr.bf16.mxu0 0
  %111 = vmatpush1.bf16.msra.mxu0 0
  %112 = vmatprep.subr.bf16.mxu0 0
  %113 = vmatpush1.bf16.msra.mxu0 0
  %114 = vmatprep.subr.bf16.mxu0 0
  %115 = vmatpush1.bf16.msra.mxu0 0
  %116 = vmatprep.subr.bf16.mxu0 0
  %117 = vmatpush1.bf16.msra.mxu0 0
  %118 = vmatprep.subr.bf16.mxu0 0
  %119 = vmatpush1.bf16.msra.mxu0 %v106
  %120 = vmatprep.subr.bf16.mxu0 0
  %121 = vmatpush1.bf16.msra.mxu0 %v101
  %122 = vmatprep.subr.bf16.mxu0 0
  %123 = vmatpush1.bf16.msra.mxu0 %v100
  %124 = vmatprep.subr.bf16.mxu0 0
  %125 = vmatpush2.bf16.msra.mxu0 0
  %126 = vmatprep.subr.bf16.mxu0 0
  %127 = vmatpush2.bf16.msra.mxu0 0
  %128 = vmatprep.subr.bf16.mxu0 0
  %129 = vmatpush2.bf16.msra.mxu0 0
  %130 = vmatprep.subr.bf16.mxu0 0
  %131 = vmatpush2.bf16.msra.mxu0 0
  %132 = vmatprep.subr.bf16.mxu0 0
  %133 = vmatpush2.bf16.msra.mxu0 0
  %134 = vmatprep.subr.bf16.mxu0 0
  %135 = vmatpush2.bf16.msra.mxu0 0
  %136 = vmatprep.subr.bf16.mxu0 0
  %137 = vmatpush2.bf16.msra.mxu0 0
  %138 = vmatprep.subr.bf16.mxu0 0
  %139 = vmatpush2.bf16.msra.mxu0 0
  %140 = vmatprep.mubr.bf16.mxu0 0
  %141 = vmatmul.mubr.bf16.gmra.mxu0 %v38
  %v142 = vpop.f32.mrf.mxu0
  %v143 = vadd.f32 0.0, %v142
  %v144 = vpop.f32.mrf.mxu0
  %v145 = vpop.f32.mrf.mxu0
  %v146 = vpop.f32.mrf.mxu0
  %147 = vdwg.mxu0
  %v148 = vmax.f32 %v79, %v143
  %s149 = scalar_lea.vmem %s0, 40
  %v150 = vld [vmem:[%s149] sm:$0xf]
  %v151 = vld [vmem:[%s149 + $0x4] sm:$0xf]
  %v152 = vld [vmem:[%s149 + $0x8] sm:$0xf]
  %v153 = vld [vmem:[%s149 + $0xc] sm:$0xf]
  %v154 = vld [vmem:[%s149 + $0x10] sm:$0x3]
  %v160 = vunpack.c.l.b16 %v150
  %v161 = vunpack.c.l.b16 %v151
  %v162 = vunpack.c.l.b16 %v152
  %v163 = vunpack.c.l.b16 %v153
  %v164 = vunpack.c.l.b16 %v154
  %v165 = vpack.c.b16 %v161, %v160
  %v166 = vpack.c.b16 %v163, %v162
  %v167 = vpack.c.b16 %v164, %v164
  %v171 = vsel %vm40, %v167, 0
  %173 = vmatprep.subr.bf16.mxu0 0
  %174 = vmatpush1.bf16.msra.mxu0 0
  %175 = vmatprep.subr.bf16.mxu0 0
  %176 = vmatpush1.bf16.msra.mxu0 0
  %177 = vmatprep.subr.bf16.mxu0 0
  %178 = vmatpush1.bf16.msra.mxu0 0
  %179 = vmatprep.subr.bf16.mxu0 0
  %180 = vmatpush1.bf16.msra.mxu0 0
  %181 = vmatprep.subr.bf16.mxu0 0
  %182 = vmatpush1.bf16.msra.mxu0 0
  %183 = vmatprep.subr.bf16.mxu0 0
  %184 = vmatpush1.bf16.msra.mxu0 %v171
  %185 = vmatprep.subr.bf16.mxu0 0
  %186 = vmatpush1.bf16.msra.mxu0 %v166
  %187 = vmatprep.subr.bf16.mxu0 0
  %188 = vmatpush1.bf16.msra.mxu0 %v165
  %189 = vmatprep.subr.bf16.mxu0 0
  %190 = vmatpush2.bf16.msra.mxu0 0
  %191 = vmatprep.subr.bf16.mxu0 0
  %192 = vmatpush2.bf16.msra.mxu0 0
  %193 = vmatprep.subr.bf16.mxu0 0
  %194 = vmatpush2.bf16.msra.mxu0 0
  %195 = vmatprep.subr.bf16.mxu0 0
  %196 = vmatpush2.bf16.msra.mxu0 0
  %197 = vmatprep.subr.bf16.mxu0 0
  %198 = vmatpush2.bf16.msra.mxu0 0
  %199 = vmatprep.subr.bf16.mxu0 0
  %200 = vmatpush2.bf16.msra.mxu0 0
  %201 = vmatprep.subr.bf16.mxu0 0
  %202 = vmatpush2.bf16.msra.mxu0 0
  %203 = vmatprep.subr.bf16.mxu0 0
  %204 = vmatpush2.bf16.msra.mxu0 0
  %205 = vmatprep.mubr.bf16.mxu0 0
  %206 = vmatmul.mubr.bf16.gmra.mxu0 %v38
  %v207 = vpop.f32.mrf.mxu0
  %v208 = vadd.f32 0.0, %v207
  %v209 = vpop.f32.mrf.mxu0
  %v210 = vpop.f32.mrf.mxu0
  %v211 = vpop.f32.mrf.mxu0
  %212 = vdwg.mxu0
  %v213 = vmax.f32 %v148, %v208
  %s214 = scalar_lea.vmem %s0, 60
  %v215 = vld [vmem:[%s214] sm:$0xf]
  %v216 = vld [vmem:[%s214 + $0x4] sm:$0xf]
  %v217 = vld [vmem:[%s214 + $0x8] sm:$0xf]
  %v218 = vld [vmem:[%s214 + $0xc] sm:$0xf]
  %v219 = vld [vmem:[%s214 + $0x10] sm:$0x3]
  %v225 = vunpack.c.l.b16 %v215
  %v226 = vunpack.c.l.b16 %v216
  %v227 = vunpack.c.l.b16 %v217
  %v228 = vunpack.c.l.b16 %v218
  %v229 = vunpack.c.l.b16 %v219
  %v230 = vpack.c.b16 %v226, %v225
  %v231 = vpack.c.b16 %v228, %v227
  %v232 = vpack.c.b16 %v229, %v229
  %v236 = vsel %vm40, %v232, 0
  %238 = vmatprep.subr.bf16.mxu0 0
  %239 = vmatpush1.bf16.msra.mxu0 0
  %240 = vmatprep.subr.bf16.mxu0 0
  %241 = vmatpush1.bf16.msra.mxu0 0
  %242 = vmatprep.subr.bf16.mxu0 0
  %243 = vmatpush1.bf16.msra.mxu0 0
  %244 = vmatprep.subr.bf16.mxu0 0
  %245 = vmatpush1.bf16.msra.mxu0 0
  %246 = vmatprep.subr.bf16.mxu0 0
  %247 = vmatpush1.bf16.msra.mxu0 0
  %248 = vmatprep.subr.bf16.mxu0 0
  %249 = vmatpush1.bf16.msra.mxu0 %v236
  %250 = vmatprep.subr.bf16.mxu0 0
  %251 = vmatpush1.bf16.msra.mxu0 %v231
  %252 = vmatprep.subr.bf16.mxu0 0
  %253 = vmatpush1.bf16.msra.mxu0 %v230
  %254 = vmatprep.subr.bf16.mxu0 0
  %255 = vmatpush2.bf16.msra.mxu0 0
  %256 = vmatprep.subr.bf16.mxu0 0
  %257 = vmatpush2.bf16.msra.mxu0 0
  %258 = vmatprep.subr.bf16.mxu0 0
  %259 = vmatpush2.bf16.msra.mxu0 0
  %260 = vmatprep.subr.bf16.mxu0 0
  %261 = vmatpush2.bf16.msra.mxu0 0
  %262 = vmatprep.subr.bf16.mxu0 0
  %263 = vmatpush2.bf16.msra.mxu0 0
  %264 = vmatprep.subr.bf16.mxu0 0
  %265 = vmatpush2.bf16.msra.mxu0 0
  %266 = vmatprep.subr.bf16.mxu0 0
  %267 = vmatpush2.bf16.msra.mxu0 0
  %268 = vmatprep.subr.bf16.mxu0 0
  %269 = vmatpush2.bf16.msra.mxu0 0
  %270 = vmatprep.mubr.bf16.mxu0 0
  %271 = vmatmul.mubr.bf16.gmra.mxu0 %v38
  %v272 = vpop.f32.mrf.mxu0
  %v273 = vadd.f32 0.0, %v272
  %v274 = vpop.f32.mrf.mxu0
  %v275 = vpop.f32.mrf.mxu0
  %v276 = vpop.f32.mrf.mxu0
  %277 = vdwg.mxu0
  %v278 = vmax.f32 %v213, %v273
  %v279 = vpack.c.bf16 %v278, %v278
  %280 = vst [vmem:[%s2] sm:$0x3] %v279
  %vm281 = vcmask 1043456
  %v282 = vsel %vm281, %v278, 0.0
  %283 = vadd.xlane.f32.xlu0 %v282
  %v284 = vpop.xlane.xlu0 %283
  %vm285 = vcmask 3072
  %286 = vst.msk [vmem:[%s3] sm:$0xf] %vm285, %v284
  %v287 = vmul.f32 %v278, %v278
  %v288 = vsel %vm281, %v287, 0.0
  %289 = vadd.xlane.f32.xlu0 %v288
  %v290 = vpop.xlane.xlu0 %289
  %291 = vst.msk [vmem:[%s4] sm:$0xf] %vm285, %v290
  // Predicated region
  $region10: #{unet_forward.12} parent=0 // pred_check
    _
  $region11: #{unet_forward.12} parent=0 // pred_check_branch
    %293 = sbr.rel (0) target = $region13
  $region12: #{unet_forward.12} parent=0 // pred_region
    _
  $region13: #{unet_forward.12} parent=0 // pred_fallthru
    _
  // Predicated region
  $region14: #{unet_forward.12} parent=0 // pred_check
    _
  $region15: #{unet_forward.12} parent=0 // pred_check_branch
    %295 = sbr.rel (0) target = $region17
  $region16: #{unet_forward.12} parent=0 // pred_region
    _
  $region17: #{unet_forward.12} parent=0 // pred_fallthru
    _
  // Predicated region
  $region18: #{unet_forward.12} parent=0 // pred_check
    _
  $region19: #{unet_forward.12} parent=0 // pred_check_branch
    %297 = sbr.rel (0) target = $region21
  $region20: #{unet_forward.12} parent=0 // pred_region
    _
  $region21: #{unet_forward.12} parent=0 // pred_fallthru
    _
  // Predicated region
  $region22: #{unet_forward.12} parent=0 // pred_check
    _
  $region23: #{unet_forward.12} parent=0 // pred_check_branch
    %299 = sbr.rel (0) target = $region25
  $region24: #{unet_forward.12} parent=0 // pred_region
    _
  $region25: #{unet_forward.12} parent=0 // pred_fallthru
    _
  // Predicated region
  $region26: #{unet_forward.12} parent=0 // pred_check
    _
  $region27: #{unet_forward.12} parent=0 // pred_check_branch
    %301 = sbr.rel (0) target = $region29
  $region28: #{unet_forward.12} parent=0 // pred_region
    _
  $region29: #{unet_forward.12} parent=0 // pred_fallthru
    _
  // Predicated region
  $region30: #{unet_forward.12} parent=0 // pred_check
    _
  $region31: #{unet_forward.12} parent=0 // pred_check_branch
    %303 = sbr.rel (0) target = $region33
  $region32: #{unet_forward.12} parent=0 // pred_region
    _
  $region33: #{unet_forward.12} parent=0 // pred_fallthru
    _

// kernel: unet_forward.13
$region0: #{unet_forward.13}
  #allocation0 [shape = 'u32[]', space=smem, size = 0x4, offset = 0x4, fixed_abs, tag = 'smem constant byte address 0x4 - core index']
  #allocation1 [shape = 'u32[144,128]{1,0:T(1,128)}', space=vmem, size = 0x12000, scoped, tag = 'internal scratch']
  %s0 = inlined_call_operand.vmem [shape: bf16[4,36,32], index: 0, kind: input, shape index: {}]
  %s1 = inlined_call_operand.vmem [shape: bf16[8,36], index: 1, kind: input, shape index: {}]
  %s2 = inlined_call_operand.vmem [shape: bf16[8,32], index: 2, kind: output, shape index: {0}]
  %s3 = inlined_call_operand.vmem [shape: f32[1,8,1], index: 3, kind: output, shape index: {1}]
  %s4 = inlined_call_operand.vmem [shape: f32[1,8,1], index: 4, kind: output, shape index: {2}]
  %5 = xla_tuple %s2, %s3, %s4
  %s6 = sld [smem:[#allocation0]]
  $region34: #{unet_forward.13} parent=0
    _
  %s8 = ssub.s32 1, %s6
  %s9 = scalar_select 0, %s8, %s6
  // Predicated region
  $region2: #{unet_forward.13} parent=0 // pred_check
    _
  $region3: #{unet_forward.13} parent=0 // pred_check_branch
    %11 = sbr.rel (0) target = $region5
  $region4: #{unet_forward.13} parent=0 // pred_region
    _
  $region5: #{unet_forward.13} parent=0 // pred_fallthru
    _
  // Predicated region
  $region6: #{unet_forward.13} parent=0 // pred_check
    _
  $region7: #{unet_forward.13} parent=0 // pred_check_branch
    %13 = sbr.rel (0) target = $region9
  $region8: #{unet_forward.13} parent=0 // pred_region
    _
  $region9: #{unet_forward.13} parent=0 // pred_fallthru
    _
  %v15 = vld [vmem:[%s1] sm:$0xf]
  %v16 = vld [vmem:[%s0] sm:$0xf]
  %v17 = vld [vmem:[%s0 + $0x4] sm:$0xf]
  %v18 = vld [vmem:[%s0 + $0x8] sm:$0xf]
  %v19 = vld [vmem:[%s0 + $0xc] sm:$0xf]
  %v20 = vld [vmem:[%s0 + $0x10] sm:$0x3]
  %v26 = vunpack.c.l.b16 %v16
  %v27 = vunpack.c.l.b16 %v17
  %v28 = vunpack.c.l.b16 %v18
  %v29 = vunpack.c.l.b16 %v19
  %v30 = vunpack.c.l.b16 %v20
  %v31 = vpack.c.b16 %v27, %v26
  %v32 = vpack.c.b16 %v29, %v28
  %v33 = vpack.c.b16 %v30, %v30
  %vm36 = vcmask 293888
  %v38 = vsel %vm36, %v15, 0
  %vm40 = vcmask 1041408
  %v42 = vsel %vm40, %v33, 0
  %44 = vmatprep.subr.bf16.mxu0 0
  %45 = vmatpush1.bf16.msra.mxu0 0
  %46 = vmatprep.subr.bf16.mxu0 0
  %47 = vmatpush1.bf16.msra.mxu0 0
  %48 = vmatprep.subr.bf16.mxu0 0
  %49 = vmatpush1.bf16.msra.mxu0 0
  %50 = vmatprep.subr.bf16.mxu0 0
  %51 = vmatpush1.bf16.msra.mxu0 0
  %52 = vmatprep.subr.bf16.mxu0 0
  %53 = vmatpush1.bf16.msra.mxu0 0
  %54 = vmatprep.subr.bf16.mxu0 0
  %55 = vmatpush1.bf16.msra.mxu0 %v42
  %56 = vmatprep.subr.bf16.mxu0 0
  %57 = vmatpush1.bf16.msra.mxu0 %v32
  %58 = vmatprep.subr.bf16.mxu0 0
  %59 = vmatpush1.bf16.msra.mxu0 %v31
  %60 = vmatprep.subr.bf16.mxu0 0
  %61 = vmatpush2.bf16.msra.mxu0 0
  %62 = vmatprep.subr.bf16.mxu0 0
  %63 = vmatpush2.bf16.msra.mxu0 0
  %64 = vmatprep.subr.bf16.mxu0 0
  %65 = vmatpush2.bf16.msra.mxu0 0
  %66 = vmatprep.subr.bf16.mxu0 0
  %67 = vmatpush2.bf16.msra.mxu0 0
  %68 = vmatprep.subr.bf16.mxu0 0
  %69 = vmatpush2.bf16.msra.mxu0 0
  %70 = vmatprep.subr.bf16.mxu0 0
  %71 = vmatpush2.bf16.msra.mxu0 0
  %72 = vmatprep.subr.bf16.mxu0 0
  %73 = vmatpush2.bf16.msra.mxu0 0
  %74 = vmatprep.subr.bf16.mxu0 0
  %75 = vmatpush2.bf16.msra.mxu0 0
  %76 = vmatprep.mubr.bf16.mxu0 0
  %77 = vmatmul.mubr.bf16.gmra.mxu0 %v38
  %v78 = vpop.f32.mrf.mxu0
  %v79 = vadd.f32 0.0, %v78
  %v80 = vpop.f32.mrf.mxu0
  %v81 = vpop.f32.mrf.mxu0
  %v82 = vpop.f32.mrf.mxu0
  %83 = vdwg.mxu0
  %s84 = scalar_lea.vmem %s0, 20
  %v85 = vld [vmem:[%s84] sm:$0xf]
  %v86 = vld [vmem:[%s84 + $0x4] sm:$0xf]
  %v87 = vld [vmem:[%s84 + $0x8] sm:$0xf]
  %v88 = vld [vmem:[%s84 + $0xc] sm:$0xf]
  %v89 = vld [vmem:[%s84 + $0x10] sm:$0x3]
  %v95 = vunpack.c.l.b16 %v85
  %v96 = vunpack.c.l.b16 %v86
  %v97 = vunpack.c.l.b16 %v87
  %v98 = vunpack.c.l.b16 %v88
  %v99 = vunpack.c.l.b16 %v89
  %v100 = vpack.c.b16 %v96, %v95
  %v101 = vpack.c.b16 %v98, %v97
  %v102 = vpack.c.b16 %v99, %v99
  %v106 = vsel %vm40, %v102, 0
  %108 = vmatprep.subr.bf16.mxu0 0
  %109 = vmatpush1.bf16.msra.mxu0 0
  %110 = vmatprep.subr.bf16.mxu0 0
  %111 = vmatpush1.bf16.msra.mxu0 0
  %112 = vmatprep.subr.bf16.mxu0 0
  %113 = vmatpush1.bf16.msra.mxu0 0
  %114 = vmatprep.subr.bf16.mxu0 0
  %115 = vmatpush1.bf16.msra.mxu0 0
  %116 = vmatprep.subr.bf16.mxu0 0
  %117 = vmatpush1.bf16.msra.mxu0 0
  %118 = vmatprep.subr.bf16.mxu0 0
  %119 = vmatpush1.bf16.msra.mxu0 %v106
  %120 = vmatprep.subr.bf16.mxu0 0
  %121 = vmatpush1.bf16.msra.mxu0 %v101
  %122 = vmatprep.subr.bf16.mxu0 0
  %123 = vmatpush1.bf16.msra.mxu0 %v100
  %124 = vmatprep.subr.bf16.mxu0 0
  %125 = vmatpush2.bf16.msra.mxu0 0
  %126 = vmatprep.subr.bf16.mxu0 0
  %127 = vmatpush2.bf16.msra.mxu0 0
  %128 = vmatprep.subr.bf16.mxu0 0
  %129 = vmatpush2.bf16.msra.mxu0 0
  %130 = vmatprep.subr.bf16.mxu0 0
  %131 = vmatpush2.bf16.msra.mxu0 0
  %132 = vmatprep.subr.bf16.mxu0 0
  %133 = vmatpush2.bf16.msra.mxu0 0
  %134 = vmatprep.subr.bf16.mxu0 0
  %135 = vmatpush2.bf16.msra.mxu0 0
  %136 = vmatprep.subr.bf16.mxu0 0
  %137 = vmatpush2.bf16.msra.mxu0 0
  %138 = vmatprep.subr.bf16.mxu0 0
  %139 = vmatpush2.bf16.msra.mxu0 0
  %140 = vmatprep.mubr.bf16.mxu0 0
  %141 = vmatmul.mubr.bf16.gmra.mxu0 %v38
  %v142 = vpop.f32.mrf.mxu0
  %v143 = vadd.f32 0.0, %v142
  %v144 = vpop.f32.mrf.mxu0
  %v145 = vpop.f32.mrf.mxu0
  %v146 = vpop.f32.mrf.mxu0
  %147 = vdwg.mxu0
  %v148 = vmax.f32 %v79, %v143
  %s149 = scalar_lea.vmem %s0, 40
  %v150 = vld [vmem:[%s149] sm:$0xf]
  %v151 = vld [vmem:[%s149 + $0x4] sm:$0xf]
  %v152 = vld [vmem:[%s149 + $0x8] sm:$0xf]
  %v153 = vld [vmem:[%s149 + $0xc] sm:$0xf]
  %v154 = vld [vmem:[%s149 + $0x10] sm:$0x3]
  %v160 = vunpack.c.l.b16 %v150
  %v161 = vunpack.c.l.b16 %v151
  %v162 = vunpack.c.l.b16 %v152
  %v163 = vunpack.c.l.b16 %v153
  %v164 = vunpack.c.l.b16 %v154
  %v165 = vpack.c.b16 %v161, %v160
  %v166 = vpack.c.b16 %v163, %v162
  %v167 = vpack.c.b16 %v164, %v164
  %v171 = vsel %vm40, %v167, 0
  %173 = vmatprep.subr.bf16.mxu0 0
  %174 = vmatpush1.bf16.msra.mxu0 0
  %175 = vmatprep.subr.bf16.mxu0 0
  %176 = vmatpush1.bf16.msra.mxu0 0
  %177 = vmatprep.subr.bf16.mxu0 0
  %178 = vmatpush1.bf16.msra.mxu0 0
  %179 = vmatprep.subr.bf16.mxu0 0
  %180 = vmatpush1.bf16.msra.mxu0 0
  %181 = vmatprep.subr.bf16.mxu0 0
  %182 = vmatpush1.bf16.msra.mxu0 0
  %183 = vmatprep.subr.bf16.mxu0 0
  %184 = vmatpush1.bf16.msra.mxu0 %v171
  %185 = vmatprep.subr.bf16.mxu0 0
  %186 = vmatpush1.bf16.msra.mxu0 %v166
  %187 = vmatprep.subr.bf16.mxu0 0
  %188 = vmatpush1.bf16.msra.mxu0 %v165
  %189 = vmatprep.subr.bf16.mxu0 0
  %190 = vmatpush2.bf16.msra.mxu0 0
  %191 = vmatprep.subr.bf16.mxu0 0
  %192 = vmatpush2.bf16.msra.mxu0 0
  %193 = vmatprep.subr.bf16.mxu0 0
  %194 = vmatpush2.bf16.msra.mxu0 0
  %195 = vmatprep.subr.bf16.mxu0 0
  %196 = vmatpush2.bf16.msra.mxu0 0
  %197 = vmatprep.subr.bf16.mxu0 0
  %198 = vmatpush2.bf16.msra.mxu0 0
  %199 = vmatprep.subr.bf16.mxu0 0
  %200 = vmatpush2.bf16.msra.mxu0 0
  %201 = vmatprep.subr.bf16.mxu0 0
  %202 = vmatpush2.bf16.msra.mxu0 0
  %203 = vmatprep.subr.bf16.mxu0 0
  %204 = vmatpush2.bf16.msra.mxu0 0
  %205 = vmatprep.mubr.bf16.mxu0 0
  %206 = vmatmul.mubr.bf16.gmra.mxu0 %v38
  %v207 = vpop.f32.mrf.mxu0
  %v208 = vadd.f32 0.0, %v207
  %v209 = vpop.f32.mrf.mxu0
  %v210 = vpop.f32.mrf.mxu0
  %v211 = vpop.f32.mrf.mxu0
  %212 = vdwg.mxu0
  %v213 = vmax.f32 %v148, %v208
  %s214 = scalar_lea.vmem %s0, 60
  %v215 = vld [vmem:[%s214] sm:$0xf]
  %v216 = vld [vmem:[%s214 + $0x4] sm:$0xf]
  %v217 = vld [vmem:[%s214 + $0x8] sm:$0xf]
  %v218 = vld [vmem:[%s214 + $0xc] sm:$0xf]
  %v219 = vld [vmem:[%s214 + $0x10] sm:$0x3]
  %v225 = vunpack.c.l.b16 %v215
  %v226 = vunpack.c.l.b16 %v216
  %v227 = vunpack.c.l.b16 %v217
  %v228 = vunpack.c.l.b16 %v218
  %v229 = vunpack.c.l.b16 %v219
  %v230 = vpack.c.b16 %v226, %v225
  %v231 = vpack.c.b16 %v228, %v227
  %v232 = vpack.c.b16 %v229, %v229
  %v236 = vsel %vm40, %v232, 0
  %238 = vmatprep.subr.bf16.mxu0 0
  %239 = vmatpush1.bf16.msra.mxu0 0
  %240 = vmatprep.subr.bf16.mxu0 0
  %241 = vmatpush1.bf16.msra.mxu0 0
  %242 = vmatprep.subr.bf16.mxu0 0
  %243 = vmatpush1.bf16.msra.mxu0 0
  %244 = vmatprep.subr.bf16.mxu0 0
  %245 = vmatpush1.bf16.msra.mxu0 0
  %246 = vmatprep.subr.bf16.mxu0 0
  %247 = vmatpush1.bf16.msra.mxu0 0
  %248 = vmatprep.subr.bf16.mxu0 0
  %249 = vmatpush1.bf16.msra.mxu0 %v236
  %250 = vmatprep.subr.bf16.mxu0 0
  %251 = vmatpush1.bf16.msra.mxu0 %v231
  %252 = vmatprep.subr.bf16.mxu0 0
  %253 = vmatpush1.bf16.msra.mxu0 %v230
  %254 = vmatprep.subr.bf16.mxu0 0
  %255 = vmatpush2.bf16.msra.mxu0 0
  %256 = vmatprep.subr.bf16.mxu0 0
  %257 = vmatpush2.bf16.msra.mxu0 0
  %258 = vmatprep.subr.bf16.mxu0 0
  %259 = vmatpush2.bf16.msra.mxu0 0
  %260 = vmatprep.subr.bf16.mxu0 0
  %261 = vmatpush2.bf16.msra.mxu0 0
  %262 = vmatprep.subr.bf16.mxu0 0
  %263 = vmatpush2.bf16.msra.mxu0 0
  %264 = vmatprep.subr.bf16.mxu0 0
  %265 = vmatpush2.bf16.msra.mxu0 0
  %266 = vmatprep.subr.bf16.mxu0 0
  %267 = vmatpush2.bf16.msra.mxu0 0
  %268 = vmatprep.subr.bf16.mxu0 0
  %269 = vmatpush2.bf16.msra.mxu0 0
  %270 = vmatprep.mubr.bf16.mxu0 0
  %271 = vmatmul.mubr.bf16.gmra.mxu0 %v38
  %v272 = vpop.f32.mrf.mxu0
  %v273 = vadd.f32 0.0, %v272
  %v274 = vpop.f32.mrf.mxu0
  %v275 = vpop.f32.mrf.mxu0
  %v276 = vpop.f32.mrf.mxu0
  %277 = vdwg.mxu0
  %v278 = vmax.f32 %v213, %v273
  %v279 = vpack.c.bf16 %v278, %v278
  %vm280 = vcmask 257024
  %281 = vst.msk [vmem:[%s2] sm:$0xf] %vm280, %v279
  %vm282 = vcmask 261120
  %v283 = vsel %vm282, %v278, 0.0
  %284 = vadd.xlane.f32.xlu0 %v283
  %v285 = vpop.xlane.xlu0 %284
  %vm286 = vcmask 7168
  %287 = vst.msk [vmem:[%s3] sm:$0xff] %vm286, %v285
  %v288 = vmul.f32 %v278, %v278
  %v289 = vsel %vm282, %v288, 0.0
  %290 = vadd.xlane.f32.xlu0 %v289
  %v291 = vpop.xlane.xlu0 %290
  %292 = vst.msk [vmem:[%s4] sm:$0xff] %vm286, %v291
  // Predicated region
  $region10: #{unet_forward.13} parent=0 // pred_check
    _
  $region11: #{unet_forward.13} parent=0 // pred_check_branch
    %294 = sbr.rel (0) target = $region13
  $region12: #{unet_forward.13} parent=0 // pred_region
    _
  $region13: #{unet_forward.13} parent=0 // pred_fallthru
    _
  // Predicated region
  $region14: #{unet_forward.13} parent=0 // pred_check
    _
  $region15: #{unet_forward.13} parent=0 // pred_check_branch
    %296 = sbr.rel (0) target = $region17
  $region16: #{unet_forward.13} parent=0 // pred_region
    _
  $region17: #{unet_forward.13} parent=0 // pred_fallthru
    _
  // Predicated region
  $region18: #{unet_forward.13} parent=0 // pred_check
    _
  $region19: #{unet_forward.13} parent=0 // pred_check_branch
    %298 = sbr.rel (0) target = $region21
  $region20: #{unet_forward.13} parent=0 // pred_region
    _
  $region21: #{unet_forward.13} parent=0 // pred_fallthru
    _
  // Predicated region
  $region22: #{unet_forward.13} parent=0 // pred_check
    _
  $region23: #{unet_forward.13} parent=0 // pred_check_branch
    %300 = sbr.rel (0) target = $region25
  $region24: #{unet_forward.13} parent=0 // pred_region
    _
  $region25: #{unet_forward.13} parent=0 // pred_fallthru
    _
  // Predicated region
  $region26: #{unet_forward.13} parent=0 // pred_check
    _
  $region27: #{unet_forward.13} parent=0 // pred_check_branch
    %302 = sbr.rel (0) target = $region29
  $region28: #{unet_forward.13} parent=0 // pred_region
    _
  $region29: #{unet_forward.13} parent=0 // pred_fallthru
    _
  // Predicated region
  $region30: #{unet_forward.13} parent=0 // pred_check
    _
  $region31: #{unet_forward.13} parent=0 // pred_check_branch
    %304 = sbr.rel (0) target = $region33
  $region32: #{unet_forward.13} parent=0 // pred_region
    _
  $region33: #{unet_forward.13} parent=0 // pred_fallthru
    _

// kernel: unet_forward.14
$region0: #{unet_forward.14}
  #allocation0 [shape = 'u32[]', space=smem, size = 0x4, offset = 0x4, fixed_abs, tag = 'smem constant byte address 0x4 - core index']
  #allocation1 [shape = 'u32[144,128]{1,0:T(1,128)}', space=vmem, size = 0x12000, scoped, tag = 'internal scratch']
  %s0 = inlined_call_operand.vmem [shape: bf16[4,72,8], index: 0, kind: input, shape index: {}]
  %s1 = inlined_call_operand.vmem [shape: bf16[16,72], index: 1, kind: input, shape index: {}]
  %s2 = inlined_call_operand.vmem [shape: bf16[16,8], index: 2, kind: output, shape index: {0}]
  %s3 = inlined_call_operand.vmem [shape: f32[1,16,1], index: 3, kind: output, shape index: {1}]
  %s4 = inlined_call_operand.vmem [shape: f32[1,16,1], index: 4, kind: output, shape index: {2}]
  %5 = xla_tuple %s2, %s3, %s4
  %s6 = sld [smem:[#allocation0]]
  $region34: #{unet_forward.14} parent=0
    _
  %s8 = ssub.s32 1, %s6
  %s9 = scalar_select 0, %s8, %s6
  // Predicated region
  $region2: #{unet_forward.14} parent=0 // pred_check
    _
  $region3: #{unet_forward.14} parent=0 // pred_check_branch
    %11 = sbr.rel (0) target = $region5
  $region4: #{unet_forward.14} parent=0 // pred_region
    _
  $region5: #{unet_forward.14} parent=0 // pred_fallthru
    _
  // Predicated region
  $region6: #{unet_forward.14} parent=0 // pred_check
    _
  $region7: #{unet_forward.14} parent=0 // pred_check_branch
    %13 = sbr.rel (0) target = $region9
  $region8: #{unet_forward.14} parent=0 // pred_region
    _
  $region9: #{unet_forward.14} parent=0 // pred_fallthru
    _
  %v15 = vld [vmem:[%s1] sm:$0xf]
  %v16 = vld [vmem:[%s1 + $0x4] sm:$0xf]
  %v17 = vld [vmem:[%s0] sm:$0xf]
  %v18 = vld [vmem:[%s0 + $0x4] sm:$0xf]
  %v19 = vld [vmem:[%s0 + $0x8] sm:$0xf]
  %v20 = vld [vmem:[%s0 + $0xc] sm:$0xf]
  %v21 = vld [vmem:[%s0 + $0x10] sm:$0xf]
  %v22 = vld [vmem:[%s0 + $0x14] sm:$0xf]
  %v23 = vld [vmem:[%s0 + $0x18] sm:$0xf]
  %v24 = vld [vmem:[%s0 + $0x1c] sm:$0xf]
  %v25 = vld [vmem:[%s0 + $0x20] sm:$0xf]
  %v28 = vunpack.c.l.b16 %v15
  %v29 = vunpack.c.l.b16 %v16
  %v30 = vpack.c.b16 %v29, %v28
  %v40 = vunpack.c.l.b16 %v17
  %v41 = vunpack.c.l.b16 %v18
  %v42 = vunpack.c.l.b16 %v19
  %v43 = vunpack.c.l.b16 %v20
  %v44 = vunpack.c.l.b16 %v21
  %v45 = vunpack.c.l.b16 %v22
  %v46 = vunpack.c.l.b16 %v23
  %v47 = vunpack.c.l.b16 %v24
  %v48 = vunpack.c.l.b16 %v25
  %v49 = vpack.c.b16 %v41, %v40
  %v50 = vpack.c.b16 %v43, %v42
  %v51 = vpack.c.b16 %v45, %v44
  %v52 = vpack.c.b16 %v47, %v46
  %v53 = vpack.c.b16 %v48, %v48
  %vm58 = vcmask 588800
  %v60 = vsel %vm58, %v30, 0
  %vm62 = vcmask 1043456
  %v64 = vsel %vm62, %v53, 0
  %66 = vmatprep.subr.bf16.mxu0 0
  %67 = vmatpush1.bf16.msra.mxu0 0
  %68 = vmatprep.subr.bf16.mxu0 0
  %69 = vmatpush1.bf16.msra.mxu0 0
  %70 = vmatprep.subr.bf16.mxu0 0
  %71 = vmatpush1.bf16.msra.mxu0 0
  %72 = vmatprep.subr.bf16.mxu0 0
  %73 = vmatpush1.bf16.msra.mxu0 %v64
  %74 = vmatprep.subr.bf16.mxu0 0
  %75 = vmatpush1.bf16.msra.mxu0 %v52
  %76 = vmatprep.subr.bf16.mxu0 0
  %77 = vmatpush1.bf16.msra.mxu0 %v51
  %78 = vmatprep.subr.bf16.mxu0 0
  %79 = vmatpush1.bf16.msra.mxu0 %v50
  %80 = vmatprep.subr.bf16.mxu0 0
  %81 = vmatpush1.bf16.msra.mxu0 %v49
  %82 = vmatprep.subr.bf16.mxu0 0
  %83 = vmatpush2.bf16.msra.mxu0 0
  %84 = vmatprep.subr.bf16.mxu0 0
  %85 = vmatpush2.bf16.msra.mxu0 0
  %86 = vmatprep.subr.bf16.mxu0 0
  %87 = vmatpush2.bf16.msra.mxu0 0
  %88 = vmatprep.subr.bf16.mxu0 0
  %89 = vmatpush2.bf16.msra.mxu0 0
  %90 = vmatprep.subr.bf16.mxu0 0
  %91 = vmatpush2.bf16.msra.mxu0 0
  %92 = vmatprep.subr.bf16.mxu0 0
  %93 = vmatpush2.bf16.msra.mxu0 0
  %94 = vmatprep.subr.bf16.mxu0 0
  %95 = vmatpush2.bf16.msra.mxu0 0
  %96 = vmatprep.subr.bf16.mxu0 0
  %97 = vmatpush2.bf16.msra.mxu0 0
  %98 = vmatprep.mubr.bf16.mxu0 0
  %99 = vmatmul.mubr.bf16.gmra.mxu0 %v60
  %v100 = vpop.f32.mrf.mxu0
  %v101 = vadd.f32 0.0, %v100
  %v102 = vpop.f32.mrf.mxu0
  %v103 = vpop.f32.mrf.mxu0
  %v104 = vadd.f32 0.0, %v103
  %v105 = vpop.f32.mrf.mxu0
  %106 = vdwg.mxu0
  %s107 = scalar_lea.vmem %s0, 36
  %v108 = vld [vmem:[%s107] sm:$0xf]
  %v109 = vld [vmem:[%s107 + $0x4] sm:$0xf]
  %v110 = vld [vmem:[%s107 + $0x8] sm:$0xf]
  %v111 = vld [vmem:[%s107 + $0xc] sm:$0xf]
  %v112 = vld [vmem:[%s107 + $0x10] sm:$0xf]
  %v113 = vld [vmem:[%s107 + $0x14] sm:$0xf]
  %v114 = vld [vmem:[%s107 + $0x18] sm:$0xf]
  %v115 = vld [vmem:[%s107 + $0x1c] sm:$0xf]
  %v116 = vld [vmem:[%s107 + $0x20] sm:$0xf]
  %v126 = vunpack.c.l.b16 %v108
  %v127 = vunpack.c.l.b16 %v109
  %v128 = vunpack.c.l.b16 %v110
  %v129 = vunpack.c.l.b16 %v111
  %v130 = vunpack.c.l.b16 %v112
  %v131 = vunpack.c.l.b16 %v113
  %v132 = vunpack.c.l.b16 %v114
  %v133 = vunpack.c.l.b16 %v115
  %v134 = vunpack.c.l.b16 %v116
  %v135 = vpack.c.b16 %v127, %v126
  %v136 = vpack.c.b16 %v129, %v128
  %v137 = vpack.c.b16 %v131, %v130
  %v138 = vpack.c.b16 %v133, %v132
  %v139 = vpack.c.b16 %v134, %v134
  %v145 = vsel %vm62, %v139, 0
  %147 = vmatprep.subr.bf16.mxu0 0
  %148 = vmatpush1.bf16.msra.mxu0 0
  %149 = vmatprep.subr.bf16.mxu0 0
  %150 = vmatpush1.bf16.msra.mxu0 0
  %151 = vmatprep.subr.bf16.mxu0 0
  %152 = vmatpush1.bf16.msra.mxu0 0
  %153 = vmatprep.subr.bf16.mxu0 0
  %154 = vmatpush1.bf16.msra.mxu0 %v145
  %155 = vmatprep.subr.bf16.mxu0 0
  %156 = vmatpush1.bf16.msra.mxu0 %v138
  %157 = vmatprep.subr.bf16.mxu0 0
  %158 = vmatpush1.bf16.msra.mxu0 %v137
  %159 = vmatprep.subr.bf16.mxu0 0
  %160 = vmatpush1.bf16.msra.mxu0 %v136
  %161 = vmatprep.subr.bf16.mxu0 0
  %162 = vmatpush1.bf16.msra.mxu0 %v135
  %163 = vmatprep.subr.bf16.mxu0 0
  %164 = vmatpush2.bf16.msra.mxu0 0
  %165 = vmatprep.subr.bf16.mxu0 0
  %166 = vmatpush2.bf16.msra.mxu0 0
  %167 = vmatprep.subr.bf16.mxu0 0
  %168 = vmatpush2.bf16.msra.mxu0 0
  %169 = vmatprep.subr.bf16.mxu0 0
  %170 = vmatpush2.bf16.msra.mxu0 0
  %171 = vmatprep.subr.bf16.mxu0 0
  %172 = vmatpush2.bf16.msra.mxu0 0
  %173 = vmatprep.subr.bf16.mxu0 0
  %174 = vmatpush2.bf16.msra.mxu0 0
  %175 = vmatprep.subr.bf16.mxu0 0
  %176 = vmatpush2.bf16.msra.mxu0 0
  %177 = vmatprep.subr.bf16.mxu0 0
  %178 = vmatpush2.bf16.msra.mxu0 0
  %179 = vmatprep.mubr.bf16.mxu0 0
  %180 = vmatmul.mubr.bf16.gmra.mxu0 %v60
  %v181 = vpop.f32.mrf.mxu0
  %v182 = vadd.f32 0.0, %v181
  %v183 = vpop.f32.mrf.mxu0
  %v184 = vpop.f32.mrf.mxu0
  %v185 = vadd.f32 0.0, %v184
  %v186 = vpop.f32.mrf.mxu0
  %187 = vdwg.mxu0
  %v188 = vmax.f32 %v101, %v182
  %v189 = vmax.f32 %v104, %v185
  %s190 = scalar_lea.vmem %s0, 72
  %v191 = vld [vmem:[%s190] sm:$0xf]
  %v192 = vld [vmem:[%s190 + $0x4] sm:$0xf]
  %v193 = vld [vmem:[%s190 + $0x8] sm:$0xf]
  %v194 = vld [vmem:[%s190 + $0xc] sm:$0xf]
  %v195 = vld [vmem:[%s190 + $0x10] sm:$0xf]
  %v196 = vld [vmem:[%s190 + $0x14] sm:$0xf]
  %v197 = vld [vmem:[%s190 + $0x18] sm:$0xf]
  %v198 = vld [vmem:[%s190 + $0x1c] sm:$0xf]
  %v199 = vld [vmem:[%s190 + $0x20] sm:$0xf]
  %v209 = vunpack.c.l.b16 %v191
  %v210 = vunpack.c.l.b16 %v192
  %v211 = vunpack.c.l.b16 %v193
  %v212 = vunpack.c.l.b16 %v194
  %v213 = vunpack.c.l.b16 %v195
  %v214 = vunpack.c.l.b16 %v196
  %v215 = vunpack.c.l.b16 %v197
  %v216 = vunpack.c.l.b16 %v198
  %v217 = vunpack.c.l.b16 %v199
  %v218 = vpack.c.b16 %v210, %v209
  %v219 = vpack.c.b16 %v212, %v211
  %v220 = vpack.c.b16 %v214, %v213
  %v221 = vpack.c.b16 %v216, %v215
  %v222 = vpack.c.b16 %v217, %v217
  %v228 = vsel %vm62, %v222, 0
  %230 = vmatprep.subr.bf16.mxu0 0
  %231 = vmatpush1.bf16.msra.mxu0 0
  %232 = vmatprep.subr.bf16.mxu0 0
  %233 = vmatpush1.bf16.msra.mxu0 0
  %234 = vmatprep.subr.bf16.mxu0 0
  %235 = vmatpush1.bf16.msra.mxu0 0
  %236 = vmatprep.subr.bf16.mxu0 0
  %237 = vmatpush1.bf16.msra.mxu0 %v228
  %238 = vmatprep.subr.bf16.mxu0 0
  %239 = vmatpush1.bf16.msra.mxu0 %v221
  %240 = vmatprep.subr.bf16.mxu0 0
  %241 = vmatpush1.bf16.msra.mxu0 %v220
  %242 = vmatprep.subr.bf16.mxu0 0
  %243 = vmatpush1.bf16.msra.mxu0 %v219
  %244 = vmatprep.subr.bf16.mxu0 0
  %245 = vmatpush1.bf16.msra.mxu0 %v218
  %246 = vmatprep.subr.bf16.mxu0 0
  %247 = vmatpush2.bf16.msra.mxu0 0
  %248 = vmatprep.subr.bf16.mxu0 0
  %249 = vmatpush2.bf16.msra.mxu0 0
  %250 = vmatprep.subr.bf16.mxu0 0
  %251 = vmatpush2.bf16.msra.mxu0 0
  %252 = vmatprep.subr.bf16.mxu0 0
  %253 = vmatpush2.bf16.msra.mxu0 0
  %254 = vmatprep.subr.bf16.mxu0 0
  %255 = vmatpush2.bf16.msra.mxu0 0
  %256 = vmatprep.subr.bf16.mxu0 0
  %257 = vmatpush2.bf16.msra.mxu0 0
  %258 = vmatprep.subr.bf16.mxu0 0
  %259 = vmatpush2.bf16.msra.mxu0 0
  %260 = vmatprep.subr.bf16.mxu0 0
  %261 = vmatpush2.bf16.msra.mxu0 0
  %262 = vmatprep.mubr.bf16.mxu0 0
  %263 = vmatmul.mubr.bf16.gmra.mxu0 %v60
  %v264 = vpop.f32.mrf.mxu0
  %v265 = vadd.f32 0.0, %v264
  %v266 = vpop.f32.mrf.mxu0
  %v267 = vpop.f32.mrf.mxu0
  %v268 = vadd.f32 0.0, %v267
  %v269 = vpop.f32.mrf.mxu0
  %270 = vdwg.mxu0
  %v271 = vmax.f32 %v188, %v265
  %v272 = vmax.f32 %v189, %v268
  %s273 = scalar_lea.vmem %s0, 108
  %v274 = vld [vmem:[%s273] sm:$0xf]
  %v275 = vld [vmem:[%s273 + $0x4] sm:$0xf]
  %v276 = vld [vmem:[%s273 + $0x8] sm:$0xf]
  %v277 = vld [vmem:[%s273 + $0xc] sm:$0xf]
  %v278 = vld [vmem:[%s273 + $0x10] sm:$0xf]
  %v279 = vld [vmem:[%s273 + $0x14] sm:$0xf]
  %v280 = vld [vmem:[%s273 + $0x18] sm:$0xf]
  %v281 = vld [vmem:[%s273 + $0x1c] sm:$0xf]
  %v282 = vld [vmem:[%s273 + $0x20] sm:$0xf]
  %v292 = vunpack.c.l.b16 %v274
  %v293 = vunpack.c.l.b16 %v275
  %v294 = vunpack.c.l.b16 %v276
  %v295 = vunpack.c.l.b16 %v277
  %v296 = vunpack.c.l.b16 %v278
  %v297 = vunpack.c.l.b16 %v279
  %v298 = vunpack.c.l.b16 %v280
  %v299 = vunpack.c.l.b16 %v281
  %v300 = vunpack.c.l.b16 %v282
  %v301 = vpack.c.b16 %v293, %v292
  %v302 = vpack.c.b16 %v295, %v294
  %v303 = vpack.c.b16 %v297, %v296
  %v304 = vpack.c.b16 %v299, %v298
  %v305 = vpack.c.b16 %v300, %v300
  %v311 = vsel %vm62, %v305, 0
  %313 = vmatprep.subr.bf16.mxu0 0
  %314 = vmatpush1.bf16.msra.mxu0 0
  %315 = vmatprep.subr.bf16.mxu0 0
  %316 = vmatpush1.bf16.msra.mxu0 0
  %317 = vmatprep.subr.bf16.mxu0 0
  %318 = vmatpush1.bf16.msra.mxu0 0
  %319 = vmatprep.subr.bf16.mxu0 0
  %320 = vmatpush1.bf16.msra.mxu0 %v311
  %321 = vmatprep.subr.bf16.mxu0 0
  %322 = vmatpush1.bf16.msra.mxu0 %v304
  %323 = vmatprep.subr.bf16.mxu0 0
  %324 = vmatpush1.bf16.msra.mxu0 %v303
  %325 = vmatprep.subr.bf16.mxu0 0
  %326 = vmatpush1.bf16.msra.mxu0 %v302
  %327 = vmatprep.subr.bf16.mxu0 0
  %328 = vmatpush1.bf16.msra.mxu0 %v301
  %329 = vmatprep.subr.bf16.mxu0 0
  %330 = vmatpush2.bf16.msra.mxu0 0
  %331 = vmatprep.subr.bf16.mxu0 0
  %332 = vmatpush2.bf16.msra.mxu0 0
  %333 = vmatprep.subr.bf16.mxu0 0
  %334 = vmatpush2.bf16.msra.mxu0 0
  %335 = vmatprep.subr.bf16.mxu0 0
  %336 = vmatpush2.bf16.msra.mxu0 0
  %337 = vmatprep.subr.bf16.mxu0 0
  %338 = vmatpush2.bf16.msra.mxu0 0
  %339 = vmatprep.subr.bf16.mxu0 0
  %340 = vmatpush2.bf16.msra.mxu0 0
  %341 = vmatprep.subr.bf16.mxu0 0
  %342 = vmatpush2.bf16.msra.mxu0 0
  %343 = vmatprep.subr.bf16.mxu0 0
  %344 = vmatpush2.bf16.msra.mxu0 0
  %345 = vmatprep.mubr.bf16.mxu0 0
  %346 = vmatmul.mubr.bf16.gmra.mxu0 %v60
  %v347 = vpop.f32.mrf.mxu0
  %v348 = vadd.f32 0.0, %v347
  %v349 = vpop.f32.mrf.mxu0
  %v350 = vpop.f32.mrf.mxu0
  %v351 = vadd.f32 0.0, %v350
  %v352 = vpop.f32.mrf.mxu0
  %353 = vdwg.mxu0
  %v354 = vmax.f32 %v271, %v348
  %v355 = vmax.f32 %v272, %v351
  %v356 = vpack.c.bf16 %v355, %v354
  %v358 = vunpack.c.l.b16 %v356
  %v359 = vunpack.c.h.b16 %v356
  %v360 = vpack.c.b16 %v358, %v358
  %v361 = vpack.c.b16 %v359, %v359
  %vm364 = vcmask 60416
  %365 = vst.msk [vmem:[%s2] sm:$0xf] %vm364, %v360
  %366 = vst.msk [vmem:[%s2 + $0x4] sm:$0xf] %vm364, %v361
  %vm367 = vcmask 64512
  %v368 = vsel %vm367, %v354, 0.0
  %369 = vadd.xlane.f32.xlu0 %v368
  %v370 = vpop.xlane.xlu0 %369
  %v371 = vsel %vm367, %v355, 0.0
  %372 = vadd.xlane.f32.xlu0 %v371
  %v373 = vpop.xlane.xlu0 %372
  %vm374 = vcmask 7168
  %375 = vst.msk [vmem:[%s3] sm:$0xff] %vm374, %v370
  %376 = vst.msk [vmem:[%s3 + $0x8] sm:$0xff] %vm374, %v373
  %v377 = vmul.f32 %v354, %v354
  %v378 = vmul.f32 %v355, %v355
  %v379 = vsel %vm367, %v377, 0.0
  %380 = vadd.xlane.f32.xlu0 %v379
  %v381 = vpop.xlane.xlu0 %380
  %v382 = vsel %vm367, %v378, 0.0
  %383 = vadd.xlane.f32.xlu0 %v382
  %v384 = vpop.xlane.xlu0 %383
  %385 = vst.msk [vmem:[%s4] sm:$0xff] %vm374, %v381
  %386 = vst.msk [vmem:[%s4 + $0x8] sm:$0xff] %vm374, %v384
  // Predicated region
  $region10: #{unet_forward.14} parent=0 // pred_check
    _
  $region11: #{unet_forward.14} parent=0 // pred_check_branch
    %388 = sbr.rel (0) target = $region13
  $region12: #{unet_forward.14} parent=0 // pred_region
    _
  $region13: #{unet_forward.14} parent=0 // pred_fallthru
    _
  // Predicated region
  $region14: #{unet_forward.14} parent=0 // pred_check
    _
  $region15: #{unet_forward.14} parent=0 // pred_check_branch
    %390 = sbr.rel (0) target = $region17
  $region16: #{unet_forward.14} parent=0 // pred_region
    _
  $region17: #{unet_forward.14} parent=0 // pred_fallthru
    _
  // Predicated region
  $region18: #{unet_forward.14} parent=0 // pred_check
    _
  $region19: #{unet_forward.14} parent=0 // pred_check_branch
    %392 = sbr.rel (0) target = $region21
  $region20: #{unet_forward.14} parent=0 // pred_region
    _
  $region21: #{unet_forward.14} parent=0 // pred_fallthru
    _
  // Predicated region
  $region22: #{unet_forward.14} parent=0 // pred_check
    _
  $region23: #{unet_forward.14} parent=0 // pred_check_branch
    %394 = sbr.rel (0) target = $region25
  $region24: #{unet_forward.14} parent=0 // pred_region
    _
  $region25: #{unet_forward.14} parent=0 // pred_fallthru
    _
  // Predicated region
  $region26: #{unet_forward.14} parent=0 // pred_check
    _
  $region27: #{unet_forward.14} parent=0 // pred_check_branch
    %396 = sbr.rel (0) target = $region29
  $region28: #{unet_forward.14} parent=0 // pred_region
    _
  $region29: #{unet_forward.14} parent=0 // pred_fallthru
    _
  // Predicated region
  $region30: #{unet_forward.14} parent=0 // pred_check
    _
  $region31: #{unet_forward.14} parent=0 // pred_check_branch
    %398 = sbr.rel (0) target = $region33
  $region32: #{unet_forward.14} parent=0 // pred_region
    _
  $region33: #{unet_forward.14} parent=0 // pred_fallthru
    _

// kernel: unet_forward.15
$region0: #{unet_forward.15}
  #allocation0 [shape = 'u32[]', space=smem, size = 0x4, offset = 0x4, fixed_abs, tag = 'smem constant byte address 0x4 - core index']
  #allocation1 [shape = 'u32[144,128]{1,0:T(1,128)}', space=vmem, size = 0x12000, scoped, tag = 'internal scratch']
  %s0 = inlined_call_operand.vmem [shape: bf16[4,144,2], index: 0, kind: input, shape index: {}]
  %s1 = inlined_call_operand.vmem [shape: bf16[32,144], index: 1, kind: input, shape index: {}]
  %s2 = inlined_call_operand.vmem [shape: bf16[32,2], index: 2, kind: output, shape index: {0}]
  %s3 = inlined_call_operand.vmem [shape: f32[1,32,1], index: 3, kind: output, shape index: {1}]
  %s4 = inlined_call_operand.vmem [shape: f32[1,32,1], index: 4, kind: output, shape index: {2}]
  %5 = xla_tuple %s2, %s3, %s4
  %s6 = sld [smem:[#allocation0]]
  $region34: #{unet_forward.15} parent=0
    _
  %s8 = ssub.s32 1, %s6
  %s9 = scalar_select 0, %s8, %s6
  // Predicated region
  $region2: #{unet_forward.15} parent=0 // pred_check
    _
  $region3: #{unet_forward.15} parent=0 // pred_check_branch
    %11 = sbr.rel (0) target = $region5
  $region4: #{unet_forward.15} parent=0 // pred_region
    _
  $region5: #{unet_forward.15} parent=0 // pred_fallthru
    _
  // Predicated region
  $region6: #{unet_forward.15} parent=0 // pred_check
    _
  $region7: #{unet_forward.15} parent=0 // pred_check_branch
    %13 = sbr.rel (0) target = $region9
  $region8: #{unet_forward.15} parent=0 // pred_region
    _
  $region9: #{unet_forward.15} parent=0 // pred_fallthru
    _
  %v15 = vld [vmem:[%s1] sm:$0xff]
  %v16 = vld [vmem:[%s1 + $0x8] sm:$0xff]
  %v17 = vld [vmem:[%s1 + $0x10] sm:$0xff]
  %v18 = vld [vmem:[%s1 + $0x18] sm:$0xff]
  %v19 = vld [vmem:[%s0] sm:$0xf]
  %v20 = vld [vmem:[%s0 + $0x4] sm:$0xf]
  %v21 = vld [vmem:[%s0 + $0x8] sm:$0xf]
  %v22 = vld [vmem:[%s0 + $0xc] sm:$0xf]
  %v23 = vld [vmem:[%s0 + $0x10] sm:$0xf]
  %v24 = vld [vmem:[%s0 + $0x14] sm:$0xf]
  %v25 = vld [vmem:[%s0 + $0x18] sm:$0xf]
  %v26 = vld [vmem:[%s0 + $0x1c] sm:$0xf]
  %v27 = vld [vmem:[%s0 + $0x20] sm:$0xf]
  %v28 = vld [vmem:[%s0 + $0x24] sm:$0xf]
  %v29 = vld [vmem:[%s0 + $0x28] sm:$0xf]
  %v30 = vld [vmem:[%s0 + $0x2c] sm:$0xf]
  %v31 = vld [vmem:[%s0 + $0x30] sm:$0xf]
  %v32 = vld [vmem:[%s0 + $0x34] sm:$0xf]
  %v33 = vld [vmem:[%s0 + $0x38] sm:$0xf]
  %v34 = vld [vmem:[%s0 + $0x3c] sm:$0xf]
  %v35 = vld [vmem:[%s0 + $0x40] sm:$0xf]
  %v36 = vld [vmem:[%s0 + $0x44] sm:$0xf]
  %v41 = vunpack.c.l.b16 %v15
  %v42 = vunpack.c.h.b16 %v15
  %v43 = vunpack.c.l.b16 %v16
  %v44 = vunpack.c.h.b16 %v16
  %v45 = vunpack.c.l.b16 %v17
  %v46 = vunpack.c.h.b16 %v17
  %v47 = vunpack.c.l.b16 %v18
  %v48 = vunpack.c.h.b16 %v18
  %v49 = vpack.c.b16 %v43, %v41
  %v50 = vpack.c.b16 %v44, %v42
  %v51 = vpack.c.b16 %v47, %v45
  %v52 = vpack.c.b16 %v48, %v46
  %v73 = vunpack.c.l.b16 %v19
  %v74 = vunpack.c.l.b16 %v20
  %v75 = vunpack.c.l.b16 %v21
  %v76 = vunpack.c.l.b16 %v22
  %v77 = vunpack.c.l.b16 %v23
  %v78 = vunpack.c.l.b16 %v24
  %v79 = vunpack.c.l.b16 %v25
  %v80 = vunpack.c.l.b16 %v26
  %v81 = vunpack.c.l.b16 %v27
  %v82 = vunpack.c.l.b16 %v28
  %v83 = vunpack.c.l.b16 %v29
  %v84 = vunpack.c.l.b16 %v30
  %v85 = vunpack.c.l.b16 %v31
  %v86 = vunpack.c.l.b16 %v32
  %v87 = vunpack.c.l.b16 %v33
  %v88 = vunpack.c.l.b16 %v34
  %v89 = vunpack.c.l.b16 %v35
  %v90 = vunpack.c.l.b16 %v36
  %v91 = vpack.c.b16 %v74, %v73
  %v92 = vpack.c.b16 %v76, %v75
  %v93 = vpack.c.b16 %v78, %v77
  %v94 = vpack.c.b16 %v80, %v79
  %v95 = vpack.c.b16 %v82, %v81
  %v96 = vpack.c.b16 %v84, %v83
  %v97 = vpack.c.b16 %v86, %v85
  %v98 = vpack.c.b16 %v88, %v87
  %v99 = vpack.c.b16 %v90, %v89
  %vm109 = vcmask 130048
  %v111 = vsel %vm109, %v50, 0
  %v114 = vsel %vm109, %v52, 0
  %116 = vmatprep.subr.bf16.mxu0 0
  %117 = vmatpush1.bf16.msra.mxu0 %v98
  %118 = vmatprep.subr.bf16.mxu0 0
  %119 = vmatpush1.bf16.msra.mxu0 %v97
  %120 = vmatprep.subr.bf16.mxu0 0
  %121 = vmatpush1.bf16.msra.mxu0 %v96
  %122 = vmatprep.subr.bf16.mxu0 0
  %123 = vmatpush1.bf16.msra.mxu0 %v95
  %124 = vmatprep.subr.bf16.mxu0 0
  %125 = vmatpush1.bf16.msra.mxu0 %v94
  %126 = vmatprep.subr.bf16.mxu0 0
  %127 = vmatpush1.bf16.msra.mxu0 %v93
  %128 = vmatprep.subr.bf16.mxu0 0
  %129 = vmatpush1.bf16.msra.mxu0 %v92
  %130 = vmatprep.subr.bf16.mxu0 0
  %131 = vmatpush1.bf16.msra.mxu0 %v91
  %132 = vmatprep.subr.bf16.mxu0 0
  %133 = vmatpush2.bf16.msra.mxu0 0
  %134 = vmatprep.subr.bf16.mxu0 0
  %135 = vmatpush2.bf16.msra.mxu0 0
  %136 = vmatprep.subr.bf16.mxu0 0
  %137 = vmatpush2.bf16.msra.mxu0 0
  %138 = vmatprep.subr.bf16.mxu0 0
  %139 = vmatpush2.bf16.msra.mxu0 0
  %140 = vmatprep.subr.bf16.mxu0 0
  %141 = vmatpush2.bf16.msra.mxu0 0
  %142 = vmatprep.subr.bf16.mxu0 0
  %143 = vmatpush2.bf16.msra.mxu0 0
  %144 = vmatprep.subr.bf16.mxu0 0
  %145 = vmatpush2.bf16.msra.mxu0 0
  %146 = vmatprep.subr.bf16.mxu0 0
  %147 = vmatpush2.bf16.msra.mxu0 %v99
  %148 = vmatprep.mubr.bf16.mxu0 %v111
  %149 = vmatmul.mubr.bf16.gmra.mxu0 %v49
  %v150 = vpop.f32.mrf.mxu0
  %v151 = vadd.f32 0.0, %v150
  %v152 = vpop.f32.mrf.mxu0
  %v153 = vpop.f32.mrf.mxu0
  %v154 = vadd.f32 0.0, %v153
  %v155 = vpop.f32.mrf.mxu0
  %156 = vmatprep.mubr.bf16.mxu0 %v114
  %157 = vmatmul.mubr.bf16.gmra.mxu0 %v51
  %v158 = vpop.f32.mrf.mxu0
  %v159 = vadd.f32 0.0, %v158
  %v160 = vpop.f32.mrf.mxu0
  %v161 = vpop.f32.mrf.mxu0
  %v162 = vadd.f32 0.0, %v161
  %v163 = vpop.f32.mrf.mxu0
  %164 = vdwg.mxu0
  %s165 = scalar_lea.vmem %s0, 72
  %v166 = vld [vmem:[%s165] sm:$0xf]
  %v167 = vld [vmem:[%s165 + $0x4] sm:$0xf]
  %v168 = vld [vmem:[%s165 + $0x8] sm:$0xf]
  %v169 = vld [vmem:[%s165 + $0xc] sm:$0xf]
  %v170 = vld [vmem:[%s165 + $0x10] sm:$0xf]
  %v171 = vld [vmem:[%s165 + $0x14] sm:$0xf]
  %v172 = vld [vmem:[%s165 + $0x18] sm:$0xf]
  %v173 = vld [vmem:[%s165 + $0x1c] sm:$0xf]
  %v174 = vld [vmem:[%s165 + $0x20] sm:$0xf]
  %v175 = vld [vmem:[%s165 + $0x24] sm:$0xf]
  %v176 = vld [vmem:[%s165 + $0x28] sm:$0xf]
  %v177 = vld [vmem:[%s165 + $0x2c] sm:$0xf]
  %v178 = vld [vmem:[%s165 + $0x30] sm:$0xf]
  %v179 = vld [vmem:[%s165 + $0x34] sm:$0xf]
  %v180 = vld [vmem:[%s165 + $0x38] sm:$0xf]
  %v181 = vld [vmem:[%s165 + $0x3c] sm:$0xf]
  %v182 = vld [vmem:[%s165 + $0x40] sm:$0xf]
  %v183 = vld [vmem:[%s165 + $0x44] sm:$0xf]
  %v202 = vunpack.c.l.b16 %v166
  %v203 = vunpack.c.l.b16 %v167
  %v204 = vunpack.c.l.b16 %v168
  %v205 = vunpack.c.l.b16 %v169
  %v206 = vunpack.c.l.b16 %v170
  %v207 = vunpack.c.l.b16 %v171
  %v208 = vunpack.c.l.b16 %v172
  %v209 = vunpack.c.l.b16 %v173
  %v210 = vunpack.c.l.b16 %v174
  %v211 = vunpack.c.l.b16 %v175
  %v212 = vunpack.c.l.b16 %v176
  %v213 = vunpack.c.l.b16 %v177
  %v214 = vunpack.c.l.b16 %v178
  %v215 = vunpack.c.l.b16 %v179
  %v216 = vunpack.c.l.b16 %v180
  %v217 = vunpack.c.l.b16 %v181
  %v218 = vunpack.c.l.b16 %v182
  %v219 = vunpack.c.l.b16 %v183
  %v220 = vpack.c.b16 %v203, %v202
  %v221 = vpack.c.b16 %v205, %v204
  %v222 = vpack.c.b16 %v207, %v206
  %v223 = vpack.c.b16 %v209, %v208
  %v224 = vpack.c.b16 %v211, %v210
  %v225 = vpack.c.b16 %v213, %v212
  %v226 = vpack.c.b16 %v215, %v214
  %v227 = vpack.c.b16 %v217, %v216
  %v228 = vpack.c.b16 %v219, %v218
  %238 = vmatprep.subr.bf16.mxu0 0
  %239 = vmatpush1.bf16.msra.mxu0 %v227
  %240 = vmatprep.subr.bf16.mxu0 0
  %241 = vmatpush1.bf16.msra.mxu0 %v226
  %242 = vmatprep.subr.bf16.mxu0 0
  %243 = vmatpush1.bf16.msra.mxu0 %v225
  %244 = vmatprep.subr.bf16.mxu0 0
  %245 = vmatpush1.bf16.msra.mxu0 %v224
  %246 = vmatprep.subr.bf16.mxu0 0
  %247 = vmatpush1.bf16.msra.mxu0 %v223
  %248 = vmatprep.subr.bf16.mxu0 0
  %249 = vmatpush1.bf16.msra.mxu0 %v222
  %250 = vmatprep.subr.bf16.mxu0 0
  %251 = vmatpush1.bf16.msra.mxu0 %v221
  %252 = vmatprep.subr.bf16.mxu0 0
  %253 = vmatpush1.bf16.msra.mxu0 %v220
  %254 = vmatprep.subr.bf16.mxu0 0
  %255 = vmatpush2.bf16.msra.mxu0 0
  %256 = vmatprep.subr.bf16.mxu0 0
  %257 = vmatpush2.bf16.msra.mxu0 0
  %258 = vmatprep.subr.bf16.mxu0 0
  %259 = vmatpush2.bf16.msra.mxu0 0
  %260 = vmatprep.subr.bf16.mxu0 0
  %261 = vmatpush2.bf16.msra.mxu0 0
  %262 = vmatprep.subr.bf16.mxu0 0
  %263 = vmatpush2.bf16.msra.mxu0 0
  %264 = vmatprep.subr.bf16.mxu0 0
  %265 = vmatpush2.bf16.msra.mxu0 0
  %266 = vmatprep.subr.bf16.mxu0 0
  %267 = vmatpush2.bf16.msra.mxu0 0
  %268 = vmatprep.subr.bf16.mxu0 0
  %269 = vmatpush2.bf16.msra.mxu0 %v228
  %270 = vmatprep.mubr.bf16.mxu0 %v111
  %271 = vmatmul.mubr.bf16.gmra.mxu0 %v49
  %v272 = vpop.f32.mrf.mxu0
  %v273 = vadd.f32 0.0, %v272
  %v274 = vpop.f32.mrf.mxu0
  %v275 = vpop.f32.mrf.mxu0
  %v276 = vadd.f32 0.0, %v275
  %v277 = vpop.f32.mrf.mxu0
  %278 = vmatprep.mubr.bf16.mxu0 %v114
  %279 = vmatmul.mubr.bf16.gmra.mxu0 %v51
  %v280 = vpop.f32.mrf.mxu0
  %v281 = vadd.f32 0.0, %v280
  %v282 = vpop.f32.mrf.mxu0
  %v283 = vpop.f32.mrf.mxu0
  %v284 = vadd.f32 0.0, %v283
  %v285 = vpop.f32.mrf.mxu0
  %286 = vdwg.mxu0
  %v287 = vmax.f32 %v151, %v273
  %v288 = vmax.f32 %v154, %v276
  %v289 = vmax.f32 %v159, %v281
  %v290 = vmax.f32 %v162, %v284
  %s291 = scalar_lea.vmem %s0, 144
  %v292 = vld [vmem:[%s291] sm:$0xf]
  %v293 = vld [vmem:[%s291 + $0x4] sm:$0xf]
  %v294 = vld [vmem:[%s291 + $0x8] sm:$0xf]
  %v295 = vld [vmem:[%s291 + $0xc] sm:$0xf]
  %v296 = vld [vmem:[%s291 + $0x10] sm:$0xf]
  %v297 = vld [vmem:[%s291 + $0x14] sm:$0xf]
  %v298 = vld [vmem:[%s291 + $0x18] sm:$0xf]
  %v299 = vld [vmem:[%s291 + $0x1c] sm:$0xf]
  %v300 = vld [vmem:[%s291 + $0x20] sm:$0xf]
  %v301 = vld [vmem:[%s291 + $0x24] sm:$0xf]
  %v302 = vld [vmem:[%s291 + $0x28] sm:$0xf]
  %v303 = vld [vmem:[%s291 + $0x2c] sm:$0xf]
  %v304 = vld [vmem:[%s291 + $0x30] sm:$0xf]
  %v305 = vld [vmem:[%s291 + $0x34] sm:$0xf]
  %v306 = vld [vmem:[%s291 + $0x38] sm:$0xf]
  %v307 = vld [vmem:[%s291 + $0x3c] sm:$0xf]
  %v308 = vld [vmem:[%s291 + $0x40] sm:$0xf]
  %v309 = vld [vmem:[%s291 + $0x44] sm:$0xf]
  %v328 = vunpack.c.l.b16 %v292
  %v329 = vunpack.c.l.b16 %v293
  %v330 = vunpack.c.l.b16 %v294
  %v331 = vunpack.c.l.b16 %v295
  %v332 = vunpack.c.l.b16 %v296
  %v333 = vunpack.c.l.b16 %v297
  %v334 = vunpack.c.l.b16 %v298
  %v335 = vunpack.c.l.b16 %v299
  %v336 = vunpack.c.l.b16 %v300
  %v337 = vunpack.c.l.b16 %v301
  %v338 = vunpack.c.l.b16 %v302
  %v339 = vunpack.c.l.b16 %v303
  %v340 = vunpack.c.l.b16 %v304
  %v341 = vunpack.c.l.b16 %v305
  %v342 = vunpack.c.l.b16 %v306
  %v343 = vunpack.c.l.b16 %v307
  %v344 = vunpack.c.l.b16 %v308
  %v345 = vunpack.c.l.b16 %v309
  %v346 = vpack.c.b16 %v329, %v328
  %v347 = vpack.c.b16 %v331, %v330
  %v348 = vpack.c.b16 %v333, %v332
  %v349 = vpack.c.b16 %v335, %v334
  %v350 = vpack.c.b16 %v337, %v336
  %v351 = vpack.c.b16 %v339, %v338
  %v352 = vpack.c.b16 %v341, %v340
  %v353 = vpack.c.b16 %v343, %v342
  %v354 = vpack.c.b16 %v345, %v344
  %364 = vmatprep.subr.bf16.mxu0 0
  %365 = vmatpush1.bf16.msra.mxu0 %v353
  %366 = vmatprep.subr.bf16.mxu0 0
  %367 = vmatpush1.bf16.msra.mxu0 %v352
  %368 = vmatprep.subr.bf16.mxu0 0
  %369 = vmatpush1.bf16.msra.mxu0 %v351
  %370 = vmatprep.subr.bf16.mxu0 0
  %371 = vmatpush1.bf16.msra.mxu0 %v350
  %372 = vmatprep.subr.bf16.mxu0 0
  %373 = vmatpush1.bf16.msra.mxu0 %v349
  %374 = vmatprep.subr.bf16.mxu0 0
  %375 = vmatpush1.bf16.msra.mxu0 %v348
  %376 = vmatprep.subr.bf16.mxu0 0
  %377 = vmatpush1.bf16.msra.mxu0 %v347
  %378 = vmatprep.subr.bf16.mxu0 0
  %379 = vmatpush1.bf16.msra.mxu0 %v346
  %380 = vmatprep.subr.bf16.mxu0 0
  %381 = vmatpush2.bf16.msra.mxu0 0
  %382 = vmatprep.subr.bf16.mxu0 0
  %383 = vmatpush2.bf16.msra.mxu0 0
  %384 = vmatprep.subr.bf16.mxu0 0
  %385 = vmatpush2.bf16.msra.mxu0 0
  %386 = vmatprep.subr.bf16.mxu0 0
  %387 = vmatpush2.bf16.msra.mxu0 0
  %388 = vmatprep.subr.bf16.mxu0 0
  %389 = vmatpush2.bf16.msra.mxu0 0
  %390 = vmatprep.subr.bf16.mxu0 0
  %391 = vmatpush2.bf16.msra.mxu0 0
  %392 = vmatprep.subr.bf16.mxu0 0
  %393 = vmatpush2.bf16.msra.mxu0 0
  %394 = vmatprep.subr.bf16.mxu0 0
  %395 = vmatpush2.bf16.msra.mxu0 %v354
  %396 = vmatprep.mubr.bf16.mxu0 %v111
  %397 = vmatmul.mubr.bf16.gmra.mxu0 %v49
  %v398 = vpop.f32.mrf.mxu0
  %v399 = vadd.f32 0.0, %v398
  %v400 = vpop.f32.mrf.mxu0
  %v401 = vpop.f32.mrf.mxu0
  %v402 = vadd.f32 0.0, %v401
  %v403 = vpop.f32.mrf.mxu0
  %404 = vmatprep.mubr.bf16.mxu0 %v114
  %405 = vmatmul.mubr.bf16.gmra.mxu0 %v51
  %v406 = vpop.f32.mrf.mxu0
  %v407 = vadd.f32 0.0, %v406
  %v408 = vpop.f32.mrf.mxu0
  %v409 = vpop.f32.mrf.mxu0
  %v410 = vadd.f32 0.0, %v409
  %v411 = vpop.f32.mrf.mxu0
  %412 = vdwg.mxu0
  %v413 = vmax.f32 %v287, %v399
  %v414 = vmax.f32 %v288, %v402
  %v415 = vmax.f32 %v289, %v407
  %v416 = vmax.f32 %v290, %v410
  %s417 = scalar_lea.vmem %s0, 216
  %v418 = vld [vmem:[%s417] sm:$0xf]
  %v419 = vld [vmem:[%s417 + $0x4] sm:$0xf]
  %v420 = vld [vmem:[%s417 + $0x8] sm:$0xf]
  %v421 = vld [vmem:[%s417 + $0xc] sm:$0xf]
  %v422 = vld [vmem:[%s417 + $0x10] sm:$0xf]
  %v423 = vld [vmem:[%s417 + $0x14] sm:$0xf]
  %v424 = vld [vmem:[%s417 + $0x18] sm:$0xf]
  %v425 = vld [vmem:[%s417 + $0x1c] sm:$0xf]
  %v426 = vld [vmem:[%s417 + $0x20] sm:$0xf]
  %v427 = vld [vmem:[%s417 + $0x24] sm:$0xf]
  %v428 = vld [vmem:[%s417 + $0x28] sm:$0xf]
  %v429 = vld [vmem:[%s417 + $0x2c] sm:$0xf]
  %v430 = vld [vmem:[%s417 + $0x30] sm:$0xf]
  %v431 = vld [vmem:[%s417 + $0x34] sm:$0xf]
  %v432 = vld [vmem:[%s417 + $0x38] sm:$0xf]
  %v433 = vld [vmem:[%s417 + $0x3c] sm:$0xf]
  %v434 = vld [vmem:[%s417 + $0x40] sm:$0xf]
  %v435 = vld [vmem:[%s417 + $0x44] sm:$0xf]
  %v454 = vunpack.c.l.b16 %v418
  %v455 = vunpack.c.l.b16 %v419
  %v456 = vunpack.c.l.b16 %v420
  %v457 = vunpack.c.l.b16 %v421
  %v458 = vunpack.c.l.b16 %v422
  %v459 = vunpack.c.l.b16 %v423
  %v460 = vunpack.c.l.b16 %v424
  %v461 = vunpack.c.l.b16 %v425
  %v462 = vunpack.c.l.b16 %v426
  %v463 = vunpack.c.l.b16 %v427
  %v464 = vunpack.c.l.b16 %v428
  %v465 = vunpack.c.l.b16 %v429
  %v466 = vunpack.c.l.b16 %v430
  %v467 = vunpack.c.l.b16 %v431
  %v468 = vunpack.c.l.b16 %v432
  %v469 = vunpack.c.l.b16 %v433
  %v470 = vunpack.c.l.b16 %v434
  %v471 = vunpack.c.l.b16 %v435
  %v472 = vpack.c.b16 %v455, %v454
  %v473 = vpack.c.b16 %v457, %v456
  %v474 = vpack.c.b16 %v459, %v458
  %v475 = vpack.c.b16 %v461, %v460
  %v476 = vpack.c.b16 %v463, %v462
  %v477 = vpack.c.b16 %v465, %v464
  %v478 = vpack.c.b16 %v467, %v466
  %v479 = vpack.c.b16 %v469, %v468
  %v480 = vpack.c.b16 %v471, %v470
  %490 = vmatprep.subr.bf16.mxu0 0
  %491 = vmatpush1.bf16.msra.mxu0 %v479
  %492 = vmatprep.subr.bf16.mxu0 0
  %493 = vmatpush1.bf16.msra.mxu0 %v478
  %494 = vmatprep.subr.bf16.mxu0 0
  %495 = vmatpush1.bf16.msra.mxu0 %v477
  %496 = vmatprep.subr.bf16.mxu0 0
  %497 = vmatpush1.bf16.msra.mxu0 %v476
  %498 = vmatprep.subr.bf16.mxu0 0
  %499 = vmatpush1.bf16.msra.mxu0 %v475
  %500 = vmatprep.subr.bf16.mxu0 0
  %501 = vmatpush1.bf16.msra.mxu0 %v474
  %502 = vmatprep.subr.bf16.mxu0 0
  %503 = vmatpush1.bf16.msra.mxu0 %v473
  %504 = vmatprep.subr.bf16.mxu0 0
  %505 = vmatpush1.bf16.msra.mxu0 %v472
  %506 = vmatprep.subr.bf16.mxu0 0
  %507 = vmatpush2.bf16.msra.mxu0 0
  %508 = vmatprep.subr.bf16.mxu0 0
  %509 = vmatpush2.bf16.msra.mxu0 0
  %510 = vmatprep.subr.bf16.mxu0 0
  %511 = vmatpush2.bf16.msra.mxu0 0
  %512 = vmatprep.subr.bf16.mxu0 0
  %513 = vmatpush2.bf16.msra.mxu0 0
  %514 = vmatprep.subr.bf16.mxu0 0
  %515 = vmatpush2.bf16.msra.mxu0 0
  %516 = vmatprep.subr.bf16.mxu0 0
  %517 = vmatpush2.bf16.msra.mxu0 0
  %518 = vmatprep.subr.bf16.mxu0 0
  %519 = vmatpush2.bf16.msra.mxu0 0
  %520 = vmatprep.subr.bf16.mxu0 0
  %521 = vmatpush2.bf16.msra.mxu0 %v480
  %522 = vmatprep.mubr.bf16.mxu0 %v111
  %523 = vmatmul.mubr.bf16.gmra.mxu0 %v49
  %v524 = vpop.f32.mrf.mxu0
  %v525 = vadd.f32 0.0, %v524
  %v526 = vpop.f32.mrf.mxu0
  %v527 = vpop.f32.mrf.mxu0
  %v528 = vadd.f32 0.0, %v527
  %v529 = vpop.f32.mrf.mxu0
  %530 = vmatprep.mubr.bf16.mxu0 %v114
  %531 = vmatmul.mubr.bf16.gmra.mxu0 %v51
  %v532 = vpop.f32.mrf.mxu0
  %v533 = vadd.f32 0.0, %v532
  %v534 = vpop.f32.mrf.mxu0
  %v535 = vpop.f32.mrf.mxu0
  %v536 = vadd.f32 0.0, %v535
  %v537 = vpop.f32.mrf.mxu0
  %538 = vdwg.mxu0
  %v539 = vmax.f32 %v413, %v525
  %v540 = vmax.f32 %v414, %v528
  %v541 = vmax.f32 %v415, %v533
  %v542 = vmax.f32 %v416, %v536
  %v543 = vpack.c.bf16 %v540, %v539
  %v544 = vpack.c.bf16 %v542, %v541
  %v547 = vunpack.c.l.b16 %v543
  %v548 = vunpack.c.h.b16 %v543
  %v549 = vunpack.c.l.b16 %v544
  %v550 = vunpack.c.h.b16 %v544
  %v551 = vpack.c.b16 %v547, %v547
  %v552 = vpack.c.b16 %v548, %v548
  %v553 = vpack.c.b16 %v549, %v549
  %v554 = vpack.c.b16 %v550, %v550
  %vm559 = vcmask 11264
  %560 = vst.msk [vmem:[%s2] sm:$0xf] %vm559, %v551
  %561 = vst.msk [vmem:[%s2 + $0x4] sm:$0xf] %vm559, %v552
  %562 = vst.msk [vmem:[%s2 + $0x8] sm:$0xf] %vm559, %v553
  %563 = vst.msk [vmem:[%s2 + $0xc] sm:$0xf] %vm559, %v554
  %vm564 = vcmask 15360
  %v565 = vsel %vm564, %v539, 0.0
  %566 = vadd.xlane.f32.xlu0 %v565
  %v567 = vpop.xlane.xlu0 %566
  %v568 = vsel %vm564, %v540, 0.0
  %569 = vadd.xlane.f32.xlu0 %v568
  %v570 = vpop.xlane.xlu0 %569
  %v571 = vsel %vm564, %v541, 0.0
  %572 = vadd.xlane.f32.xlu0 %v571
  %v573 = vpop.xlane.xlu0 %572
  %v574 = vsel %vm564, %v542, 0.0
  %575 = vadd.xlane.f32.xlu0 %v574
  %v576 = vpop.xlane.xlu0 %575
  %vm577 = vcmask 7168
  %578 = vst.msk [vmem:[%s3] sm:$0xff] %vm577, %v567
  %579 = vst.msk [vmem:[%s3 + $0x8] sm:$0xff] %vm577, %v570
  %580 = vst.msk [vmem:[%s3 + $0x10] sm:$0xff] %vm577, %v573
  %581 = vst.msk [vmem:[%s3 + $0x18] sm:$0xff] %vm577, %v576
  %v582 = vmul.f32 %v539, %v539
  %v583 = vmul.f32 %v540, %v540
  %v584 = vmul.f32 %v541, %v541
  %v585 = vmul.f32 %v542, %v542
  %v586 = vsel %vm564, %v582, 0.0
  %587 = vadd.xlane.f32.xlu0 %v586
  %v588 = vpop.xlane.xlu0 %587
  %v589 = vsel %vm564, %v583, 0.0
  %590 = vadd.xlane.f32.xlu0 %v589
  %v591 = vpop.xlane.xlu0 %590
  %v592 = vsel %vm564, %v584, 0.0
  %593 = vadd.xlane.f32.xlu0 %v592
  %v594 = vpop.xlane.xlu0 %593
  %v595 = vsel %vm564, %v585, 0.0
  %596 = vadd.xlane.f32.xlu0 %v595
  %v597 = vpop.xlane.xlu0 %596
  %598 = vst.msk [vmem:[%s4] sm:$0xff] %vm577, %v588
  %599 = vst.msk [vmem:[%s4 + $0x8] sm:$0xff] %vm577, %v591
  %600 = vst.msk [vmem:[%s4 + $0x10] sm:$0xff] %vm577, %v594
  %601 = vst.msk [vmem:[%s4 + $0x18] sm:$0xff] %vm577, %v597
  // Predicated region
  $region10: #{unet_forward.15} parent=0 // pred_check
    _
  $region11: #{unet_forward.15} parent=0 // pred_check_branch
    %603 = sbr.rel (0) target = $region13
  $region12: #{unet_forward.15} parent=0 // pred_region
    _
  $region13: #{unet_forward.15} parent=0 // pred_fallthru
    _
  // Predicated region
  $region14: #{unet_forward.15} parent=0 // pred_check
    _
  $region15: #{unet_forward.15} parent=0 // pred_check_branch
    %605 = sbr.rel (0) target = $region17
  $region16: #{unet_forward.15} parent=0 // pred_region
    _
  $region17: #{unet_forward.15} parent=0 // pred_fallthru
    _
  // Predicated region
  $region18: #{unet_forward.15} parent=0 // pred_check
    _
  $region19: #{unet_forward.15} parent=0 // pred_check_branch
    %607 = sbr.rel (0) target = $region21
  $region20: #{unet_forward.15} parent=0 // pred_region
    _
  $region21: #{unet_forward.15} parent=0 // pred_fallthru
    _
  // Predicated region
  $region22: #{unet_forward.15} parent=0 // pred_check
    _
  $region23: #{unet_forward.15} parent=0 // pred_check_branch
    %609 = sbr.rel (0) target = $region25
  $region24: #{unet_forward.15} parent=0 // pred_region
    _
  $region25: #{unet_forward.15} parent=0 // pred_fallthru
    _
  // Predicated region
  $region26: #{unet_forward.15} parent=0 // pred_check
    _
  $region27: #{unet_forward.15} parent=0 // pred_check_branch
    %611 = sbr.rel (0) target = $region29
  $region28: #{unet_forward.15} parent=0 // pred_region
    _
  $region29: #{unet_forward.15} parent=0 // pred_fallthru
    _
  // Predicated region
  $region30: #{unet_forward.15} parent=0 // pred_check
    _
  $region31: #{unet_forward.15} parent=0 // pred_check_branch
    %613 = sbr.rel (0) target = $region33
  $region32: #{unet_forward.15} parent=0 // pred_region
    _
  $region33: #{unet_forward.15} parent=0 // pred_fallthru
    _

// kernel: unet_forward.16
$region0: #{unet_forward.16}
  #allocation0 [shape = 'u32[]', space=smem, size = 0x4, offset = 0x4, fixed_abs, tag = 'smem constant byte address 0x4 - core index']
  #allocation1 [shape = 'u32[144,128]{1,0:T(1,128)}', space=vmem, size = 0x12000, scoped, tag = 'internal scratch']
  %s0 = inlined_call_operand.vmem [shape: bf16[1,288,2], index: 0, kind: input, shape index: {}]
  %s1 = inlined_call_operand.vmem [shape: bf16[16,288], index: 1, kind: input, shape index: {}]
  %s2 = inlined_call_operand.vmem [shape: bf16[16,2], index: 2, kind: output, shape index: {}]
  %s3 = sld [smem:[#allocation0]]
  $region18: #{unet_forward.16} parent=0
    _
  %s5 = ssub.s32 1, %s3
  %s6 = scalar_select 0, %s5, %s3
  // Predicated region
  $region2: #{unet_forward.16} parent=0 // pred_check
    _
  $region3: #{unet_forward.16} parent=0 // pred_check_branch
    %8 = sbr.rel (0) target = $region5
  $region4: #{unet_forward.16} parent=0 // pred_region
    _
  $region5: #{unet_forward.16} parent=0 // pred_fallthru
    _
  // Predicated region
  $region6: #{unet_forward.16} parent=0 // pred_check
    _
  $region7: #{unet_forward.16} parent=0 // pred_check_branch
    %10 = sbr.rel (0) target = $region9
  $region8: #{unet_forward.16} parent=0 // pred_region
    _
  $region9: #{unet_forward.16} parent=0 // pred_fallthru
    _
  %v12 = vld [vmem:[%s1] sm:$0xff]
  %v13 = vld [vmem:[%s1 + $0x8] sm:$0xf]
  %v14 = vld [vmem:[%s1 + $0xc] sm:$0xff]
  %v15 = vld [vmem:[%s1 + $0x14] sm:$0xf]
  %v16 = vld [vmem:[%s0] sm:$0xf]
  %v17 = vld [vmem:[%s0 + $0x4] sm:$0xf]
  %v18 = vld [vmem:[%s0 + $0x8] sm:$0xf]
  %v19 = vld [vmem:[%s0 + $0xc] sm:$0xf]
  %v20 = vld [vmem:[%s0 + $0x10] sm:$0xf]
  %v21 = vld [vmem:[%s0 + $0x14] sm:$0xf]
  %v22 = vld [vmem:[%s0 + $0x18] sm:$0xf]
  %v23 = vld [vmem:[%s0 + $0x1c] sm:$0xf]
  %v24 = vld [vmem:[%s0 + $0x20] sm:$0xf]
  %v25 = vld [vmem:[%s0 + $0x24] sm:$0xf]
  %v26 = vld [vmem:[%s0 + $0x28] sm:$0xf]
  %v27 = vld [vmem:[%s0 + $0x2c] sm:$0xf]
  %v28 = vld [vmem:[%s0 + $0x30] sm:$0xf]
  %v29 = vld [vmem:[%s0 + $0x34] sm:$0xf]
  %v30 = vld [vmem:[%s0 + $0x38] sm:$0xf]
  %v31 = vld [vmem:[%s0 + $0x3c] sm:$0xf]
  %v32 = vld [vmem:[%s0 + $0x40] sm:$0xf]
  %v33 = vld [vmem:[%s0 + $0x44] sm:$0xf]
  %v34 = vld [vmem:[%s0 + $0x48] sm:$0xf]
  %v35 = vld [vmem:[%s0 + $0x4c] sm:$0xf]
  %v36 = vld [vmem:[%s0 + $0x50] sm:$0xf]
  %v37 = vld [vmem:[%s0 + $0x54] sm:$0xf]
  %v38 = vld [vmem:[%s0 + $0x58] sm:$0xf]
  %v39 = vld [vmem:[%s0 + $0x5c] sm:$0xf]
  %v40 = vld [vmem:[%s0 + $0x60] sm:$0xf]
  %v41 = vld [vmem:[%s0 + $0x64] sm:$0xf]
  %v42 = vld [vmem:[%s0 + $0x68] sm:$0xf]
  %v43 = vld [vmem:[%s0 + $0x6c] sm:$0xf]
  %v44 = vld [vmem:[%s0 + $0x70] sm:$0xf]
  %v45 = vld [vmem:[%s0 + $0x74] sm:$0xf]
  %v46 = vld [vmem:[%s0 + $0x78] sm:$0xf]
  %v47 = vld [vmem:[%s0 + $0x7c] sm:$0xf]
  %v48 = vld [vmem:[%s0 + $0x80] sm:$0xf]
  %v49 = vld [vmem:[%s0 + $0x84] sm:$0xf]
  %v50 = vld [vmem:[%s0 + $0x88] sm:$0xf]
  %v51 = vld [vmem:[%s0 + $0x8c] sm:$0xf]
  %v56 = vunpack.c.l.b16 %v12
  %v57 = vunpack.c.h.b16 %v12
  %v58 = vunpack.c.l.b16 %v13
  %v59 = vunpack.c.l.b16 %v14
  %v60 = vunpack.c.h.b16 %v14
  %v61 = vunpack.c.l.b16 %v15
  %v62 = vpack.c.b16 %v59, %v56
  %v63 = vpack.c.b16 %v60, %v57
  %v64 = vpack.c.b16 %v61, %v58
  %v103 = vunpack.c.l.b16 %v16
  %v104 = vunpack.c.l.b16 %v17
  %v105 = vunpack.c.l.b16 %v18
  %v106 = vunpack.c.l.b16 %v19
  %v107 = vunpack.c.l.b16 %v20
  %v108 = vunpack.c.l.b16 %v21
  %v109 = vunpack.c.l.b16 %v22
  %v110 = vunpack.c.l.b16 %v23
  %v111 = vunpack.c.l.b16 %v24
  %v112 = vunpack.c.l.b16 %v25
  %v113 = vunpack.c.l.b16 %v26
  %v114 = vunpack.c.l.b16 %v27
  %v115 = vunpack.c.l.b16 %v28
  %v116 = vunpack.c.l.b16 %v29
  %v117 = vunpack.c.l.b16 %v30
  %v118 = vunpack.c.l.b16 %v31
  %v119 = vunpack.c.l.b16 %v32
  %v120 = vunpack.c.l.b16 %v33
  %v121 = vunpack.c.l.b16 %v34
  %v122 = vunpack.c.l.b16 %v35
  %v123 = vunpack.c.l.b16 %v36
  %v124 = vunpack.c.l.b16 %v37
  %v125 = vunpack.c.l.b16 %v38
  %v126 = vunpack.c.l.b16 %v39
  %v127 = vunpack.c.l.b16 %v40
  %v128 = vunpack.c.l.b16 %v41
  %v129 = vunpack.c.l.b16 %v42
  %v130 = vunpack.c.l.b16 %v43
  %v131 = vunpack.c.l.b16 %v44
  %v132 = vunpack.c.l.b16 %v45
  %v133 = vunpack.c.l.b16 %v46
  %v134 = vunpack.c.l.b16 %v47
  %v135 = vunpack.c.l.b16 %v48
  %v136 = vunpack.c.l.b16 %v49
  %v137 = vunpack.c.l.b16 %v50
  %v138 = vunpack.c.l.b16 %v51
  %v139 = vpack.c.b16 %v104, %v103
  %v140 = vpack.c.b16 %v106, %v105
  %v141 = vpack.c.b16 %v108, %v107
  %v142 = vpack.c.b16 %v110, %v109
  %v143 = vpack.c.b16 %v112, %v111
  %v144 = vpack.c.b16 %v114, %v113
  %v145 = vpack.c.b16 %v116, %v115
  %v146 = vpack.c.b16 %v118, %v117
  %v147 = vpack.c.b16 %v120, %v119
  %v148 = vpack.c.b16 %v122, %v121
  %v149 = vpack.c.b16 %v124, %v123
  %v150 = vpack.c.b16 %v126, %v125
  %v151 = vpack.c.b16 %v128, %v127
  %v152 = vpack.c.b16 %v130, %v129
  %v153 = vpack.c.b16 %v132, %v131
  %v154 = vpack.c.b16 %v134, %v133
  %v155 = vpack.c.b16 %v136, %v135
  %v156 = vpack.c.b16 %v138, %v137
  %vm175 = vcmask 261120
  %v177 = vsel %vm175, %v64, 0
  %179 = vmatprep.subr.bf16.mxu0 0
  %180 = vmatpush1.bf16.msra.mxu0 %v146
  %181 = vmatprep.subr.bf16.mxu0 0
  %182 = vmatpush1.bf16.msra.mxu0 %v145
  %183 = vmatprep.subr.bf16.mxu0 0
  %184 = vmatpush1.bf16.msra.mxu0 %v144
  %185 = vmatprep.subr.bf16.mxu0 0
  %186 = vmatpush1.bf16.msra.mxu0 %v143
  %187 = vmatprep.subr.bf16.mxu0 0
  %188 = vmatpush1.bf16.msra.mxu0 %v142
  %189 = vmatprep.subr.bf16.mxu0 0
  %190 = vmatpush1.bf16.msra.mxu0 %v141
  %191 = vmatprep.subr.bf16.mxu0 0
  %192 = vmatpush1.bf16.msra.mxu0 %v140
  %193 = vmatprep.subr.bf16.mxu0 0
  %194 = vmatpush1.bf16.msra.mxu0 %v139
  %195 = vmatprep.subr.bf16.mxu0 0
  %196 = vmatpush2.bf16.msra.mxu0 %v154
  %197 = vmatprep.subr.bf16.mxu0 0
  %198 = vmatpush2.bf16.msra.mxu0 %v153
  %199 = vmatprep.subr.bf16.mxu0 0
  %200 = vmatpush2.bf16.msra.mxu0 %v152
  %201 = vmatprep.subr.bf16.mxu0 0
  %202 = vmatpush2.bf16.msra.mxu0 %v151
  %203 = vmatprep.subr.bf16.mxu0 0
  %204 = vmatpush2.bf16.msra.mxu0 %v150
  %205 = vmatprep.subr.bf16.mxu0 0
  %206 = vmatpush2.bf16.msra.mxu0 %v149
  %207 = vmatprep.subr.bf16.mxu0 0
  %208 = vmatpush2.bf16.msra.mxu0 %v148
  %209 = vmatprep.subr.bf16.mxu0 0
  %210 = vmatpush2.bf16.msra.mxu0 %v147
  %211 = vmatprep.mubr.bf16.mxu0 %v63
  %212 = vmatmul.mubr.bf16.gmra.mxu0 %v62
  %v213 = vpop.f32.mrf.mxu0
  %v214 = vadd.f32 0.0, %v213
  %v215 = vpop.f32.mrf.mxu0
  %v216 = vpop.f32.mrf.mxu0
  %v217 = vadd.f32 0.0, %v216
  %v218 = vpop.f32.mrf.mxu0
  %219 = vdwg.mxu0
  %220 = vmatprep.subr.bf16.mxu0 0
  %221 = vmatpush1.bf16.msra.mxu0 0
  %222 = vmatprep.subr.bf16.mxu0 0
  %223 = vmatpush1.bf16.msra.mxu0 0
  %224 = vmatprep.subr.bf16.mxu0 0
  %225 = vmatpush1.bf16.msra.mxu0 0
  %226 = vmatprep.subr.bf16.mxu0 0
  %227 = vmatpush1.bf16.msra.mxu0 0
  %228 = vmatprep.subr.bf16.mxu0 0
  %229 = vmatpush1.bf16.msra.mxu0 0
  %230 = vmatprep.subr.bf16.mxu0 0
  %231 = vmatpush1.bf16.msra.mxu0 0
  %232 = vmatprep.subr.bf16.mxu0 0
  %233 = vmatpush1.bf16.msra.mxu0 %v156
  %234 = vmatprep.subr.bf16.mxu0 0
  %235 = vmatpush1.bf16.msra.mxu0 %v155
  %236 = vmatprep.subr.bf16.mxu0 0
  %237 = vmatpush2.bf16.msra.mxu0 0
  %238 = vmatprep.subr.bf16.mxu0 0
  %239 = vmatpush2.bf16.msra.mxu0 0
  %240 = vmatprep.subr.bf16.mxu0 0
  %241 = vmatpush2.bf16.msra.mxu0 0
  %242 = vmatprep.subr.bf16.mxu0 0
  %243 = vmatpush2.bf16.msra.mxu0 0
  %244 = vmatprep.subr.bf16.mxu0 0
  %245 = vmatpush2.bf16.msra.mxu0 0
  %246 = vmatprep.subr.bf16.mxu0 0
  %247 = vmatpush2.bf16.msra.mxu0 0
  %248 = vmatprep.subr.bf16.mxu0 0
  %249 = vmatpush2.bf16.msra.mxu0 0
  %250 = vmatprep.subr.bf16.mxu0 0
  %251 = vmatpush2.bf16.msra.mxu0 0
  %252 = vmatprep.mubr.bf16.mxu0 0
  %253 = vmatmul.mubr.bf16.gmra.mxu0 %v177
  %v254 = vpop.f32.mrf.mxu0
  %v255 = vadd.f32 %v214, %v254
  %v256 = vpop.f32.mrf.mxu0
  %v257 = vpop.f32.mrf.mxu0
  %v258 = vadd.f32 %v217, %v257
  %v259 = vpop.f32.mrf.mxu0
  %260 = vdwg.mxu0
  %v261 = vpack.c.bf16 %v258, %v255
  %v263 = vunpack.c.l.b16 %v261
  %v264 = vunpack.c.h.b16 %v261
  %v265 = vpack.c.b16 %v263, %v263
  %v266 = vpack.c.b16 %v264, %v264
  %vm269 = vcmask 11264
  %270 = vst.msk [vmem:[%s2] sm:$0xf] %vm269, %v265
  %271 = vst.msk [vmem:[%s2 + $0x4] sm:$0xf] %vm269, %v266
  // Predicated region
  $region10: #{unet_forward.16} parent=0 // pred_check
    _
  $region11: #{unet_forward.16} parent=0 // pred_check_branch
    %273 = sbr.rel (0) target = $region13
  $region12: #{unet_forward.16} parent=0 // pred_region
    _
  $region13: #{unet_forward.16} parent=0 // pred_fallthru
    _
  // Predicated region
  $region14: #{unet_forward.16} parent=0 // pred_check
    _
  $region15: #{unet_forward.16} parent=0 // pred_check_branch
    %275 = sbr.rel (0) target = $region17
  $region16: #{unet_forward.16} parent=0 // pred_region
    _
  $region17: #{unet_forward.16} parent=0 // pred_fallthru
    _

// kernel: unet_forward.17
$region0: #{unet_forward.17}
  #allocation0 [shape = 'u32[]', space=smem, size = 0x4, offset = 0x4, fixed_abs, tag = 'smem constant byte address 0x4 - core index']
  #allocation1 [shape = 'u32[144,128]{1,0:T(1,128)}', space=vmem, size = 0x12000, scoped, tag = 'internal scratch']
  %s0 = inlined_call_operand.vmem [shape: bf16[32,8], index: 0, kind: input, shape index: {}]
  %s1 = inlined_call_operand.vmem [shape: bf16[8,4], index: 1, kind: input, shape index: {}]
  %s2 = inlined_call_operand.vmem [shape: bf16[32,4], index: 2, kind: output, shape index: {0}]
  %s3 = inlined_call_operand.vmem [shape: f32[1,32,1], index: 3, kind: output, shape index: {1}]
  %s4 = inlined_call_operand.vmem [shape: f32[1,32,1], index: 4, kind: output, shape index: {2}]
  %5 = xla_tuple %s2, %s3, %s4
  %s6 = sld [smem:[#allocation0]]
  $region34: #{unet_forward.17} parent=0
    _
  %s8 = ssub.s32 1, %s6
  %s9 = scalar_select 0, %s8, %s6
  // Predicated region
  $region2: #{unet_forward.17} parent=0 // pred_check
    _
  $region3: #{unet_forward.17} parent=0 // pred_check_branch
    %11 = sbr.rel (0) target = $region5
  $region4: #{unet_forward.17} parent=0 // pred_region
    _
  $region5: #{unet_forward.17} parent=0 // pred_fallthru
    _
  // Predicated region
  $region6: #{unet_forward.17} parent=0 // pred_check
    _
  $region7: #{unet_forward.17} parent=0 // pred_check_branch
    %13 = sbr.rel (0) target = $region9
  $region8: #{unet_forward.17} parent=0 // pred_region
    _
  $region9: #{unet_forward.17} parent=0 // pred_fallthru
    _
  %v15 = vld [vmem:[%s0] sm:$0xf]
  %v16 = vld [vmem:[%s0 + $0x4] sm:$0xf]
  %v17 = vld [vmem:[%s0 + $0x8] sm:$0xf]
  %v18 = vld [vmem:[%s0 + $0xc] sm:$0xf]
  %v19 = vld [vmem:[%s1] sm:$0xf]
  %v24 = vunpack.c.l.b16 %v15
  %v25 = vunpack.c.l.b16 %v16
  %v26 = vunpack.c.l.b16 %v17
  %v27 = vunpack.c.l.b16 %v18
  %v28 = vpack.c.b16 %v25, %v24
  %v29 = vpack.c.b16 %v27, %v26
  %vm30 = vcmask 64512
  %v32 = vsel %vm30, %v28, 0
  %v35 = vsel %vm30, %v29, 0
  %vm37 = vcmask 1043456
  %v39 = vsel %vm37, %v19, 0
  %41 = vmatprep.subr.bf16.mxu0 0
  %42 = vmatpush1.bf16.msra.mxu0 0
  %43 = vmatprep.subr.bf16.mxu0 0
  %44 = vmatpush1.bf16.msra.mxu0 0
  %45 = vmatprep.subr.bf16.mxu0 0
  %46 = vmatpush1.bf16.msra.mxu0 0
  %47 = vmatprep.subr.bf16.mxu0 0
  %48 = vmatpush1.bf16.msra.mxu0 0
  %49 = vmatprep.subr.bf16.mxu0 0
  %50 = vmatpush1.bf16.msra.mxu0 0
  %51 = vmatprep.subr.bf16.mxu0 0
  %52 = vmatpush1.bf16.msra.mxu0 0
  %53 = vmatprep.subr.bf16.mxu0 0
  %54 = vmatpush1.bf16.msra.mxu0 0
  %55 = vmatprep.subr.bf16.mxu0 0
  %56 = vmatpush1.bf16.msra.mxu0 %v39
  %57 = vmatprep.subr.bf16.mxu0 0
  %58 = vmatpush2.bf16.msra.mxu0 0
  %59 = vmatprep.subr.bf16.mxu0 0
  %60 = vmatpush2.bf16.msra.mxu0 0
  %61 = vmatprep.subr.bf16.mxu0 0
  %62 = vmatpush2.bf16.msra.mxu0 0
  %63 = vmatprep.subr.bf16.mxu0 0
  %64 = vmatpush2.bf16.msra.mxu0 0
  %65 = vmatprep.subr.bf16.mxu0 0
  %66 = vmatpush2.bf16.msra.mxu0 0
  %67 = vmatprep.subr.bf16.mxu0 0
  %68 = vmatpush2.bf16.msra.mxu0 0
  %69 = vmatprep.subr.bf16.mxu0 0
  %70 = vmatpush2.bf16.msra.mxu0 0
  %71 = vmatprep.subr.bf16.mxu0 0
  %72 = vmatpush2.bf16.msra.mxu0 0
  %73 = vmatprep.mubr.bf16.mxu0 0
  %74 = vmatmul.mubr.bf16.gmra.mxu0 %v32
  %v75 = vpop.f32.mrf.mxu0
  %v76 = vadd.f32 0.0, %v75
  %v77 = vpop.f32.mrf.mxu0
  %v78 = vpop.f32.mrf.mxu0
  %v79 = vadd.f32 0.0, %v78
  %v80 = vpop.f32.mrf.mxu0
  %81 = vmatprep.mubr.bf16.mxu0 0
  %82 = vmatmul.mubr.bf16.gmra.mxu0 %v35
  %v83 = vpop.f32.mrf.mxu0
  %v84 = vadd.f32 0.0, %v83
  %v85 = vpop.f32.mrf.mxu0
  %v86 = vpop.f32.mrf.mxu0
  %v87 = vadd.f32 0.0, %v86
  %v88 = vpop.f32.mrf.mxu0
  %89 = vdwg.mxu0
  %vm90 = vcmask 31744
  %v91 = vsel %vm90, %v76, 0.0
  %92 = vadd.xlane.f32.xlu0 %v91
  %v93 = vpop.xlane.xlu0 %92
  %v94 = vsel %vm90, %v79, 0.0
  %95 = vadd.xlane.f32.xlu0 %v94
  %v96 = vpop.xlane.xlu0 %95
  %v97 = vsel %vm90, %v84, 0.0
  %98 = vadd.xlane.f32.xlu0 %v97
  %v99 = vpop.xlane.xlu0 %98
  %v100 = vsel %vm90, %v87, 0.0
  %101 = vadd.xlane.f32.xlu0 %v100
  %v102 = vpop.xlane.xlu0 %101
  %vm103 = vcmask 7168
  %104 = vst.msk [vmem:[%s3] sm:$0xff] %vm103, %v93
  %105 = vst.msk [vmem:[%s3 + $0x8] sm:$0xff] %vm103, %v96
  %106 = vst.msk [vmem:[%s3 + $0x10] sm:$0xff] %vm103, %v99
  %107 = vst.msk [vmem:[%s3 + $0x18] sm:$0xff] %vm103, %v102
  %v108 = vmul.f32 %v76, %v76
  %v109 = vmul.f32 %v79, %v79
  %v110 = vmul.f32 %v84, %v84
  %v111 = vmul.f32 %v87, %v87
  %v112 = vsel %vm90, %v108, 0.0
  %113 = vadd.xlane.f32.xlu0 %v112
  %v114 = vpop.xlane.xlu0 %113
  %v115 = vsel %vm90, %v109, 0.0
  %116 = vadd.xlane.f32.xlu0 %v115
  %v117 = vpop.xlane.xlu0 %116
  %v118 = vsel %vm90, %v110, 0.0
  %119 = vadd.xlane.f32.xlu0 %v118
  %v120 = vpop.xlane.xlu0 %119
  %v121 = vsel %vm90, %v111, 0.0
  %122 = vadd.xlane.f32.xlu0 %v121
  %v123 = vpop.xlane.xlu0 %122
  %124 = vst.msk [vmem:[%s4] sm:$0xff] %vm103, %v114
  %125 = vst.msk [vmem:[%s4 + $0x8] sm:$0xff] %vm103, %v117
  %126 = vst.msk [vmem:[%s4 + $0x10] sm:$0xff] %vm103, %v120
  %127 = vst.msk [vmem:[%s4 + $0x18] sm:$0xff] %vm103, %v123
  %v128 = vpack.c.bf16 %v79, %v76
  %v129 = vpack.c.bf16 %v87, %v84
  %v132 = vunpack.c.l.b16 %v128
  %v133 = vunpack.c.h.b16 %v128
  %v134 = vunpack.c.l.b16 %v129
  %v135 = vunpack.c.h.b16 %v129
  %v136 = vpack.c.b16 %v132, %v132
  %v137 = vpack.c.b16 %v133, %v133
  %v138 = vpack.c.b16 %v134, %v134
  %v139 = vpack.c.b16 %v135, %v135
  %vm144 = vcmask 27648
  %145 = vst.msk [vmem:[%s2] sm:$0xf] %vm144, %v136
  %146 = vst.msk [vmem:[%s2 + $0x4] sm:$0xf] %vm144, %v137
  %147 = vst.msk [vmem:[%s2 + $0x8] sm:$0xf] %vm144, %v138
  %148 = vst.msk [vmem:[%s2 + $0xc] sm:$0xf] %vm144, %v139
  // Predicated region
  $region10: #{unet_forward.17} parent=0 // pred_check
    _
  $region11: #{unet_forward.17} parent=0 // pred_check_branch
    %150 = sbr.rel (0) target = $region13
  $region12: #{unet_forward.17} parent=0 // pred_region
    _
  $region13: #{unet_forward.17} parent=0 // pred_fallthru
    _
  // Predicated region
  $region14: #{unet_forward.17} parent=0 // pred_check
    _
  $region15: #{unet_forward.17} parent=0 // pred_check_branch
    %152 = sbr.rel (0) target = $region17
  $region16: #{unet_forward.17} parent=0 // pred_region
    _
  $region17: #{unet_forward.17} parent=0 // pred_fallthru
    _
  // Predicated region
  $region18: #{unet_forward.17} parent=0 // pred_check
    _
  $region19: #{unet_forward.17} parent=0 // pred_check_branch
    %154 = sbr.rel (0) target = $region21
  $region20: #{unet_forward.17} parent=0 // pred_region
    _
  $region21: #{unet_forward.17} parent=0 // pred_fallthru
    _
  // Predicated region
  $region22: #{unet_forward.17} parent=0 // pred_check
    _
  $region23: #{unet_forward.17} parent=0 // pred_check_branch
    %156 = sbr.rel (0) target = $region25
  $region24: #{unet_forward.17} parent=0 // pred_region
    _
  $region25: #{unet_forward.17} parent=0 // pred_fallthru
    _
  // Predicated region
  $region26: #{unet_forward.17} parent=0 // pred_check
    _
  $region27: #{unet_forward.17} parent=0 // pred_check_branch
    %158 = sbr.rel (0) target = $region29
  $region28: #{unet_forward.17} parent=0 // pred_region
    _
  $region29: #{unet_forward.17} parent=0 // pred_fallthru
    _
  // Predicated region
  $region30: #{unet_forward.17} parent=0 // pred_check
    _
  $region31: #{unet_forward.17} parent=0 // pred_check_branch
    %160 = sbr.rel (0) target = $region33
  $region32: #{unet_forward.17} parent=0 // pred_region
    _
  $region33: #{unet_forward.17} parent=0 // pred_fallthru
    _

// kernel: unet_forward.19
$region0: #{unet_forward.19}
  #allocation0 [shape = 'u32[]', space=smem, size = 0x4, offset = 0x4, fixed_abs, tag = 'smem constant byte address 0x4 - core index']
  #allocation1 [shape = 'u32[144,128]{1,0:T(1,128)}', space=vmem, size = 0x12000, scoped, tag = 'internal scratch']
  %s0 = inlined_call_operand.vmem [shape: bf16[16,8], index: 0, kind: input, shape index: {}]
  %s1 = inlined_call_operand.vmem [shape: bf16[8,16], index: 1, kind: input, shape index: {}]
  %s2 = inlined_call_operand.vmem [shape: bf16[16,16], index: 2, kind: output, shape index: {0}]
  %s3 = inlined_call_operand.vmem [shape: f32[1,16,1], index: 3, kind: output, shape index: {1}]
  %s4 = inlined_call_operand.vmem [shape: f32[1,16,1], index: 4, kind: output, shape index: {2}]
  %5 = xla_tuple %s2, %s3, %s4
  %s6 = sld [smem:[#allocation0]]
  $region34: #{unet_forward.19} parent=0
    _
  %s8 = ssub.s32 1, %s6
  %s9 = scalar_select 0, %s8, %s6
  // Predicated region
  $region2: #{unet_forward.19} parent=0 // pred_check
    _
  $region3: #{unet_forward.19} parent=0 // pred_check_branch
    %11 = sbr.rel (0) target = $region5
  $region4: #{unet_forward.19} parent=0 // pred_region
    _
  $region5: #{unet_forward.19} parent=0 // pred_fallthru
    _
  // Predicated region
  $region6: #{unet_forward.19} parent=0 // pred_check
    _
  $region7: #{unet_forward.19} parent=0 // pred_check_branch
    %13 = sbr.rel (0) target = $region9
  $region8: #{unet_forward.19} parent=0 // pred_region
    _
  $region9: #{unet_forward.19} parent=0 // pred_fallthru
    _
  %v15 = vld [vmem:[%s0] sm:$0xf]
  %v16 = vld [vmem:[%s0 + $0x4] sm:$0xf]
  %v17 = vld [vmem:[%s1] sm:$0xf]
  %v20 = vunpack.c.l.b16 %v15
  %v21 = vunpack.c.l.b16 %v16
  %v22 = vpack.c.b16 %v21, %v20
  %vm23 = vcmask 64512
  %v25 = vsel %vm23, %v22, 0
  %vm27 = vcmask 1043456
  %v29 = vsel %vm27, %v17, 0
  %31 = vmatprep.subr.bf16.mxu0 0
  %32 = vmatpush1.bf16.msra.mxu0 0
  %33 = vmatprep.subr.bf16.mxu0 0
  %34 = vmatpush1.bf16.msra.mxu0 0
  %35 = vmatprep.subr.bf16.mxu0 0
  %36 = vmatpush1.bf16.msra.mxu0 0
  %37 = vmatprep.subr.bf16.mxu0 0
  %38 = vmatpush1.bf16.msra.mxu0 0
  %39 = vmatprep.subr.bf16.mxu0 0
  %40 = vmatpush1.bf16.msra.mxu0 0
  %41 = vmatprep.subr.bf16.mxu0 0
  %42 = vmatpush1.bf16.msra.mxu0 0
  %43 = vmatprep.subr.bf16.mxu0 0
  %44 = vmatpush1.bf16.msra.mxu0 0
  %45 = vmatprep.subr.bf16.mxu0 0
  %46 = vmatpush1.bf16.msra.mxu0 %v29
  %47 = vmatprep.subr.bf16.mxu0 0
  %48 = vmatpush2.bf16.msra.mxu0 0
  %49 = vmatprep.subr.bf16.mxu0 0
  %50 = vmatpush2.bf16.msra.mxu0 0
  %51 = vmatprep.subr.bf16.mxu0 0
  %52 = vmatpush2.bf16.msra.mxu0 0
  %53 = vmatprep.subr.bf16.mxu0 0
  %54 = vmatpush2.bf16.msra.mxu0 0
  %55 = vmatprep.subr.bf16.mxu0 0
  %56 = vmatpush2.bf16.msra.mxu0 0
  %57 = vmatprep.subr.bf16.mxu0 0
  %58 = vmatpush2.bf16.msra.mxu0 0
  %59 = vmatprep.subr.bf16.mxu0 0
  %60 = vmatpush2.bf16.msra.mxu0 0
  %61 = vmatprep.subr.bf16.mxu0 0
  %62 = vmatpush2.bf16.msra.mxu0 0
  %63 = vmatprep.mubr.bf16.mxu0 0
  %64 = vmatmul.mubr.bf16.gmra.mxu0 %v25
  %v65 = vpop.f32.mrf.mxu0
  %v66 = vadd.f32 0.0, %v65
  %v67 = vpop.f32.mrf.mxu0
  %v68 = vpop.f32.mrf.mxu0
  %v69 = vadd.f32 0.0, %v68
  %v70 = vpop.f32.mrf.mxu0
  %71 = vdwg.mxu0
  %vm72 = vcmask 130048
  %v73 = vsel %vm72, %v66, 0.0
  %74 = vadd.xlane.f32.xlu0 %v73
  %v75 = vpop.xlane.xlu0 %74
  %v76 = vsel %vm72, %v69, 0.0
  %77 = vadd.xlane.f32.xlu0 %v76
  %v78 = vpop.xlane.xlu0 %77
  %vm79 = vcmask 7168
  %80 = vst.msk [vmem:[%s3] sm:$0xff] %vm79, %v75
  %81 = vst.msk [vmem:[%s3 + $0x8] sm:$0xff] %vm79, %v78
  %v82 = vmul.f32 %v66, %v66
  %v83 = vmul.f32 %v69, %v69
  %v84 = vsel %vm72, %v82, 0.0
  %85 = vadd.xlane.f32.xlu0 %v84
  %v86 = vpop.xlane.xlu0 %85
  %v87 = vsel %vm72, %v83, 0.0
  %88 = vadd.xlane.f32.xlu0 %v87
  %v89 = vpop.xlane.xlu0 %88
  %90 = vst.msk [vmem:[%s4] sm:$0xff] %vm79, %v86
  %91 = vst.msk [vmem:[%s4 + $0x8] sm:$0xff] %vm79, %v89
  %v92 = vpack.c.bf16 %v69, %v66
  %v94 = vunpack.c.l.b16 %v92
  %v95 = vunpack.c.h.b16 %v92
  %v96 = vpack.c.b16 %v94, %v94
  %v97 = vpack.c.b16 %v95, %v95
  %vm100 = vcmask 125952
  %101 = vst.msk [vmem:[%s2] sm:$0xf] %vm100, %v96
  %102 = vst.msk [vmem:[%s2 + $0x4] sm:$0xf] %vm100, %v97
  // Predicated region
  $region10: #{unet_forward.19} parent=0 // pred_check
    _
  $region11: #{unet_forward.19} parent=0 // pred_check_branch
    %104 = sbr.rel (0) target = $region13
  $region12: #{unet_forward.19} parent=0 // pred_region
    _
  $region13: #{unet_forward.19} parent=0 // pred_fallthru
    _
  // Predicated region
  $region14: #{unet_forward.19} parent=0 // pred_check
    _
  $region15: #{unet_forward.19} parent=0 // pred_check_branch
    %106 = sbr.rel (0) target = $region17
  $region16: #{unet_forward.19} parent=0 // pred_region
    _
  $region17: #{unet_forward.19} parent=0 // pred_fallthru
    _
  // Predicated region
  $region18: #{unet_forward.19} parent=0 // pred_check
    _
  $region19: #{unet_forward.19} parent=0 // pred_check_branch
    %108 = sbr.rel (0) target = $region21
  $region20: #{unet_forward.19} parent=0 // pred_region
    _
  $region21: #{unet_forward.19} parent=0 // pred_fallthru
    _
  // Predicated region
  $region22: #{unet_forward.19} parent=0 // pred_check
    _
  $region23: #{unet_forward.19} parent=0 // pred_check_branch
    %110 = sbr.rel (0) target = $region25
  $region24: #{unet_forward.19} parent=0 // pred_region
    _
  $region25: #{unet_forward.19} parent=0 // pred_fallthru
    _
  // Predicated region
  $region26: #{unet_forward.19} parent=0 // pred_check
    _
  $region27: #{unet_forward.19} parent=0 // pred_check_branch
    %112 = sbr.rel (0) target = $region29
  $region28: #{unet_forward.19} parent=0 // pred_region
    _
  $region29: #{unet_forward.19} parent=0 // pred_fallthru
    _
  // Predicated region
  $region30: #{unet_forward.19} parent=0 // pred_check
    _
  $region31: #{unet_forward.19} parent=0 // pred_check_branch
    %114 = sbr.rel (0) target = $region33
  $region32: #{unet_forward.19} parent=0 // pred_region
    _
  $region33: #{unet_forward.19} parent=0 // pred_fallthru
    _

// kernel: unet_forward.18
$region0: #{unet_forward.18}
  #allocation0 [shape = 'u32[]', space=smem, size = 0x4, offset = 0x4, fixed_abs, tag = 'smem constant byte address 0x4 - core index']
  #allocation1 [shape = 'u32[144,128]{1,0:T(1,128)}', space=vmem, size = 0x12000, scoped, tag = 'internal scratch']
  %s0 = inlined_call_operand.vmem [shape: bf16[1,288,8], index: 0, kind: input, shape index: {}]
  %s1 = inlined_call_operand.vmem [shape: bf16[8,288], index: 1, kind: input, shape index: {}]
  %s2 = inlined_call_operand.vmem [shape: bf16[8,8], index: 2, kind: output, shape index: {}]
  %s3 = sld [smem:[#allocation0]]
  $region18: #{unet_forward.18} parent=0
    _
  %s5 = ssub.s32 1, %s3
  %s6 = scalar_select 0, %s5, %s3
  // Predicated region
  $region2: #{unet_forward.18} parent=0 // pred_check
    _
  $region3: #{unet_forward.18} parent=0 // pred_check_branch
    %8 = sbr.rel (0) target = $region5
  $region4: #{unet_forward.18} parent=0 // pred_region
    _
  $region5: #{unet_forward.18} parent=0 // pred_fallthru
    _
  // Predicated region
  $region6: #{unet_forward.18} parent=0 // pred_check
    _
  $region7: #{unet_forward.18} parent=0 // pred_check_branch
    %10 = sbr.rel (0) target = $region9
  $region8: #{unet_forward.18} parent=0 // pred_region
    _
  $region9: #{unet_forward.18} parent=0 // pred_fallthru
    _
  %v12 = vld [vmem:[%s1] sm:$0xff]
  %v13 = vld [vmem:[%s1 + $0x8] sm:$0xf]
  %v14 = vld [vmem:[%s0] sm:$0xf]
  %v15 = vld [vmem:[%s0 + $0x4] sm:$0xf]
  %v16 = vld [vmem:[%s0 + $0x8] sm:$0xf]
  %v17 = vld [vmem:[%s0 + $0xc] sm:$0xf]
  %v18 = vld [vmem:[%s0 + $0x10] sm:$0xf]
  %v19 = vld [vmem:[%s0 + $0x14] sm:$0xf]
  %v20 = vld [vmem:[%s0 + $0x18] sm:$0xf]
  %v21 = vld [vmem:[%s0 + $0x1c] sm:$0xf]
  %v22 = vld [vmem:[%s0 + $0x20] sm:$0xf]
  %v23 = vld [vmem:[%s0 + $0x24] sm:$0xf]
  %v24 = vld [vmem:[%s0 + $0x28] sm:$0xf]
  %v25 = vld [vmem:[%s0 + $0x2c] sm:$0xf]
  %v26 = vld [vmem:[%s0 + $0x30] sm:$0xf]
  %v27 = vld [vmem:[%s0 + $0x34] sm:$0xf]
  %v28 = vld [vmem:[%s0 + $0x38] sm:$0xf]
  %v29 = vld [vmem:[%s0 + $0x3c] sm:$0xf]
  %v30 = vld [vmem:[%s0 + $0x40] sm:$0xf]
  %v31 = vld [vmem:[%s0 + $0x44] sm:$0xf]
  %v32 = vld [vmem:[%s0 + $0x48] sm:$0xf]
  %v33 = vld [vmem:[%s0 + $0x4c] sm:$0xf]
  %v34 = vld [vmem:[%s0 + $0x50] sm:$0xf]
  %v35 = vld [vmem:[%s0 + $0x54] sm:$0xf]
  %v36 = vld [vmem:[%s0 + $0x58] sm:$0xf]
  %v37 = vld [vmem:[%s0 + $0x5c] sm:$0xf]
  %v38 = vld [vmem:[%s0 + $0x60] sm:$0xf]
  %v39 = vld [vmem:[%s0 + $0x64] sm:$0xf]
  %v40 = vld [vmem:[%s0 + $0x68] sm:$0xf]
  %v41 = vld [vmem:[%s0 + $0x6c] sm:$0xf]
  %v42 = vld [vmem:[%s0 + $0x70] sm:$0xf]
  %v43 = vld [vmem:[%s0 + $0x74] sm:$0xf]
  %v44 = vld [vmem:[%s0 + $0x78] sm:$0xf]
  %v45 = vld [vmem:[%s0 + $0x7c] sm:$0xf]
  %v46 = vld [vmem:[%s0 + $0x80] sm:$0xf]
  %v47 = vld [vmem:[%s0 + $0x84] sm:$0xf]
  %v48 = vld [vmem:[%s0 + $0x88] sm:$0xf]
  %v49 = vld [vmem:[%s0 + $0x8c] sm:$0xf]
  %v52 = vunpack.c.l.b16 %v12
  %v53 = vunpack.c.h.b16 %v12
  %v54 = vunpack.c.l.b16 %v13
  %v55 = vpack.c.b16 %v52, %v52
  %v56 = vpack.c.b16 %v53, %v53
  %v57 = vpack.c.b16 %v54, %v54
  %v96 = vunpack.c.l.b16 %v14
  %v97 = vunpack.c.l.b16 %v15
  %v98 = vunpack.c.l.b16 %v16
  %v99 = vunpack.c.l.b16 %v17
  %v100 = vunpack.c.l.b16 %v18
  %v101 = vunpack.c.l.b16 %v19
  %v102 = vunpack.c.l.b16 %v20
  %v103 = vunpack.c.l.b16 %v21
  %v104 = vunpack.c.l.b16 %v22
  %v105 = vunpack.c.l.b16 %v23
  %v106 = vunpack.c.l.b16 %v24
  %v107 = vunpack.c.l.b16 %v25
  %v108 = vunpack.c.l.b16 %v26
  %v109 = vunpack.c.l.b16 %v27
  %v110 = vunpack.c.l.b16 %v28
  %v111 = vunpack.c.l.b16 %v29
  %v112 = vunpack.c.l.b16 %v30
  %v113 = vunpack.c.l.b16 %v31
  %v114 = vunpack.c.l.b16 %v32
  %v115 = vunpack.c.l.b16 %v33
  %v116 = vunpack.c.l.b16 %v34
  %v117 = vunpack.c.l.b16 %v35
  %v118 = vunpack.c.l.b16 %v36
  %v119 = vunpack.c.l.b16 %v37
  %v120 = vunpack.c.l.b16 %v38
  %v121 = vunpack.c.l.b16 %v39
  %v122 = vunpack.c.l.b16 %v40
  %v123 = vunpack.c.l.b16 %v41
  %v124 = vunpack.c.l.b16 %v42
  %v125 = vunpack.c.l.b16 %v43
  %v126 = vunpack.c.l.b16 %v44
  %v127 = vunpack.c.l.b16 %v45
  %v128 = vunpack.c.l.b16 %v46
  %v129 = vunpack.c.l.b16 %v47
  %v130 = vunpack.c.l.b16 %v48
  %v131 = vunpack.c.l.b16 %v49
  %v132 = vpack.c.b16 %v97, %v96
  %v133 = vpack.c.b16 %v99, %v98
  %v134 = vpack.c.b16 %v101, %v100
  %v135 = vpack.c.b16 %v103, %v102
  %v136 = vpack.c.b16 %v105, %v104
  %v137 = vpack.c.b16 %v107, %v106
  %v138 = vpack.c.b16 %v109, %v108
  %v139 = vpack.c.b16 %v111, %v110
  %v140 = vpack.c.b16 %v113, %v112
  %v141 = vpack.c.b16 %v115, %v114
  %v142 = vpack.c.b16 %v117, %v116
  %v143 = vpack.c.b16 %v119, %v118
  %v144 = vpack.c.b16 %v121, %v120
  %v145 = vpack.c.b16 %v123, %v122
  %v146 = vpack.c.b16 %v125, %v124
  %v147 = vpack.c.b16 %v127, %v126
  %v148 = vpack.c.b16 %v129, %v128
  %v149 = vpack.c.b16 %v131, %v130
  %vm168 = vcmask 261120
  %v170 = vsel %vm168, %v57, 0
  %172 = vmatprep.subr.bf16.mxu0 0
  %173 = vmatpush1.bf16.msra.mxu0 %v139
  %174 = vmatprep.subr.bf16.mxu0 0
  %175 = vmatpush1.bf16.msra.mxu0 %v138
  %176 = vmatprep.subr.bf16.mxu0 0
  %177 = vmatpush1.bf16.msra.mxu0 %v137
  %178 = vmatprep.subr.bf16.mxu0 0
  %179 = vmatpush1.bf16.msra.mxu0 %v136
  %180 = vmatprep.subr.bf16.mxu0 0
  %181 = vmatpush1.bf16.msra.mxu0 %v135
  %182 = vmatprep.subr.bf16.mxu0 0
  %183 = vmatpush1.bf16.msra.mxu0 %v134
  %184 = vmatprep.subr.bf16.mxu0 0
  %185 = vmatpush1.bf16.msra.mxu0 %v133
  %186 = vmatprep.subr.bf16.mxu0 0
  %187 = vmatpush1.bf16.msra.mxu0 %v132
  %188 = vmatprep.subr.bf16.mxu0 0
  %189 = vmatpush2.bf16.msra.mxu0 %v147
  %190 = vmatprep.subr.bf16.mxu0 0
  %191 = vmatpush2.bf16.msra.mxu0 %v146
  %192 = vmatprep.subr.bf16.mxu0 0
  %193 = vmatpush2.bf16.msra.mxu0 %v145
  %194 = vmatprep.subr.bf16.mxu0 0
  %195 = vmatpush2.bf16.msra.mxu0 %v144
  %196 = vmatprep.subr.bf16.mxu0 0
  %197 = vmatpush2.bf16.msra.mxu0 %v143
  %198 = vmatprep.subr.bf16.mxu0 0
  %199 = vmatpush2.bf16.msra.mxu0 %v142
  %200 = vmatprep.subr.bf16.mxu0 0
  %201 = vmatpush2.bf16.msra.mxu0 %v141
  %202 = vmatprep.subr.bf16.mxu0 0
  %203 = vmatpush2.bf16.msra.mxu0 %v140
  %204 = vmatprep.mubr.bf16.mxu0 %v56
  %205 = vmatmul.mubr.bf16.gmra.mxu0 %v55
  %v206 = vpop.f32.mrf.mxu0
  %v207 = vadd.f32 0.0, %v206
  %v208 = vpop.f32.mrf.mxu0
  %v209 = vpop.f32.mrf.mxu0
  %v210 = vpop.f32.mrf.mxu0
  %211 = vdwg.mxu0
  %212 = vmatprep.subr.bf16.mxu0 0
  %213 = vmatpush1.bf16.msra.mxu0 0
  %214 = vmatprep.subr.bf16.mxu0 0
  %215 = vmatpush1.bf16.msra.mxu0 0
  %216 = vmatprep.subr.bf16.mxu0 0
  %217 = vmatpush1.bf16.msra.mxu0 0
  %218 = vmatprep.subr.bf16.mxu0 0
  %219 = vmatpush1.bf16.msra.mxu0 0
  %220 = vmatprep.subr.bf16.mxu0 0
  %221 = vmatpush1.bf16.msra.mxu0 0
  %222 = vmatprep.subr.bf16.mxu0 0
  %223 = vmatpush1.bf16.msra.mxu0 0
  %224 = vmatprep.subr.bf16.mxu0 0
  %225 = vmatpush1.bf16.msra.mxu0 %v149
  %226 = vmatprep.subr.bf16.mxu0 0
  %227 = vmatpush1.bf16.msra.mxu0 %v148
  %228 = vmatprep.subr.bf16.mxu0 0
  %229 = vmatpush2.bf16.msra.mxu0 0
  %230 = vmatprep.subr.bf16.mxu0 0
  %231 = vmatpush2.bf16.msra.mxu0 0
  %232 = vmatprep.subr.bf16.mxu0 0
  %233 = vmatpush2.bf16.msra.mxu0 0
  %234 = vmatprep.subr.bf16.mxu0 0
  %235 = vmatpush2.bf16.msra.mxu0 0
  %236 = vmatprep.subr.bf16.mxu0 0
  %237 = vmatpush2.bf16.msra.mxu0 0
  %238 = vmatprep.subr.bf16.mxu0 0
  %239 = vmatpush2.bf16.msra.mxu0 0
  %240 = vmatprep.subr.bf16.mxu0 0
  %241 = vmatpush2.bf16.msra.mxu0 0
  %242 = vmatprep.subr.bf16.mxu0 0
  %243 = vmatpush2.bf16.msra.mxu0 0
  %244 = vmatprep.mubr.bf16.mxu0 0
  %245 = vmatmul.mubr.bf16.gmra.mxu0 %v170
  %v246 = vpop.f32.mrf.mxu0
  %v247 = vadd.f32 %v207, %v246
  %v248 = vpop.f32.mrf.mxu0
  %v249 = vpop.f32.mrf.mxu0
  %v250 = vpop.f32.mrf.mxu0
  %251 = vdwg.mxu0
  %v252 = vpack.c.bf16 %v247, %v247
  %vm253 = vcmask 60416
  %254 = vst.msk [vmem:[%s2] sm:$0xf] %vm253, %v252
  // Predicated region
  $region10: #{unet_forward.18} parent=0 // pred_check
    _
  $region11: #{unet_forward.18} parent=0 // pred_check_branch
    %256 = sbr.rel (0) target = $region13
  $region12: #{unet_forward.18} parent=0 // pred_region
    _
  $region13: #{unet_forward.18} parent=0 // pred_fallthru
    _
  // Predicated region
  $region14: #{unet_forward.18} parent=0 // pred_check
    _
  $region15: #{unet_forward.18} parent=0 // pred_check_branch
    %258 = sbr.rel (0) target = $region17
  $region16: #{unet_forward.18} parent=0 // pred_region
    _
  $region17: #{unet_forward.18} parent=0 // pred_fallthru
    _

// kernel: unet_forward.21
$region0: #{unet_forward.21}
  #allocation0 [shape = 'u32[]', space=smem, size = 0x4, offset = 0x4, fixed_abs, tag = 'smem constant byte address 0x4 - core index']
  #allocation1 [shape = 'u32[144,128]{1,0:T(1,128)}', space=vmem, size = 0x12000, scoped, tag = 'internal scratch']
  %s0 = inlined_call_operand.vmem [shape: bf16[8,16], index: 0, kind: input, shape index: {}]
  %s1 = inlined_call_operand.vmem [shape: bf16[16,64], index: 1, kind: input, shape index: {}]
  %s2 = inlined_call_operand.vmem [shape: bf16[8,64], index: 2, kind: output, shape index: {0}]
  %s3 = inlined_call_operand.vmem [shape: f32[1,8,1], index: 3, kind: output, shape index: {1}]
  %s4 = inlined_call_operand.vmem [shape: f32[1,8,1], index: 4, kind: output, shape index: {2}]
  %5 = xla_tuple %s2, %s3, %s4
  %s6 = sld [smem:[#allocation0]]
  $region34: #{unet_forward.21} parent=0
    _
  %s8 = ssub.s32 1, %s6
  %s9 = scalar_select 0, %s8, %s6
  // Predicated region
  $region2: #{unet_forward.21} parent=0 // pred_check
    _
  $region3: #{unet_forward.21} parent=0 // pred_check_branch
    %11 = sbr.rel (0) target = $region5
  $region4: #{unet_forward.21} parent=0 // pred_region
    _
  $region5: #{unet_forward.21} parent=0 // pred_fallthru
    _
  // Predicated region
  $region6: #{unet_forward.21} parent=0 // pred_check
    _
  $region7: #{unet_forward.21} parent=0 // pred_check_branch
    %13 = sbr.rel (0) target = $region9
  $region8: #{unet_forward.21} parent=0 // pred_region
    _
  $region9: #{unet_forward.21} parent=0 // pred_fallthru
    _
  %v15 = vld [vmem:[%s0] sm:$0xf]
  %v16 = vld [vmem:[%s1] sm:$0xf]
  %v17 = vld [vmem:[%s1 + $0x4] sm:$0xf]
  %v20 = vunpack.c.l.b16 %v16
  %v21 = vunpack.c.l.b16 %v17
  %v22 = vpack.c.b16 %v21, %v20
  %vm24 = vcmask 130048
  %v26 = vsel %vm24, %v15, 0
  %28 = vmatprep.subr.bf16.mxu0 0
  %29 = vmatpush1.bf16.msra.mxu0 0
  %30 = vmatprep.subr.bf16.mxu0 0
  %31 = vmatpush1.bf16.msra.mxu0 0
  %32 = vmatprep.subr.bf16.mxu0 0
  %33 = vmatpush1.bf16.msra.mxu0 0
  %34 = vmatprep.subr.bf16.mxu0 0
  %35 = vmatpush1.bf16.msra.mxu0 0
  %36 = vmatprep.subr.bf16.mxu0 0
  %37 = vmatpush1.bf16.msra.mxu0 0
  %38 = vmatprep.subr.bf16.mxu0 0
  %39 = vmatpush1.bf16.msra.mxu0 0
  %40 = vmatprep.subr.bf16.mxu0 0
  %41 = vmatpush1.bf16.msra.mxu0 0
  %42 = vmatprep.subr.bf16.mxu0 0
  %43 = vmatpush1.bf16.msra.mxu0 %v22
  %44 = vmatprep.subr.bf16.mxu0 0
  %45 = vmatpush2.bf16.msra.mxu0 0
  %46 = vmatprep.subr.bf16.mxu0 0
  %47 = vmatpush2.bf16.msra.mxu0 0
  %48 = vmatprep.subr.bf16.mxu0 0
  %49 = vmatpush2.bf16.msra.mxu0 0
  %50 = vmatprep.subr.bf16.mxu0 0
  %51 = vmatpush2.bf16.msra.mxu0 0
  %52 = vmatprep.subr.bf16.mxu0 0
  %53 = vmatpush2.bf16.msra.mxu0 0
  %54 = vmatprep.subr.bf16.mxu0 0
  %55 = vmatpush2.bf16.msra.mxu0 0
  %56 = vmatprep.subr.bf16.mxu0 0
  %57 = vmatpush2.bf16.msra.mxu0 0
  %58 = vmatprep.subr.bf16.mxu0 0
  %59 = vmatpush2.bf16.msra.mxu0 0
  %60 = vmatprep.mubr.bf16.mxu0 0
  %61 = vmatmul.mubr.bf16.gmra.mxu0 %v26
  %v62 = vpop.f32.mrf.mxu0
  %v63 = vadd.f32 0.0, %v62
  %v64 = vpop.f32.mrf.mxu0
  %v65 = vpop.f32.mrf.mxu0
  %v66 = vpop.f32.mrf.mxu0
  %67 = vdwg.mxu0
  %vm68 = vcmask 523264
  %v69 = vsel %vm68, %v63, 0.0
  %70 = vadd.xlane.f32.xlu0 %v69
  %v71 = vpop.xlane.xlu0 %70
  %vm72 = vcmask 7168
  %73 = vst.msk [vmem:[%s3] sm:$0xff] %vm72, %v71
  %v74 = vmul.f32 %v63, %v63
  %v75 = vsel %vm68, %v74, 0.0
  %76 = vadd.xlane.f32.xlu0 %v75
  %v77 = vpop.xlane.xlu0 %76
  %78 = vst.msk [vmem:[%s4] sm:$0xff] %vm72, %v77
  %v79 = vpack.c.bf16 %v63, %v63
  %vm80 = vcmask 519168
  %81 = vst.msk [vmem:[%s2] sm:$0xf] %vm80, %v79
  // Predicated region
  $region10: #{unet_forward.21} parent=0 // pred_check
    _
  $region11: #{unet_forward.21} parent=0 // pred_check_branch
    %83 = sbr.rel (0) target = $region13
  $region12: #{unet_forward.21} parent=0 // pred_region
    _
  $region13: #{unet_forward.21} parent=0 // pred_fallthru
    _
  // Predicated region
  $region14: #{unet_forward.21} parent=0 // pred_check
    _
  $region15: #{unet_forward.21} parent=0 // pred_check_branch
    %85 = sbr.rel (0) target = $region17
  $region16: #{unet_forward.21} parent=0 // pred_region
    _
  $region17: #{unet_forward.21} parent=0 // pred_fallthru
    _
  // Predicated region
  $region18: #{unet_forward.21} parent=0 // pred_check
    _
  $region19: #{unet_forward.21} parent=0 // pred_check_branch
    %87 = sbr.rel (0) target = $region21
  $region20: #{unet_forward.21} parent=0 // pred_region
    _
  $region21: #{unet_forward.21} parent=0 // pred_fallthru
    _
  // Predicated region
  $region22: #{unet_forward.21} parent=0 // pred_check
    _
  $region23: #{unet_forward.21} parent=0 // pred_check_branch
    %89 = sbr.rel (0) target = $region25
  $region24: #{unet_forward.21} parent=0 // pred_region
    _
  $region25: #{unet_forward.21} parent=0 // pred_fallthru
    _
  // Predicated region
  $region26: #{unet_forward.21} parent=0 // pred_check
    _
  $region27: #{unet_forward.21} parent=0 // pred_check_branch
    %91 = sbr.rel (0) target = $region29
  $region28: #{unet_forward.21} parent=0 // pred_region
    _
  $region29: #{unet_forward.21} parent=0 // pred_fallthru
    _
  // Predicated region
  $region30: #{unet_forward.21} parent=0 // pred_check
    _
  $region31: #{unet_forward.21} parent=0 // pred_check_branch
    %93 = sbr.rel (0) target = $region33
  $region32: #{unet_forward.21} parent=0 // pred_region
    _
  $region33: #{unet_forward.21} parent=0 // pred_fallthru
    _

// kernel: unet_forward.20
$region0: #{unet_forward.20}
  #allocation0 [shape = 'u32[]', space=smem, size = 0x4, offset = 0x4, fixed_abs, tag = 'smem constant byte address 0x4 - core index']
  #allocation1 [shape = 'u32[144,128]{1,0:T(1,128)}', space=vmem, size = 0x12000, scoped, tag = 'internal scratch']
  %s0 = inlined_call_operand.vmem [shape: bf16[1,144,32], index: 0, kind: input, shape index: {}]
  %s1 = inlined_call_operand.vmem [shape: bf16[4,144], index: 1, kind: input, shape index: {}]
  %s2 = inlined_call_operand.vmem [shape: bf16[4,32], index: 2, kind: output, shape index: {}]
  %s3 = sld [smem:[#allocation0]]
  $region18: #{unet_forward.20} parent=0
    _
  %s5 = ssub.s32 1, %s3
  %s6 = scalar_select 0, %s5, %s3
  // Predicated region
  $region2: #{unet_forward.20} parent=0 // pred_check
    _
  $region3: #{unet_forward.20} parent=0 // pred_check_branch
    %8 = sbr.rel (0) target = $region5
  $region4: #{unet_forward.20} parent=0 // pred_region
    _
  $region5: #{unet_forward.20} parent=0 // pred_fallthru
    _
  // Predicated region
  $region6: #{unet_forward.20} parent=0 // pred_check
    _
  $region7: #{unet_forward.20} parent=0 // pred_check_branch
    %10 = sbr.rel (0) target = $region9
  $region8: #{unet_forward.20} parent=0 // pred_region
    _
  $region9: #{unet_forward.20} parent=0 // pred_fallthru
    _
  %v12 = vld [vmem:[%s1] sm:$0xf]
  %v13 = vld [vmem:[%s0] sm:$0xf]
  %v14 = vld [vmem:[%s0 + $0x4] sm:$0xf]
  %v15 = vld [vmem:[%s0 + $0x8] sm:$0xf]
  %v16 = vld [vmem:[%s0 + $0xc] sm:$0xf]
  %v17 = vld [vmem:[%s0 + $0x10] sm:$0xf]
  %v18 = vld [vmem:[%s0 + $0x14] sm:$0xf]
  %v19 = vld [vmem:[%s0 + $0x18] sm:$0xf]
  %v20 = vld [vmem:[%s0 + $0x1c] sm:$0xf]
  %v21 = vld [vmem:[%s0 + $0x20] sm:$0xf]
  %v22 = vld [vmem:[%s0 + $0x24] sm:$0xf]
  %v23 = vld [vmem:[%s0 + $0x28] sm:$0xf]
  %v24 = vld [vmem:[%s0 + $0x2c] sm:$0xf]
  %v25 = vld [vmem:[%s0 + $0x30] sm:$0xf]
  %v26 = vld [vmem:[%s0 + $0x34] sm:$0xf]
  %v27 = vld [vmem:[%s0 + $0x38] sm:$0xf]
  %v28 = vld [vmem:[%s0 + $0x3c] sm:$0xf]
  %v29 = vld [vmem:[%s0 + $0x40] sm:$0xf]
  %v30 = vld [vmem:[%s0 + $0x44] sm:$0xf]
  %v33 = vunpack.c.l.s4 1983009808
  %v34 = vunpack.c.0.s8 %v33
  %v35 = vlaneseq
  %v36 = vshrl.u32 %v35, 7
  %v37 = vsub.s32 %v34, %v36
  %v38 = vrot.slane %v12, %v37
  %v39 = vcombine.high %v38, %v38
  %v59 = vunpack.c.l.b16 %v13
  %v60 = vunpack.c.l.b16 %v14
  %v61 = vunpack.c.l.b16 %v15
  %v62 = vunpack.c.l.b16 %v16
  %v63 = vunpack.c.l.b16 %v17
  %v64 = vunpack.c.l.b16 %v18
  %v65 = vunpack.c.l.b16 %v19
  %v66 = vunpack.c.l.b16 %v20
  %v67 = vunpack.c.l.b16 %v21
  %v68 = vunpack.c.l.b16 %v22
  %v69 = vunpack.c.l.b16 %v23
  %v70 = vunpack.c.l.b16 %v24
  %v71 = vunpack.c.l.b16 %v25
  %v72 = vunpack.c.l.b16 %v26
  %v73 = vunpack.c.l.b16 %v27
  %v74 = vunpack.c.l.b16 %v28
  %v75 = vunpack.c.l.b16 %v29
  %v76 = vunpack.c.l.b16 %v30
  %v77 = vpack.c.b16 %v60, %v59
  %v78 = vpack.c.b16 %v62, %v61
  %v79 = vpack.c.b16 %v64, %v63
  %v80 = vpack.c.b16 %v66, %v65
  %v81 = vpack.c.b16 %v68, %v67
  %v82 = vpack.c.b16 %v70, %v69
  %v83 = vpack.c.b16 %v72, %v71
  %v84 = vpack.c.b16 %v74, %v73
  %v85 = vpack.c.b16 %v76, %v75
  %vm95 = vcmask 130048
  %v97 = vsel %vm95, %v39, 0
  %99 = vmatprep.subr.bf16.mxu0 0
  %100 = vmatpush1.bf16.msra.mxu0 %v84
  %101 = vmatprep.subr.bf16.mxu0 0
  %102 = vmatpush1.bf16.msra.mxu0 %v83
  %103 = vmatprep.subr.bf16.mxu0 0
  %104 = vmatpush1.bf16.msra.mxu0 %v82
  %105 = vmatprep.subr.bf16.mxu0 0
  %106 = vmatpush1.bf16.msra.mxu0 %v81
  %107 = vmatprep.subr.bf16.mxu0 0
  %108 = vmatpush1.bf16.msra.mxu0 %v80
  %109 = vmatprep.subr.bf16.mxu0 0
  %110 = vmatpush1.bf16.msra.mxu0 %v79
  %111 = vmatprep.subr.bf16.mxu0 0
  %112 = vmatpush1.bf16.msra.mxu0 %v78
  %113 = vmatprep.subr.bf16.mxu0 0
  %114 = vmatpush1.bf16.msra.mxu0 %v77
  %115 = vmatprep.subr.bf16.mxu0 0
  %116 = vmatpush2.bf16.msra.mxu0 0
  %117 = vmatprep.subr.bf16.mxu0 0
  %118 = vmatpush2.bf16.msra.mxu0 0
  %119 = vmatprep.subr.bf16.mxu0 0
  %120 = vmatpush2.bf16.msra.mxu0 0
  %121 = vmatprep.subr.bf16.mxu0 0
  %122 = vmatpush2.bf16.msra.mxu0 0
  %123 = vmatprep.subr.bf16.mxu0 0
  %124 = vmatpush2.bf16.msra.mxu0 0
  %125 = vmatprep.subr.bf16.mxu0 0
  %126 = vmatpush2.bf16.msra.mxu0 0
  %127 = vmatprep.subr.bf16.mxu0 0
  %128 = vmatpush2.bf16.msra.mxu0 0
  %129 = vmatprep.subr.bf16.mxu0 0
  %130 = vmatpush2.bf16.msra.mxu0 %v85
  %131 = vmatprep.mubr.bf16.mxu0 %v97
  %132 = vmatmul.mubr.bf16.gmra.mxu0 %v38
  %v133 = vpop.f32.mrf.mxu0
  %v134 = vadd.f32 0.0, %v133
  %v135 = vpop.f32.mrf.mxu0
  %v136 = vpop.f32.mrf.mxu0
  %v137 = vpop.f32.mrf.mxu0
  %138 = vdwg.mxu0
  %v139 = vpack.c.bf16 %v134, %v134
  %vm140 = vcmask 254976
  %141 = vst.msk [vmem:[%s2] sm:$0x3] %vm140, %v139
  // Predicated region
  $region10: #{unet_forward.20} parent=0 // pred_check
    _
  $region11: #{unet_forward.20} parent=0 // pred_check_branch
    %143 = sbr.rel (0) target = $region13
  $region12: #{unet_forward.20} parent=0 // pred_region
    _
  $region13: #{unet_forward.20} parent=0 // pred_fallthru
    _
  // Predicated region
  $region14: #{unet_forward.20} parent=0 // pred_check
    _
  $region15: #{unet_forward.20} parent=0 // pred_check_branch
    %145 = sbr.rel (0) target = $region17
  $region16: #{unet_forward.20} parent=0 // pred_region
    _
  $region17: #{unet_forward.20} parent=0 // pred_fallthru
    _

// kernel: unet_forward.22
$region0: #{unet_forward.22}
  #allocation0 [shape = 'u32[]', space=smem, size = 0x4, offset = 0x4, fixed_abs, tag = 'smem constant byte address 0x4 - core index']
  #allocation1 [shape = 'u32[144,128]{1,0:T(1,128)}', space=vmem, size = 0x12000, scoped, tag = 'internal scratch']
  %s0 = inlined_call_operand.vmem [shape: bf16[1,72,128], index: 0, kind: input, shape index: {}]
  %s1 = inlined_call_operand.vmem [shape: bf16[4,72], index: 1, kind: input, shape index: {}]
  %s2 = inlined_call_operand.vmem [shape: f32[4,1], index: 2, kind: input, shape index: {}]
  %s3 = inlined_call_operand.vmem [shape: bf16[4,128], index: 3, kind: output, shape index: {}]
  %s4 = sld [smem:[#allocation0]]
  $region22: #{unet_forward.22} parent=0
    _
  %s6 = ssub.s32 1, %s4
  %s7 = scalar_select 0, %s6, %s4
  // Predicated region
  $region2: #{unet_forward.22} parent=0 // pred_check
    _
  $region3: #{unet_forward.22} parent=0 // pred_check_branch
    %9 = sbr.rel (0) target = $region5
  $region4: #{unet_forward.22} parent=0 // pred_region
    _
  $region5: #{unet_forward.22} parent=0 // pred_fallthru
    _
  // Predicated region
  $region6: #{unet_forward.22} parent=0 // pred_check
    _
  $region7: #{unet_forward.22} parent=0 // pred_check_branch
    %11 = sbr.rel (0) target = $region9
  $region8: #{unet_forward.22} parent=0 // pred_region
    _
  $region9: #{unet_forward.22} parent=0 // pred_fallthru
    _
  // Predicated region
  $region10: #{unet_forward.22} parent=0 // pred_check
    _
  $region11: #{unet_forward.22} parent=0 // pred_check_branch
    %13 = sbr.rel (0) target = $region13
  $region12: #{unet_forward.22} parent=0 // pred_region
    _
  $region13: #{unet_forward.22} parent=0 // pred_fallthru
    _
  %v15 = vld [vmem:[%s1] sm:$0x3]
  %v16 = vld [vmem:[%s0] sm:$0xf]
  %v17 = vld [vmem:[%s0 + $0x4] sm:$0xf]
  %v18 = vld [vmem:[%s0 + $0x8] sm:$0xf]
  %v19 = vld [vmem:[%s0 + $0xc] sm:$0xf]
  %v20 = vld [vmem:[%s0 + $0x10] sm:$0xf]
  %v21 = vld [vmem:[%s0 + $0x14] sm:$0xf]
  %v22 = vld [vmem:[%s0 + $0x18] sm:$0xf]
  %v23 = vld [vmem:[%s0 + $0x1c] sm:$0xf]
  %v24 = vld [vmem:[%s0 + $0x20] sm:$0xf]
  %v25 = vld [vmem:[%s2] sm:$0xf]
  %27 = vset.pattern.permute.xlu0 0
  %28 = vperm.xlu0 %27, %v25
  %v29 = vpop.permute.xlu0 %28
  %v40 = vunpack.c.l.b16 %v16
  %v41 = vunpack.c.l.b16 %v17
  %v42 = vunpack.c.l.b16 %v18
  %v43 = vunpack.c.l.b16 %v19
  %v44 = vunpack.c.l.b16 %v20
  %v45 = vunpack.c.l.b16 %v21
  %v46 = vunpack.c.l.b16 %v22
  %v47 = vunpack.c.l.b16 %v23
  %v48 = vunpack.c.l.b16 %v24
  %v49 = vpack.c.b16 %v41, %v40
  %v50 = vpack.c.b16 %v43, %v42
  %v51 = vpack.c.b16 %v45, %v44
  %v52 = vpack.c.b16 %v47, %v46
  %v53 = vpack.c.b16 %v48, %v48
  %vm58 = vcmask 588800
  %v60 = vsel %vm58, %v15, 0
  %vm62 = vcmask 1043456
  %v64 = vsel %vm62, %v53, 0
  %66 = vmatprep.subr.bf16.mxu0 0
  %67 = vmatpush1.bf16.msra.mxu0 0
  %68 = vmatprep.subr.bf16.mxu0 0
  %69 = vmatpush1.bf16.msra.mxu0 0
  %70 = vmatprep.subr.bf16.mxu0 0
  %71 = vmatpush1.bf16.msra.mxu0 0
  %72 = vmatprep.subr.bf16.mxu0 0
  %73 = vmatpush1.bf16.msra.mxu0 %v64
  %74 = vmatprep.subr.bf16.mxu0 0
  %75 = vmatpush1.bf16.msra.mxu0 %v52
  %76 = vmatprep.subr.bf16.mxu0 0
  %77 = vmatpush1.bf16.msra.mxu0 %v51
  %78 = vmatprep.subr.bf16.mxu0 0
  %79 = vmatpush1.bf16.msra.mxu0 %v50
  %80 = vmatprep.subr.bf16.mxu0 0
  %81 = vmatpush1.bf16.msra.mxu0 %v49
  %82 = vmatprep.subr.bf16.mxu0 0
  %83 = vmatpush2.bf16.msra.mxu0 0
  %84 = vmatprep.subr.bf16.mxu0 0
  %85 = vmatpush2.bf16.msra.mxu0 0
  %86 = vmatprep.subr.bf16.mxu0 0
  %87 = vmatpush2.bf16.msra.mxu0 0
  %88 = vmatprep.subr.bf16.mxu0 0
  %89 = vmatpush2.bf16.msra.mxu0 0
  %90 = vmatprep.subr.bf16.mxu0 0
  %91 = vmatpush2.bf16.msra.mxu0 0
  %92 = vmatprep.subr.bf16.mxu0 0
  %93 = vmatpush2.bf16.msra.mxu0 0
  %94 = vmatprep.subr.bf16.mxu0 0
  %95 = vmatpush2.bf16.msra.mxu0 0
  %96 = vmatprep.subr.bf16.mxu0 0
  %97 = vmatpush2.bf16.msra.mxu0 0
  %98 = vmatprep.mubr.bf16.mxu0 0
  %99 = vmatmul.mubr.bf16.gmra.mxu0 %v60
  %v100 = vpop.f32.mrf.mxu0
  %v101 = vadd.f32 %v29, %v100
  %v102 = vpop.f32.mrf.mxu0
  %v103 = vpop.f32.mrf.mxu0
  %v104 = vpop.f32.mrf.mxu0
  %105 = vdwg.mxu0
  %v106 = vpack.c.bf16 %v101, %v101
  %107 = vst [vmem:[%s3] sm:$0x3] %v106
  // Predicated region
  $region14: #{unet_forward.22} parent=0 // pred_check
    _
  $region15: #{unet_forward.22} parent=0 // pred_check_branch
    %109 = sbr.rel (0) target = $region17
  $region16: #{unet_forward.22} parent=0 // pred_region
    _
  $region17: #{unet_forward.22} parent=0 // pred_fallthru
    _
  // Predicated region
  $region18: #{unet_forward.22} parent=0 // pred_check
    _
  $region19: #{unet_forward.22} parent=0 // pred_check_branch
    %111 = sbr.rel (0) target = $region21
  $region20: #{unet_forward.22} parent=0 // pred_region
    _
  $region21: #{unet_forward.22} parent=0 // pred_fallthru
    _

// kernel: unet_forward.23
$region0: #{unet_forward.23}
  #allocation0 [shape = 'u32[]', space=smem, size = 0x4, offset = 0x4, fixed_abs, tag = 'smem constant byte address 0x4 - core index']
  #allocation1 [shape = 'u32[144,128]{1,0:T(1,128)}', space=vmem, size = 0x12000, scoped, tag = 'internal scratch']
  %s0 = inlined_call_operand.vmem [shape: bf16[8,64], index: 0, kind: input, shape index: {}]
  %s1 = inlined_call_operand.vmem [shape: bf16[64,256], index: 1, kind: input, shape index: {}]
  %s2 = inlined_call_operand.vmem [shape: bf16[8,8], index: 2, kind: input, shape index: {}]
  %s3 = inlined_call_operand.vmem [shape: f32[8,1], index: 3, kind: input, shape index: {}]
  %s4 = inlined_call_operand.vmem [shape: f32[8,256], index: 4, kind: output, shape index: {}]
  %s5 = sld [smem:[#allocation0]]
  $region26: #{unet_forward.23} parent=0
    _
  %s7 = ssub.s32 1, %s5
  %s8 = scalar_select 0, %s7, %s5
  // Predicated region
  $region2: #{unet_forward.23} parent=0 // pred_check
    _
  $region3: #{unet_forward.23} parent=0 // pred_check_branch
    %10 = sbr.rel (0) target = $region5
  $region4: #{unet_forward.23} parent=0 // pred_region
    _
  $region5: #{unet_forward.23} parent=0 // pred_fallthru
    _
  // Predicated region
  $region6: #{unet_forward.23} parent=0 // pred_check
    _
  $region7: #{unet_forward.23} parent=0 // pred_check_branch
    %12 = sbr.rel (0) target = $region9
  $region8: #{unet_forward.23} parent=0 // pred_region
    _
  $region9: #{unet_forward.23} parent=0 // pred_fallthru
    _
  // Predicated region
  $region10: #{unet_forward.23} parent=0 // pred_check
    _
  $region11: #{unet_forward.23} parent=0 // pred_check_branch
    %14 = sbr.rel (0) target = $region13
  $region12: #{unet_forward.23} parent=0 // pred_region
    _
  $region13: #{unet_forward.23} parent=0 // pred_fallthru
    _
  // Predicated region
  $region14: #{unet_forward.23} parent=0 // pred_check
    _
  $region15: #{unet_forward.23} parent=0 // pred_check_branch
    %16 = sbr.rel (0) target = $region17
  $region16: #{unet_forward.23} parent=0 // pred_region
    _
  $region17: #{unet_forward.23} parent=0 // pred_fallthru
    _
  %v18 = vld [vmem:[%s0] sm:$0xf]
  %v19 = vld [vmem:[%s1] sm:$0xff]
  %v20 = vld [vmem:[%s1 + $0x8] sm:$0xff]
  %v21 = vld [vmem:[%s1 + $0x10] sm:$0xff]
  %v22 = vld [vmem:[%s1 + $0x18] sm:$0xff]
  %v23 = vld [vmem:[%s1 + $0x20] sm:$0xff]
  %v24 = vld [vmem:[%s1 + $0x28] sm:$0xff]
  %v25 = vld [vmem:[%s1 + $0x30] sm:$0xff]
  %v26 = vld [vmem:[%s1 + $0x38] sm:$0xff]
  %v35 = vunpack.c.l.b16 %v19
  %v36 = vunpack.c.h.b16 %v19
  %v37 = vunpack.c.l.b16 %v20
  %v38 = vunpack.c.h.b16 %v20
  %v39 = vunpack.c.l.b16 %v21
  %v40 = vunpack.c.h.b16 %v21
  %v41 = vunpack.c.l.b16 %v22
  %v42 = vunpack.c.h.b16 %v22
  %v43 = vunpack.c.l.b16 %v23
  %v44 = vunpack.c.h.b16 %v23
  %v45 = vunpack.c.l.b16 %v24
  %v46 = vunpack.c.h.b16 %v24
  %v47 = vunpack.c.l.b16 %v25
  %v48 = vunpack.c.h.b16 %v25
  %v49 = vunpack.c.l.b16 %v26
  %v50 = vunpack.c.h.b16 %v26
  %v51 = vpack.c.b16 %v37, %v35
  %v52 = vpack.c.b16 %v38, %v36
  %v53 = vpack.c.b16 %v41, %v39
  %v54 = vpack.c.b16 %v42, %v40
  %v55 = vpack.c.b16 %v45, %v43
  %v56 = vpack.c.b16 %v46, %v44
  %v57 = vpack.c.b16 %v49, %v47
  %v58 = vpack.c.b16 %v50, %v48
  %vm67 = vcmask 523264
  %v69 = vsel %vm67, %v18, 0
  %71 = vmatprep.subr.bf16.mxu0 0
  %72 = vmatpush1.bf16.msra.mxu0 0
  %73 = vmatprep.subr.bf16.mxu0 0
  %74 = vmatpush1.bf16.msra.mxu0 0
  %75 = vmatprep.subr.bf16.mxu0 0
  %76 = vmatpush1.bf16.msra.mxu0 0
  %77 = vmatprep.subr.bf16.mxu0 0
  %78 = vmatpush1.bf16.msra.mxu0 0
  %79 = vmatprep.subr.bf16.mxu0 %v58
  %80 = vmatpush1.bf16.msra.mxu0 %v57
  %81 = vmatprep.subr.bf16.mxu0 %v56
  %82 = vmatpush1.bf16.msra.mxu0 %v55
  %83 = vmatprep.subr.bf16.mxu0 %v54
  %84 = vmatpush1.bf16.msra.mxu0 %v53
  %85 = vmatprep.subr.bf16.mxu0 %v52
  %86 = vmatpush1.bf16.msra.mxu0 %v51
  %87 = vmatprep.subr.bf16.mxu0 0
  %88 = vmatpush2.bf16.msra.mxu0 0
  %89 = vmatprep.subr.bf16.mxu0 0
  %90 = vmatpush2.bf16.msra.mxu0 0
  %91 = vmatprep.subr.bf16.mxu0 0
  %92 = vmatpush2.bf16.msra.mxu0 0
  %93 = vmatprep.subr.bf16.mxu0 0
  %94 = vmatpush2.bf16.msra.mxu0 0
  %95 = vmatprep.subr.bf16.mxu0 0
  %96 = vmatpush2.bf16.msra.mxu0 0
  %97 = vmatprep.subr.bf16.mxu0 0
  %98 = vmatpush2.bf16.msra.mxu0 0
  %99 = vmatprep.subr.bf16.mxu0 0
  %100 = vmatpush2.bf16.msra.mxu0 0
  %101 = vmatprep.subr.bf16.mxu0 0
  %102 = vmatpush2.bf16.msra.mxu0 0
  %103 = vmatprep.mubr.bf16.mxu0 0
  %104 = vmatmul.mubr.bf16.gmra.mxu0 %v69
  %v105 = vpop.f32.mrf.mxu0
  %v106 = vadd.f32 0.0, %v105
  %v107 = vpop.f32.mrf.mxu0
  %v108 = vadd.f32 0.0, %v107
  %v109 = vpop.f32.mrf.mxu0
  %v110 = vpop.f32.mrf.mxu0
  %111 = vdwg.mxu0
  %v112 = vmax.f32 %v106, 0.0
  %v113 = vmax.f32 %v108, 0.0
  %v114 = vld [vmem:[%s2] sm:$0xf]
  %v115 = vpack.c.bf16 %v112, %v112
  %v116 = vpack.c.bf16 %v113, %v113
  %v117 = vld [vmem:[%s3] sm:$0xff]
  %119 = vset.pattern.permute.xlu0 0
  %120 = vperm.xlu0 %119, %v117
  %v121 = vpop.permute.xlu0 %120
  %vm123 = vcmask 64512
  %v125 = vsel %vm123, %v114, 0
  %vm127 = vcmask 1043456
  %v129 = vsel %vm127, %v115, 0
  %v132 = vsel %vm127, %v116, 0
  %134 = vmatprep.subr.bf16.mxu0 0
  %135 = vmatpush1.bf16.msra.mxu0 0
  %136 = vmatprep.subr.bf16.mxu0 0
  %137 = vmatpush1.bf16.msra.mxu0 0
  %138 = vmatprep.subr.bf16.mxu0 0
  %139 = vmatpush1.bf16.msra.mxu0 0
  %140 = vmatprep.subr.bf16.mxu0 0
  %141 = vmatpush1.bf16.msra.mxu0 0
  %142 = vmatprep.subr.bf16.mxu0 0
  %143 = vmatpush1.bf16.msra.mxu0 0
  %144 = vmatprep.subr.bf16.mxu0 0
  %145 = vmatpush1.bf16.msra.mxu0 0
  %146 = vmatprep.subr.bf16.mxu0 0
  %147 = vmatpush1.bf16.msra.mxu0 0
  %148 = vmatprep.subr.bf16.mxu0 %v132
  %149 = vmatpush1.bf16.msra.mxu0 %v129
  %150 = vmatprep.subr.bf16.mxu0 0
  %151 = vmatpush2.bf16.msra.mxu0 0
  %152 = vmatprep.subr.bf16.mxu0 0
  %153 = vmatpush2.bf16.msra.mxu0 0
  %154 = vmatprep.subr.bf16.mxu0 0
  %155 = vmatpush2.bf16.msra.mxu0 0
  %156 = vmatprep.subr.bf16.mxu0 0
  %157 = vmatpush2.bf16.msra.mxu0 0
  %158 = vmatprep.subr.bf16.mxu0 0
  %159 = vmatpush2.bf16.msra.mxu0 0
  %160 = vmatprep.subr.bf16.mxu0 0
  %161 = vmatpush2.bf16.msra.mxu0 0
  %162 = vmatprep.subr.bf16.mxu0 0
  %163 = vmatpush2.bf16.msra.mxu0 0
  %164 = vmatprep.subr.bf16.mxu0 0
  %165 = vmatpush2.bf16.msra.mxu0 0
  %166 = vmatprep.mubr.bf16.mxu0 0
  %167 = vmatmul.mubr.bf16.gmra.mxu0 %v125
  %v168 = vpop.f32.mrf.mxu0
  %v169 = vadd.f32 %v121, %v168
  %v170 = vpop.f32.mrf.mxu0
  %v171 = vadd.f32 %v121, %v170
  %v172 = vpop.f32.mrf.mxu0
  %v173 = vpop.f32.mrf.mxu0
  %174 = vdwg.mxu0
  %175 = vst [vmem:[%s4] sm:$0xff] %v169
  %176 = vst [vmem:[%s4 + $0x8] sm:$0xff] %v171
  // Predicated region
  $region18: #{unet_forward.23} parent=0 // pred_check
    _
  $region19: #{unet_forward.23} parent=0 // pred_check_branch
    %178 = sbr.rel (0) target = $region21
  $region20: #{unet_forward.23} parent=0 // pred_region
    _
  $region21: #{unet_forward.23} parent=0 // pred_fallthru
    _
  // Predicated region
  $region22: #{unet_forward.23} parent=0 // pred_check
    _
  $region23: #{unet_forward.23} parent=0 // pred_check_branch
    %180 = sbr.rel (0) target = $region25
  $region24: #{unet_forward.23} parent=0 // pred_region
    _
  $region25: #{unet_forward.23} parent=0 // pred_fallthru
    _

</llo_original>
